<compile_context>
chip_gen: v6e
topology: v6e:2x2x1
jax: 0.10.0
libtpu: 0.0.40
codegen_flags: <defaults>
</compile_context>

<pallas_src>
import math

import jax
import jax.numpy as jnp
import numpy as np
from jax.experimental import pallas as pl
from jax.experimental.pallas import tpu as pltpu


def _layernorm(x, g, b, eps=1e-5):
    mu = jnp.mean(x, axis=-1, keepdims=True)
    xc = x - mu
    var = jnp.mean(xc * xc, axis=-1, keepdims=True)
    return xc * jax.lax.rsqrt(var + eps) * g + b


def _make_kernel(Bs, T, K, D, H, Hid):
    S = Bs * T * K
    hd = D // H
    scale = 1.0 / math.sqrt(hd)

    def kernel(x_ref, mask_ref,
               ln1_g_ref, ln1_b_ref,
               wq_ref, wk_ref, wv_ref, bq_ref, bk_ref, bv_ref,
               wo_ref, bo_ref,
               ln2_g_ref, ln2_b_ref,
               w1_ref, b1_ref, w2_ref, b2_ref,
               out_ref):
        # (Bs, T, K, D) -> (S, D) token slab, f32 residual stream.
        h = x_ref[...].astype(jnp.float32).reshape(S, D)

        for blk in range(2):                      # 0 = object attn, 1 = time attn
            mask = mask_ref[blk]                  # (S, S) additive block-diag mask

            # ---- pre-norm multi-head self-attention ----
            xn = _layernorm(h, ln1_g_ref[blk], ln1_b_ref[blk]).astype(jnp.bfloat16)
            q = jnp.dot(xn, wq_ref[blk], preferred_element_type=jnp.float32) + bq_ref[blk]
            k = jnp.dot(xn, wk_ref[blk], preferred_element_type=jnp.float32) + bk_ref[blk]
            v = jnp.dot(xn, wv_ref[blk], preferred_element_type=jnp.float32) + bv_ref[blk]

            attn = jnp.zeros((S, D), jnp.float32)
            for hh in range(H):                   # static unroll over heads
                sl = slice(hh * hd, (hh + 1) * hd)
                qh = q[:, sl].astype(jnp.bfloat16)
                kh = k[:, sl].astype(jnp.bfloat16)
                vh = v[:, sl].astype(jnp.bfloat16)
                # scores = q @ k^T without an explicit transpose.
                s = jax.lax.dot_general(
                    qh, kh, (((1,), (1,)), ((), ())),
                    preferred_element_type=jnp.float32) * scale + mask
                # hand-rolled softmax; divide goes to the EUP slot.
                m = jnp.max(s, axis=-1, keepdims=True)
                p = jnp.exp(s - m)
                pn = p * pl.reciprocal(jnp.sum(p, axis=-1, keepdims=True), approx=True)
                ctx = jnp.dot(pn.astype(jnp.bfloat16), vh,
                              preferred_element_type=jnp.float32)        # (S, hd)
                # accumulate through the per-head slice of W_o (no concat).
                attn = attn + jnp.dot(ctx.astype(jnp.bfloat16),
                                      wo_ref[blk * H + hh],
                                      preferred_element_type=jnp.float32)
            h = h + attn + bo_ref[blk]

            # ---- pre-norm feed-forward (ReLU) ----
            xn2 = _layernorm(h, ln2_g_ref[blk], ln2_b_ref[blk]).astype(jnp.bfloat16)
            ff = jnp.dot(xn2, w1_ref[blk], preferred_element_type=jnp.float32) + b1_ref[blk]
            ff = jnp.maximum(ff, 0.0).astype(jnp.bfloat16)
            ff = jnp.dot(ff, w2_ref[blk], preferred_element_type=jnp.float32) + b2_ref[blk]
            h = h + ff

        out_ref[...] = h.reshape(Bs, T, K, D).astype(out_ref.dtype)

    return kernel


def ocvp_seq_layer(slots, params, *, n_heads, num_shards=None):
    """slots: (B, num_imgs, num_slots, token_dim) -> same shape."""
    B, T, K, D = slots.shape
    Hid = params['w1'].shape[2]
    H = n_heads
    hd = D // H
    if num_shards is None:
        num_shards = 2 if (B >= 2 and B % 2 == 0) else 1
    assert B % num_shards == 0
    Bs = B // num_shards
    S = Bs * T * K

    # ---- block-diagonal additive masks (token order: (b, t, k) within a shard) ----
    NEG = -1e9
    idx = np.arange(S)
    bb = idx // (T * K)
    kk = idx % K
    obj_mask = np.where((idx[:, None] // K) == (idx[None, :] // K), 0.0, NEG)
    time_mask = np.where((bb[:, None] == bb[None, :]) & (kk[:, None] == kk[None, :]),
                         0.0, NEG)
    masks = jnp.asarray(np.stack([obj_mask, time_mask]).astype(np.float32))

    # ---- kernel-side parameters: bf16 weights, f32 biases / LN params ----
    bf = jnp.bfloat16
    wq = params['wq'].astype(bf)
    wk = params['wk'].astype(bf)
    wv = params['wv'].astype(bf)
    wo = params['wo'].reshape(2 * H, hd, D).astype(bf)   # per-head slices of W_o
    w1 = params['w1'].astype(bf)
    w2 = params['w2'].astype(bf)

    args = (slots, masks,
            params['ln1_g'], params['ln1_b'],
            wq, wk, wv, params['bq'], params['bk'], params['bv'],
            wo, params['bo'],
            params['ln2_g'], params['ln2_b'],
            w1, params['b1'], w2, params['b2'])

    def full(shape):
        nd = len(shape)
        return pl.BlockSpec(shape, lambda g, _nd=nd: (0,) * _nd)

    in_specs = [
        pl.BlockSpec((Bs, T, K, D), lambda g: (g, 0, 0, 0)),   # slots shard
        full((2, S, S)),                                       # masks
        full((2, D)), full((2, D)),                            # ln1
        full((2, D, D)), full((2, D, D)), full((2, D, D)),     # wq, wk, wv
        full((2, D)), full((2, D)), full((2, D)),              # bq, bk, bv
        full((2 * H, hd, D)), full((2, D)),                    # wo, bo
        full((2, D)), full((2, D)),                            # ln2
        full((2, D, Hid)), full((2, Hid)),                     # w1, b1
        full((2, Hid, D)), full((2, D)),                       # w2, b2
    ]

    # advisory cost estimate
    ntok = B * T * K
    mac = ntok * 2 * (4 * D * D + 2 * D * Hid)                  # QKV + out-proj + FFN
    mac += num_shards * 2 * H * (2 * S * S * hd)                # scores + p@v
    flops = 2 * mac
    transcendentals = num_shards * 2 * H * S * S                # exp in softmax
    bytes_accessed = int(sum(int(np.prod(a.shape)) * a.dtype.itemsize for a in args)
                         + slots.size * slots.dtype.itemsize)

    kernel = _make_kernel(Bs, T, K, D, H, Hid)
    out = pl.pallas_call(
        kernel,
        out_shape=jax.ShapeDtypeStruct((B, T, K, D), slots.dtype),
        grid=(num_shards,),
        in_specs=in_specs,
        out_specs=pl.BlockSpec((Bs, T, K, D), lambda g: (g, 0, 0, 0)),
        compiler_params=pltpu.CompilerParams(dimension_semantics=("parallel",)),
        cost_estimate=pl.CostEstimate(flops=flops,
                                      transcendentals=transcendentals,
                                      bytes_accessed=bytes_accessed),
    )(*args)
    return out


def init_params(key, *, token_dim=128, hidden_dim=256):
    """Two pre-norm encoder blocks (object, time) stacked on a leading axis of 2.

    All weights stored in `x @ W` orientation, f32 master copies.
    """
    D, Hid = token_dim, hidden_dim
    ks = jax.random.split(key, 12)

    def w(k, shape, fan_in):
        return jax.random.normal(k, shape, jnp.float32) / math.sqrt(fan_in)

    def b(k, shape):
        return 0.02 * jax.random.normal(k, shape, jnp.float32)

    return dict(
        ln1_g=jnp.ones((2, D), jnp.float32), ln1_b=jnp.zeros((2, D), jnp.float32),
        wq=w(ks[0], (2, D, D), D), wk=w(ks[1], (2, D, D), D), wv=w(ks[2], (2, D, D), D),
        bq=b(ks[3], (2, D)), bk=b(ks[4], (2, D)), bv=b(ks[5], (2, D)),
        wo=w(ks[6], (2, D, D), D), bo=b(ks[7], (2, D)),
        ln2_g=jnp.ones((2, D), jnp.float32), ln2_b=jnp.zeros((2, D), jnp.float32),
        w1=w(ks[8], (2, D, Hid), D), b1=b(ks[9], (2, Hid)),
        w2=w(ks[10], (2, Hid, D), Hid), b2=b(ks[11], (2, D)),
    )


def _ref_encoder_block(x, p, blk, n_heads):
    """Pure-JAX pre-norm TransformerEncoderLayer (eval mode). x: (N, S, D)."""
    N, S, D = x.shape
    hd = D // n_heads
    hp = lambda a, c: jnp.dot(a, c, precision=jax.lax.Precision.HIGHEST)

    def ln(y, g, b, eps=1e-5):
        mu = y.mean(-1, keepdims=True)
        var = ((y - mu) ** 2).mean(-1, keepdims=True)
        return (y - mu) / jnp.sqrt(var + eps) * g + b

    xn = ln(x, p['ln1_g'][blk], p['ln1_b'][blk])
    q = hp(xn, p['wq'][blk]) + p['bq'][blk]
    k = hp(xn, p['wk'][blk]) + p['bk'][blk]
    v = hp(xn, p['wv'][blk]) + p['bv'][blk]
    qh = q.reshape(N, S, n_heads, hd).transpose(0, 2, 1, 3)
    kh = k.reshape(N, S, n_heads, hd).transpose(0, 2, 1, 3)
    vh = v.reshape(N, S, n_heads, hd).transpose(0, 2, 1, 3)
    s = jnp.einsum('nhqd,nhkd->nhqk', qh, kh,
                   precision=jax.lax.Precision.HIGHEST) / math.sqrt(hd)
    pr = jax.nn.softmax(s, axis=-1)
    ctx = jnp.einsum('nhqk,nhkd->nhqd', pr, vh, precision=jax.lax.Precision.HIGHEST)
    ctx = ctx.transpose(0, 2, 1, 3).reshape(N, S, D)
    x = x + hp(ctx, p['wo'][blk]) + p['bo'][blk]
    xn2 = ln(x, p['ln2_g'][blk], p['ln2_b'][blk])
    ff = jax.nn.relu(hp(xn2, p['w1'][blk]) + p['b1'][blk])
    x = x + hp(ff, p['w2'][blk]) + p['b2'][blk]
    return x


def reference_forward(slots, params, *, n_heads):
    """Mirrors OCVPSeqLayer.forward (PyTorch, eval mode)."""
    B, T, K, D = slots.shape
    x = slots.reshape(B * T, K, D)
    x = _ref_encoder_block(x, params, 0, n_heads)                 # object attention
    x = x.reshape(B, T, K, D).transpose(0, 2, 1, 3).reshape(B * K, T, D)
    x = _ref_encoder_block(x, params, 1, n_heads)                 # time attention
    x = x.reshape(B, K, T, D).transpose(0, 2, 1, 3)               # (B, T, K, D)
    return x


if __name__ == "__main__":
    # Small shapes consistent with the module defaults:
    # B=2, num_imgs=4, num_slots=8, token_dim=128, hidden_dim=256, n_heads=4.
    B, T, K = 2, 4, 8
    D, Hid, H = 128, 256, 4

    key = jax.random.PRNGKey(0)
    pkey, xkey = jax.random.split(key)
    params = init_params(pkey, token_dim=D, hidden_dim=Hid)
    slots = jax.random.normal(xkey, (B, T, K, D), jnp.float32)

    out = ocvp_seq_layer(slots, params, n_heads=H)
    out = jax.block_until_ready(out)
    assert out.shape == (B, T, K, D)

    ref = reference_forward(slots, params, n_heads=H)
    np.testing.assert_allclose(np.asarray(out), np.asarray(ref), atol=5e-2, rtol=5e-2)

    print("KERNEL_OK")
</pallas_src>

<mosaic_0001>
module attributes {stable_mosaic.version = 11 : i64} {
  func.func @kernel(%arg0: i32, %arg1: memref<1x4x8x128xf32, #tpu.memory_space<vmem>>, %arg2: memref<2x32x32xf32, #tpu.memory_space<vmem>>, %arg3: memref<2x128xf32, #tpu.memory_space<vmem>>, %arg4: memref<2x128xf32, #tpu.memory_space<vmem>>, %arg5: memref<2x128x128xbf16, #tpu.memory_space<vmem>>, %arg6: memref<2x128x128xbf16, #tpu.memory_space<vmem>>, %arg7: memref<2x128x128xbf16, #tpu.memory_space<vmem>>, %arg8: memref<2x128xf32, #tpu.memory_space<vmem>>, %arg9: memref<2x128xf32, #tpu.memory_space<vmem>>, %arg10: memref<2x128xf32, #tpu.memory_space<vmem>>, %arg11: memref<8x32x128xbf16, #tpu.memory_space<vmem>>, %arg12: memref<2x128xf32, #tpu.memory_space<vmem>>, %arg13: memref<2x128xf32, #tpu.memory_space<vmem>>, %arg14: memref<2x128xf32, #tpu.memory_space<vmem>>, %arg15: memref<2x128x256xbf16, #tpu.memory_space<vmem>>, %arg16: memref<2x256xf32, #tpu.memory_space<vmem>>, %arg17: memref<2x256x128xbf16, #tpu.memory_space<vmem>>, %arg18: memref<2x128xf32, #tpu.memory_space<vmem>>, %arg19: memref<1x4x8x128xf32, #tpu.memory_space<vmem>>) attributes {dimension_semantics = [#tpu.dimension_semantics<parallel>], iteration_bounds = array<i64: 2>, scalar_prefetch = 0 : i64, scratch_operands = 0 : i64, tpu.core_type = #tpu.core_type<tc>, window_params = [{transform_indices = @transform_0, window_bounds = array<i64: 1, 4, 8, 128>}, {pipeline_mode = #tpu.pipeline_mode<synchronous>, transform_indices = @transform_1, window_bounds = array<i64: 2, 32, 32>}, {pipeline_mode = #tpu.pipeline_mode<synchronous>, transform_indices = @transform_2, window_bounds = array<i64: 2, 128>}, {pipeline_mode = #tpu.pipeline_mode<synchronous>, transform_indices = @transform_3, window_bounds = array<i64: 2, 128>}, {pipeline_mode = #tpu.pipeline_mode<synchronous>, transform_indices = @transform_4, window_bounds = array<i64: 2, 128, 128>}, {pipeline_mode = #tpu.pipeline_mode<synchronous>, transform_indices = @transform_5, window_bounds = array<i64: 2, 128, 128>}, {pipeline_mode = #tpu.pipeline_mode<synchronous>, transform_indices = @transform_6, window_bounds = array<i64: 2, 128, 128>}, {pipeline_mode = #tpu.pipeline_mode<synchronous>, transform_indices = @transform_7, window_bounds = array<i64: 2, 128>}, {pipeline_mode = #tpu.pipeline_mode<synchronous>, transform_indices = @transform_8, window_bounds = array<i64: 2, 128>}, {pipeline_mode = #tpu.pipeline_mode<synchronous>, transform_indices = @transform_9, window_bounds = array<i64: 2, 128>}, {pipeline_mode = #tpu.pipeline_mode<synchronous>, transform_indices = @transform_10, window_bounds = array<i64: 8, 32, 128>}, {pipeline_mode = #tpu.pipeline_mode<synchronous>, transform_indices = @transform_11, window_bounds = array<i64: 2, 128>}, {pipeline_mode = #tpu.pipeline_mode<synchronous>, transform_indices = @transform_12, window_bounds = array<i64: 2, 128>}, {pipeline_mode = #tpu.pipeline_mode<synchronous>, transform_indices = @transform_13, window_bounds = array<i64: 2, 128>}, {pipeline_mode = #tpu.pipeline_mode<synchronous>, transform_indices = @transform_14, window_bounds = array<i64: 2, 128, 256>}, {pipeline_mode = #tpu.pipeline_mode<synchronous>, transform_indices = @transform_15, window_bounds = array<i64: 2, 256>}, {pipeline_mode = #tpu.pipeline_mode<synchronous>, transform_indices = @transform_16, window_bounds = array<i64: 2, 256, 128>}, {pipeline_mode = #tpu.pipeline_mode<synchronous>, transform_indices = @transform_17, window_bounds = array<i64: 2, 128>}, {transform_indices = @transform_18, window_bounds = array<i64: 1, 4, 8, 128>}]} {
    %c0 = arith.constant 0 : index
    %c0_0 = arith.constant 0 : index
    %c0_1 = arith.constant 0 : index
    %c0_2 = arith.constant 0 : index
    %0 = vector.load %arg1[%c0, %c0_0, %c0_1, %c0_2] : memref<1x4x8x128xf32, #tpu.memory_space<vmem>>, vector<1x4x8x128xf32>
    %1 = vector.shape_cast %0 : vector<1x4x8x128xf32> to vector<32x128xf32>
    %c0_3 = arith.constant 0 : index
    %c0_4 = arith.constant 0 : index
    %c0_5 = arith.constant 0 : index
    %2 = vector.load %arg2[%c0_3, %c0_4, %c0_5] : memref<2x32x32xf32, #tpu.memory_space<vmem>>, vector<1x32x32xf32>
    %3 = vector.shape_cast %2 : vector<1x32x32xf32> to vector<32x32xf32>
    %c0_6 = arith.constant 0 : index
    %c0_7 = arith.constant 0 : index
    %4 = vector.load %arg3[%c0_6, %c0_7] : memref<2x128xf32, #tpu.memory_space<vmem>>, vector<1x128xf32>
    %5 = vector.shape_cast %4 : vector<1x128xf32> to vector<128xf32>
    %c0_8 = arith.constant 0 : index
    %c0_9 = arith.constant 0 : index
    %6 = vector.load %arg4[%c0_8, %c0_9] : memref<2x128xf32, #tpu.memory_space<vmem>>, vector<1x128xf32>
    %7 = vector.shape_cast %6 : vector<1x128xf32> to vector<128xf32>
    %cst = arith.constant dense<0.000000e+00> : vector<32xf32>
    %8 = vector.multi_reduction <add>, %1, %cst [1] : vector<32x128xf32> to vector<32xf32>
    %9 = vector.shape_cast %8 : vector<32xf32> to vector<32x1xf32>
    %cst_10 = arith.constant 1.280000e+02 : f32
    %10 = vector.broadcast %cst_10 : f32 to vector<32x1xf32>
    %11 = arith.divf %9, %10 : vector<32x1xf32>
    %12 = vector.broadcast %11 : vector<32x1xf32> to vector<32x128xf32>
    %13 = arith.subf %1, %12 : vector<32x128xf32>
    %14 = arith.mulf %13, %13 : vector<32x128xf32>
    %cst_11 = arith.constant dense<0.000000e+00> : vector<32xf32>
    %15 = vector.multi_reduction <add>, %14, %cst_11 [1] : vector<32x128xf32> to vector<32xf32>
    %16 = vector.shape_cast %15 : vector<32xf32> to vector<32x1xf32>
    %cst_12 = arith.constant 1.280000e+02 : f32
    %17 = vector.broadcast %cst_12 : f32 to vector<32x1xf32>
    %18 = arith.divf %16, %17 : vector<32x1xf32>
    %cst_13 = arith.constant 9.99999974E-6 : f32
    %19 = vector.broadcast %cst_13 : f32 to vector<32x1xf32>
    %20 = arith.addf %18, %19 : vector<32x1xf32>
    %21 = math.rsqrt %20 : vector<32x1xf32>
    %22 = vector.broadcast %21 : vector<32x1xf32> to vector<32x128xf32>
    %23 = arith.mulf %13, %22 : vector<32x128xf32>
    %24 = vector.shape_cast %5 : vector<128xf32> to vector<1x128xf32>
    %25 = vector.broadcast %24 : vector<1x128xf32> to vector<32x128xf32>
    %26 = arith.mulf %23, %25 : vector<32x128xf32>
    %27 = vector.shape_cast %7 : vector<128xf32> to vector<1x128xf32>
    %28 = vector.broadcast %27 : vector<1x128xf32> to vector<32x128xf32>
    %29 = arith.addf %26, %28 : vector<32x128xf32>
    %30 = arith.truncf %29 : vector<32x128xf32> to vector<32x128xbf16>
    %c0_14 = arith.constant 0 : index
    %c0_15 = arith.constant 0 : index
    %c0_16 = arith.constant 0 : index
    %31 = vector.load %arg5[%c0_14, %c0_15, %c0_16] : memref<2x128x128xbf16, #tpu.memory_space<vmem>>, vector<1x128x128xbf16>
    %32 = vector.shape_cast %31 : vector<1x128x128xbf16> to vector<128x128xbf16>
    %cst_17 = arith.constant dense<0.000000e+00> : vector<32x128xf32>
    %33 = tpu.matmul %30, %32, %cst_17 {dimension_numbers = #tpu.dot_dimension_numbers<[1], [0], [0], [1], [0, 0, 1, 1], [], []>} : vector<32x128xbf16>, vector<128x128xbf16>, vector<32x128xf32> -> vector<32x128xf32>
    %c0_18 = arith.constant 0 : index
    %c0_19 = arith.constant 0 : index
    %34 = vector.load %arg8[%c0_18, %c0_19] : memref<2x128xf32, #tpu.memory_space<vmem>>, vector<1x128xf32>
    %35 = vector.shape_cast %34 : vector<1x128xf32> to vector<128xf32>
    %36 = vector.shape_cast %35 : vector<128xf32> to vector<1x128xf32>
    %37 = vector.broadcast %36 : vector<1x128xf32> to vector<32x128xf32>
    %38 = arith.addf %33, %37 : vector<32x128xf32>
    %c0_20 = arith.constant 0 : index
    %c0_21 = arith.constant 0 : index
    %c0_22 = arith.constant 0 : index
    %39 = vector.load %arg6[%c0_20, %c0_21, %c0_22] : memref<2x128x128xbf16, #tpu.memory_space<vmem>>, vector<1x128x128xbf16>
    %40 = vector.shape_cast %39 : vector<1x128x128xbf16> to vector<128x128xbf16>
    %cst_23 = arith.constant dense<0.000000e+00> : vector<32x128xf32>
    %41 = tpu.matmul %30, %40, %cst_23 {dimension_numbers = #tpu.dot_dimension_numbers<[1], [0], [0], [1], [0, 0, 1, 1], [], []>} : vector<32x128xbf16>, vector<128x128xbf16>, vector<32x128xf32> -> vector<32x128xf32>
    %c0_24 = arith.constant 0 : index
    %c0_25 = arith.constant 0 : index
    %42 = vector.load %arg9[%c0_24, %c0_25] : memref<2x128xf32, #tpu.memory_space<vmem>>, vector<1x128xf32>
    %43 = vector.shape_cast %42 : vector<1x128xf32> to vector<128xf32>
    %44 = vector.shape_cast %43 : vector<128xf32> to vector<1x128xf32>
    %45 = vector.broadcast %44 : vector<1x128xf32> to vector<32x128xf32>
    %46 = arith.addf %41, %45 : vector<32x128xf32>
    %c0_26 = arith.constant 0 : index
    %c0_27 = arith.constant 0 : index
    %c0_28 = arith.constant 0 : index
    %47 = vector.load %arg7[%c0_26, %c0_27, %c0_28] : memref<2x128x128xbf16, #tpu.memory_space<vmem>>, vector<1x128x128xbf16>
    %48 = vector.shape_cast %47 : vector<1x128x128xbf16> to vector<128x128xbf16>
    %cst_29 = arith.constant dense<0.000000e+00> : vector<32x128xf32>
    %49 = tpu.matmul %30, %48, %cst_29 {dimension_numbers = #tpu.dot_dimension_numbers<[1], [0], [0], [1], [0, 0, 1, 1], [], []>} : vector<32x128xbf16>, vector<128x128xbf16>, vector<32x128xf32> -> vector<32x128xf32>
    %c0_30 = arith.constant 0 : index
    %c0_31 = arith.constant 0 : index
    %50 = vector.load %arg10[%c0_30, %c0_31] : memref<2x128xf32, #tpu.memory_space<vmem>>, vector<1x128xf32>
    %51 = vector.shape_cast %50 : vector<1x128xf32> to vector<128xf32>
    %52 = vector.shape_cast %51 : vector<128xf32> to vector<1x128xf32>
    %53 = vector.broadcast %52 : vector<1x128xf32> to vector<32x128xf32>
    %54 = arith.addf %49, %53 : vector<32x128xf32>
    %cst_32 = arith.constant 0.000000e+00 : f32
    %55 = vector.broadcast %cst_32 : f32 to vector<32x128xf32>
    %56 = vector.extract_strided_slice %38 {offsets = [0, 0], sizes = [32, 32], strides = [1, 1]} : vector<32x128xf32> to vector<32x32xf32>
    %57 = arith.truncf %56 : vector<32x32xf32> to vector<32x32xbf16>
    %58 = vector.extract_strided_slice %46 {offsets = [0, 0], sizes = [32, 32], strides = [1, 1]} : vector<32x128xf32> to vector<32x32xf32>
    %59 = arith.truncf %58 : vector<32x32xf32> to vector<32x32xbf16>
    %60 = vector.extract_strided_slice %54 {offsets = [0, 0], sizes = [32, 32], strides = [1, 1]} : vector<32x128xf32> to vector<32x32xf32>
    %61 = arith.truncf %60 : vector<32x32xf32> to vector<32x32xbf16>
    %cst_33 = arith.constant dense<0.000000e+00> : vector<32x32xf32>
    %62 = tpu.matmul %57, %59, %cst_33 {dimension_numbers = #tpu.dot_dimension_numbers<[1], [1], [0], [0], [0, 0, 1, 0], [], []>} : vector<32x32xbf16>, vector<32x32xbf16>, vector<32x32xf32> -> vector<32x32xf32>
    %cst_34 = arith.constant 0.176776692 : f32
    %63 = vector.broadcast %cst_34 : f32 to vector<32x32xf32>
    %64 = arith.mulf %62, %63 : vector<32x32xf32>
    %65 = arith.addf %64, %3 : vector<32x32xf32>
    %cst_35 = arith.constant dense<0xFF800000> : vector<32xf32>
    %66 = vector.multi_reduction <maximumf>, %65, %cst_35 [1] : vector<32x32xf32> to vector<32xf32>
    %67 = vector.shape_cast %66 : vector<32xf32> to vector<32x1xf32>
    %68 = vector.broadcast %67 : vector<32x1xf32> to vector<32x32xf32>
    %69 = arith.subf %65, %68 : vector<32x32xf32>
    %70 = math.exp %69 : vector<32x32xf32>
    %cst_36 = arith.constant dense<0.000000e+00> : vector<32xf32>
    %71 = vector.multi_reduction <add>, %70, %cst_36 [1] : vector<32x32xf32> to vector<32xf32>
    %72 = vector.shape_cast %71 : vector<32xf32> to vector<32x1xf32>
    %73 = tpu.reciprocal %72 {approx = true} : vector<32x1xf32> -> vector<32x1xf32>
    %74 = vector.broadcast %73 : vector<32x1xf32> to vector<32x32xf32>
    %75 = arith.mulf %70, %74 : vector<32x32xf32>
    %76 = arith.truncf %75 : vector<32x32xf32> to vector<32x32xbf16>
    %cst_37 = arith.constant dense<0.000000e+00> : vector<32x32xf32>
    %77 = tpu.matmul %76, %61, %cst_37 {dimension_numbers = #tpu.dot_dimension_numbers<[1], [0], [0], [1], [0, 0, 1, 1], [], []>} : vector<32x32xbf16>, vector<32x32xbf16>, vector<32x32xf32> -> vector<32x32xf32>
    %78 = arith.truncf %77 : vector<32x32xf32> to vector<32x32xbf16>
    %c0_38 = arith.constant 0 : index
    %c0_39 = arith.constant 0 : index
    %c0_40 = arith.constant 0 : index
    %79 = vector.load %arg11[%c0_38, %c0_39, %c0_40] : memref<8x32x128xbf16, #tpu.memory_space<vmem>>, vector<1x32x128xbf16>
    %80 = vector.shape_cast %79 : vector<1x32x128xbf16> to vector<32x128xbf16>
    %cst_41 = arith.constant dense<0.000000e+00> : vector<32x128xf32>
    %81 = tpu.matmul %78, %80, %cst_41 {dimension_numbers = #tpu.dot_dimension_numbers<[1], [0], [0], [1], [0, 0, 1, 1], [], []>} : vector<32x32xbf16>, vector<32x128xbf16>, vector<32x128xf32> -> vector<32x128xf32>
    %82 = arith.addf %55, %81 : vector<32x128xf32>
    %83 = vector.extract_strided_slice %38 {offsets = [0, 32], sizes = [32, 32], strides = [1, 1]} : vector<32x128xf32> to vector<32x32xf32>
    %84 = arith.truncf %83 : vector<32x32xf32> to vector<32x32xbf16>
    %85 = vector.extract_strided_slice %46 {offsets = [0, 32], sizes = [32, 32], strides = [1, 1]} : vector<32x128xf32> to vector<32x32xf32>
    %86 = arith.truncf %85 : vector<32x32xf32> to vector<32x32xbf16>
    %87 = vector.extract_strided_slice %54 {offsets = [0, 32], sizes = [32, 32], strides = [1, 1]} : vector<32x128xf32> to vector<32x32xf32>
    %88 = arith.truncf %87 : vector<32x32xf32> to vector<32x32xbf16>
    %cst_42 = arith.constant dense<0.000000e+00> : vector<32x32xf32>
    %89 = tpu.matmul %84, %86, %cst_42 {dimension_numbers = #tpu.dot_dimension_numbers<[1], [1], [0], [0], [0, 0, 1, 0], [], []>} : vector<32x32xbf16>, vector<32x32xbf16>, vector<32x32xf32> -> vector<32x32xf32>
    %cst_43 = arith.constant 0.176776692 : f32
    %90 = vector.broadcast %cst_43 : f32 to vector<32x32xf32>
    %91 = arith.mulf %89, %90 : vector<32x32xf32>
    %92 = arith.addf %91, %3 : vector<32x32xf32>
    %cst_44 = arith.constant dense<0xFF800000> : vector<32xf32>
    %93 = vector.multi_reduction <maximumf>, %92, %cst_44 [1] : vector<32x32xf32> to vector<32xf32>
    %94 = vector.shape_cast %93 : vector<32xf32> to vector<32x1xf32>
    %95 = vector.broadcast %94 : vector<32x1xf32> to vector<32x32xf32>
    %96 = arith.subf %92, %95 : vector<32x32xf32>
    %97 = math.exp %96 : vector<32x32xf32>
    %cst_45 = arith.constant dense<0.000000e+00> : vector<32xf32>
    %98 = vector.multi_reduction <add>, %97, %cst_45 [1] : vector<32x32xf32> to vector<32xf32>
    %99 = vector.shape_cast %98 : vector<32xf32> to vector<32x1xf32>
    %100 = tpu.reciprocal %99 {approx = true} : vector<32x1xf32> -> vector<32x1xf32>
    %101 = vector.broadcast %100 : vector<32x1xf32> to vector<32x32xf32>
    %102 = arith.mulf %97, %101 : vector<32x32xf32>
    %103 = arith.truncf %102 : vector<32x32xf32> to vector<32x32xbf16>
    %cst_46 = arith.constant dense<0.000000e+00> : vector<32x32xf32>
    %104 = tpu.matmul %103, %88, %cst_46 {dimension_numbers = #tpu.dot_dimension_numbers<[1], [0], [0], [1], [0, 0, 1, 1], [], []>} : vector<32x32xbf16>, vector<32x32xbf16>, vector<32x32xf32> -> vector<32x32xf32>
    %105 = arith.truncf %104 : vector<32x32xf32> to vector<32x32xbf16>
    %c1 = arith.constant 1 : index
    %c0_47 = arith.constant 0 : index
    %c0_48 = arith.constant 0 : index
    %106 = vector.load %arg11[%c1, %c0_47, %c0_48] : memref<8x32x128xbf16, #tpu.memory_space<vmem>>, vector<1x32x128xbf16>
    %107 = vector.shape_cast %106 : vector<1x32x128xbf16> to vector<32x128xbf16>
    %cst_49 = arith.constant dense<0.000000e+00> : vector<32x128xf32>
    %108 = tpu.matmul %105, %107, %cst_49 {dimension_numbers = #tpu.dot_dimension_numbers<[1], [0], [0], [1], [0, 0, 1, 1], [], []>} : vector<32x32xbf16>, vector<32x128xbf16>, vector<32x128xf32> -> vector<32x128xf32>
    %109 = arith.addf %82, %108 : vector<32x128xf32>
    %110 = vector.extract_strided_slice %38 {offsets = [0, 64], sizes = [32, 32], strides = [1, 1]} : vector<32x128xf32> to vector<32x32xf32>
    %111 = arith.truncf %110 : vector<32x32xf32> to vector<32x32xbf16>
    %112 = vector.extract_strided_slice %46 {offsets = [0, 64], sizes = [32, 32], strides = [1, 1]} : vector<32x128xf32> to vector<32x32xf32>
    %113 = arith.truncf %112 : vector<32x32xf32> to vector<32x32xbf16>
    %114 = vector.extract_strided_slice %54 {offsets = [0, 64], sizes = [32, 32], strides = [1, 1]} : vector<32x128xf32> to vector<32x32xf32>
    %115 = arith.truncf %114 : vector<32x32xf32> to vector<32x32xbf16>
    %cst_50 = arith.constant dense<0.000000e+00> : vector<32x32xf32>
    %116 = tpu.matmul %111, %113, %cst_50 {dimension_numbers = #tpu.dot_dimension_numbers<[1], [1], [0], [0], [0, 0, 1, 0], [], []>} : vector<32x32xbf16>, vector<32x32xbf16>, vector<32x32xf32> -> vector<32x32xf32>
    %cst_51 = arith.constant 0.176776692 : f32
    %117 = vector.broadcast %cst_51 : f32 to vector<32x32xf32>
    %118 = arith.mulf %116, %117 : vector<32x32xf32>
    %119 = arith.addf %118, %3 : vector<32x32xf32>
    %cst_52 = arith.constant dense<0xFF800000> : vector<32xf32>
    %120 = vector.multi_reduction <maximumf>, %119, %cst_52 [1] : vector<32x32xf32> to vector<32xf32>
    %121 = vector.shape_cast %120 : vector<32xf32> to vector<32x1xf32>
    %122 = vector.broadcast %121 : vector<32x1xf32> to vector<32x32xf32>
    %123 = arith.subf %119, %122 : vector<32x32xf32>
    %124 = math.exp %123 : vector<32x32xf32>
    %cst_53 = arith.constant dense<0.000000e+00> : vector<32xf32>
    %125 = vector.multi_reduction <add>, %124, %cst_53 [1] : vector<32x32xf32> to vector<32xf32>
    %126 = vector.shape_cast %125 : vector<32xf32> to vector<32x1xf32>
    %127 = tpu.reciprocal %126 {approx = true} : vector<32x1xf32> -> vector<32x1xf32>
    %128 = vector.broadcast %127 : vector<32x1xf32> to vector<32x32xf32>
    %129 = arith.mulf %124, %128 : vector<32x32xf32>
    %130 = arith.truncf %129 : vector<32x32xf32> to vector<32x32xbf16>
    %cst_54 = arith.constant dense<0.000000e+00> : vector<32x32xf32>
    %131 = tpu.matmul %130, %115, %cst_54 {dimension_numbers = #tpu.dot_dimension_numbers<[1], [0], [0], [1], [0, 0, 1, 1], [], []>} : vector<32x32xbf16>, vector<32x32xbf16>, vector<32x32xf32> -> vector<32x32xf32>
    %132 = arith.truncf %131 : vector<32x32xf32> to vector<32x32xbf16>
    %c2 = arith.constant 2 : index
    %c0_55 = arith.constant 0 : index
    %c0_56 = arith.constant 0 : index
    %133 = vector.load %arg11[%c2, %c0_55, %c0_56] : memref<8x32x128xbf16, #tpu.memory_space<vmem>>, vector<1x32x128xbf16>
    %134 = vector.shape_cast %133 : vector<1x32x128xbf16> to vector<32x128xbf16>
    %cst_57 = arith.constant dense<0.000000e+00> : vector<32x128xf32>
    %135 = tpu.matmul %132, %134, %cst_57 {dimension_numbers = #tpu.dot_dimension_numbers<[1], [0], [0], [1], [0, 0, 1, 1], [], []>} : vector<32x32xbf16>, vector<32x128xbf16>, vector<32x128xf32> -> vector<32x128xf32>
    %136 = arith.addf %109, %135 : vector<32x128xf32>
    %137 = vector.extract_strided_slice %38 {offsets = [0, 96], sizes = [32, 32], strides = [1, 1]} : vector<32x128xf32> to vector<32x32xf32>
    %138 = arith.truncf %137 : vector<32x32xf32> to vector<32x32xbf16>
    %139 = vector.extract_strided_slice %46 {offsets = [0, 96], sizes = [32, 32], strides = [1, 1]} : vector<32x128xf32> to vector<32x32xf32>
    %140 = arith.truncf %139 : vector<32x32xf32> to vector<32x32xbf16>
    %141 = vector.extract_strided_slice %54 {offsets = [0, 96], sizes = [32, 32], strides = [1, 1]} : vector<32x128xf32> to vector<32x32xf32>
    %142 = arith.truncf %141 : vector<32x32xf32> to vector<32x32xbf16>
    %cst_58 = arith.constant dense<0.000000e+00> : vector<32x32xf32>
    %143 = tpu.matmul %138, %140, %cst_58 {dimension_numbers = #tpu.dot_dimension_numbers<[1], [1], [0], [0], [0, 0, 1, 0], [], []>} : vector<32x32xbf16>, vector<32x32xbf16>, vector<32x32xf32> -> vector<32x32xf32>
    %cst_59 = arith.constant 0.176776692 : f32
    %144 = vector.broadcast %cst_59 : f32 to vector<32x32xf32>
    %145 = arith.mulf %143, %144 : vector<32x32xf32>
    %146 = arith.addf %145, %3 : vector<32x32xf32>
    %cst_60 = arith.constant dense<0xFF800000> : vector<32xf32>
    %147 = vector.multi_reduction <maximumf>, %146, %cst_60 [1] : vector<32x32xf32> to vector<32xf32>
    %148 = vector.shape_cast %147 : vector<32xf32> to vector<32x1xf32>
    %149 = vector.broadcast %148 : vector<32x1xf32> to vector<32x32xf32>
    %150 = arith.subf %146, %149 : vector<32x32xf32>
    %151 = math.exp %150 : vector<32x32xf32>
    %cst_61 = arith.constant dense<0.000000e+00> : vector<32xf32>
    %152 = vector.multi_reduction <add>, %151, %cst_61 [1] : vector<32x32xf32> to vector<32xf32>
    %153 = vector.shape_cast %152 : vector<32xf32> to vector<32x1xf32>
    %154 = tpu.reciprocal %153 {approx = true} : vector<32x1xf32> -> vector<32x1xf32>
    %155 = vector.broadcast %154 : vector<32x1xf32> to vector<32x32xf32>
    %156 = arith.mulf %151, %155 : vector<32x32xf32>
    %157 = arith.truncf %156 : vector<32x32xf32> to vector<32x32xbf16>
    %cst_62 = arith.constant dense<0.000000e+00> : vector<32x32xf32>
    %158 = tpu.matmul %157, %142, %cst_62 {dimension_numbers = #tpu.dot_dimension_numbers<[1], [0], [0], [1], [0, 0, 1, 1], [], []>} : vector<32x32xbf16>, vector<32x32xbf16>, vector<32x32xf32> -> vector<32x32xf32>
    %159 = arith.truncf %158 : vector<32x32xf32> to vector<32x32xbf16>
    %c3 = arith.constant 3 : index
    %c0_63 = arith.constant 0 : index
    %c0_64 = arith.constant 0 : index
    %160 = vector.load %arg11[%c3, %c0_63, %c0_64] : memref<8x32x128xbf16, #tpu.memory_space<vmem>>, vector<1x32x128xbf16>
    %161 = vector.shape_cast %160 : vector<1x32x128xbf16> to vector<32x128xbf16>
    %cst_65 = arith.constant dense<0.000000e+00> : vector<32x128xf32>
    %162 = tpu.matmul %159, %161, %cst_65 {dimension_numbers = #tpu.dot_dimension_numbers<[1], [0], [0], [1], [0, 0, 1, 1], [], []>} : vector<32x32xbf16>, vector<32x128xbf16>, vector<32x128xf32> -> vector<32x128xf32>
    %163 = arith.addf %136, %162 : vector<32x128xf32>
    %164 = arith.addf %1, %163 : vector<32x128xf32>
    %c0_66 = arith.constant 0 : index
    %c0_67 = arith.constant 0 : index
    %165 = vector.load %arg12[%c0_66, %c0_67] : memref<2x128xf32, #tpu.memory_space<vmem>>, vector<1x128xf32>
    %166 = vector.shape_cast %165 : vector<1x128xf32> to vector<128xf32>
    %167 = vector.shape_cast %166 : vector<128xf32> to vector<1x128xf32>
    %168 = vector.broadcast %167 : vector<1x128xf32> to vector<32x128xf32>
    %169 = arith.addf %164, %168 : vector<32x128xf32>
    %c0_68 = arith.constant 0 : index
    %c0_69 = arith.constant 0 : index
    %170 = vector.load %arg13[%c0_68, %c0_69] : memref<2x128xf32, #tpu.memory_space<vmem>>, vector<1x128xf32>
    %171 = vector.shape_cast %170 : vector<1x128xf32> to vector<128xf32>
    %c0_70 = arith.constant 0 : index
    %c0_71 = arith.constant 0 : index
    %172 = vector.load %arg14[%c0_70, %c0_71] : memref<2x128xf32, #tpu.memory_space<vmem>>, vector<1x128xf32>
    %173 = vector.shape_cast %172 : vector<1x128xf32> to vector<128xf32>
    %cst_72 = arith.constant dense<0.000000e+00> : vector<32xf32>
    %174 = vector.multi_reduction <add>, %169, %cst_72 [1] : vector<32x128xf32> to vector<32xf32>
    %175 = vector.shape_cast %174 : vector<32xf32> to vector<32x1xf32>
    %cst_73 = arith.constant 1.280000e+02 : f32
    %176 = vector.broadcast %cst_73 : f32 to vector<32x1xf32>
    %177 = arith.divf %175, %176 : vector<32x1xf32>
    %178 = vector.broadcast %177 : vector<32x1xf32> to vector<32x128xf32>
    %179 = arith.subf %169, %178 : vector<32x128xf32>
    %180 = arith.mulf %179, %179 : vector<32x128xf32>
    %cst_74 = arith.constant dense<0.000000e+00> : vector<32xf32>
    %181 = vector.multi_reduction <add>, %180, %cst_74 [1] : vector<32x128xf32> to vector<32xf32>
    %182 = vector.shape_cast %181 : vector<32xf32> to vector<32x1xf32>
    %cst_75 = arith.constant 1.280000e+02 : f32
    %183 = vector.broadcast %cst_75 : f32 to vector<32x1xf32>
    %184 = arith.divf %182, %183 : vector<32x1xf32>
    %cst_76 = arith.constant 9.99999974E-6 : f32
    %185 = vector.broadcast %cst_76 : f32 to vector<32x1xf32>
    %186 = arith.addf %184, %185 : vector<32x1xf32>
    %187 = math.rsqrt %186 : vector<32x1xf32>
    %188 = vector.broadcast %187 : vector<32x1xf32> to vector<32x128xf32>
    %189 = arith.mulf %179, %188 : vector<32x128xf32>
    %190 = vector.shape_cast %171 : vector<128xf32> to vector<1x128xf32>
    %191 = vector.broadcast %190 : vector<1x128xf32> to vector<32x128xf32>
    %192 = arith.mulf %189, %191 : vector<32x128xf32>
    %193 = vector.shape_cast %173 : vector<128xf32> to vector<1x128xf32>
    %194 = vector.broadcast %193 : vector<1x128xf32> to vector<32x128xf32>
    %195 = arith.addf %192, %194 : vector<32x128xf32>
    %196 = arith.truncf %195 : vector<32x128xf32> to vector<32x128xbf16>
    %c0_77 = arith.constant 0 : index
    %c0_78 = arith.constant 0 : index
    %c0_79 = arith.constant 0 : index
    %197 = vector.load %arg15[%c0_77, %c0_78, %c0_79] : memref<2x128x256xbf16, #tpu.memory_space<vmem>>, vector<1x128x256xbf16>
    %198 = vector.shape_cast %197 : vector<1x128x256xbf16> to vector<128x256xbf16>
    %cst_80 = arith.constant dense<0.000000e+00> : vector<32x256xf32>
    %199 = tpu.matmul %196, %198, %cst_80 {dimension_numbers = #tpu.dot_dimension_numbers<[1], [0], [0], [1], [0, 0, 1, 1], [], []>} : vector<32x128xbf16>, vector<128x256xbf16>, vector<32x256xf32> -> vector<32x256xf32>
    %c0_81 = arith.constant 0 : index
    %c0_82 = arith.constant 0 : index
    %200 = vector.load %arg16[%c0_81, %c0_82] : memref<2x256xf32, #tpu.memory_space<vmem>>, vector<1x256xf32>
    %201 = vector.shape_cast %200 : vector<1x256xf32> to vector<256xf32>
    %202 = vector.shape_cast %201 : vector<256xf32> to vector<1x256xf32>
    %203 = vector.broadcast %202 : vector<1x256xf32> to vector<32x256xf32>
    %204 = arith.addf %199, %203 : vector<32x256xf32>
    %cst_83 = arith.constant 0.000000e+00 : f32
    %205 = vector.broadcast %cst_83 : f32 to vector<32x256xf32>
    %206 = arith.maximumf %204, %205 : vector<32x256xf32>
    %207 = arith.truncf %206 : vector<32x256xf32> to vector<32x256xbf16>
    %c0_84 = arith.constant 0 : index
    %c0_85 = arith.constant 0 : index
    %c0_86 = arith.constant 0 : index
    %208 = vector.load %arg17[%c0_84, %c0_85, %c0_86] : memref<2x256x128xbf16, #tpu.memory_space<vmem>>, vector<1x256x128xbf16>
    %209 = vector.shape_cast %208 : vector<1x256x128xbf16> to vector<256x128xbf16>
    %cst_87 = arith.constant dense<0.000000e+00> : vector<32x128xf32>
    %210 = tpu.matmul %207, %209, %cst_87 {dimension_numbers = #tpu.dot_dimension_numbers<[1], [0], [0], [1], [0, 0, 1, 1], [], []>} : vector<32x256xbf16>, vector<256x128xbf16>, vector<32x128xf32> -> vector<32x128xf32>
    %c0_88 = arith.constant 0 : index
    %c0_89 = arith.constant 0 : index
    %211 = vector.load %arg18[%c0_88, %c0_89] : memref<2x128xf32, #tpu.memory_space<vmem>>, vector<1x128xf32>
    %212 = vector.shape_cast %211 : vector<1x128xf32> to vector<128xf32>
    %213 = vector.shape_cast %212 : vector<128xf32> to vector<1x128xf32>
    %214 = vector.broadcast %213 : vector<1x128xf32> to vector<32x128xf32>
    %215 = arith.addf %210, %214 : vector<32x128xf32>
    %216 = arith.addf %169, %215 : vector<32x128xf32>
    %c1_90 = arith.constant 1 : index
    %c0_91 = arith.constant 0 : index
    %c0_92 = arith.constant 0 : index
    %217 = vector.load %arg2[%c1_90, %c0_91, %c0_92] : memref<2x32x32xf32, #tpu.memory_space<vmem>>, vector<1x32x32xf32>
    %218 = vector.shape_cast %217 : vector<1x32x32xf32> to vector<32x32xf32>
    %c1_93 = arith.constant 1 : index
    %c0_94 = arith.constant 0 : index
    %219 = vector.load %arg3[%c1_93, %c0_94] : memref<2x128xf32, #tpu.memory_space<vmem>>, vector<1x128xf32>
    %220 = vector.shape_cast %219 : vector<1x128xf32> to vector<128xf32>
    %c1_95 = arith.constant 1 : index
    %c0_96 = arith.constant 0 : index
    %221 = vector.load %arg4[%c1_95, %c0_96] : memref<2x128xf32, #tpu.memory_space<vmem>>, vector<1x128xf32>
    %222 = vector.shape_cast %221 : vector<1x128xf32> to vector<128xf32>
    %cst_97 = arith.constant dense<0.000000e+00> : vector<32xf32>
    %223 = vector.multi_reduction <add>, %216, %cst_97 [1] : vector<32x128xf32> to vector<32xf32>
    %224 = vector.shape_cast %223 : vector<32xf32> to vector<32x1xf32>
    %cst_98 = arith.constant 1.280000e+02 : f32
    %225 = vector.broadcast %cst_98 : f32 to vector<32x1xf32>
    %226 = arith.divf %224, %225 : vector<32x1xf32>
    %227 = vector.broadcast %226 : vector<32x1xf32> to vector<32x128xf32>
    %228 = arith.subf %216, %227 : vector<32x128xf32>
    %229 = arith.mulf %228, %228 : vector<32x128xf32>
    %cst_99 = arith.constant dense<0.000000e+00> : vector<32xf32>
    %230 = vector.multi_reduction <add>, %229, %cst_99 [1] : vector<32x128xf32> to vector<32xf32>
    %231 = vector.shape_cast %230 : vector<32xf32> to vector<32x1xf32>
    %cst_100 = arith.constant 1.280000e+02 : f32
    %232 = vector.broadcast %cst_100 : f32 to vector<32x1xf32>
    %233 = arith.divf %231, %232 : vector<32x1xf32>
    %cst_101 = arith.constant 9.99999974E-6 : f32
    %234 = vector.broadcast %cst_101 : f32 to vector<32x1xf32>
    %235 = arith.addf %233, %234 : vector<32x1xf32>
    %236 = math.rsqrt %235 : vector<32x1xf32>
    %237 = vector.broadcast %236 : vector<32x1xf32> to vector<32x128xf32>
    %238 = arith.mulf %228, %237 : vector<32x128xf32>
    %239 = vector.shape_cast %220 : vector<128xf32> to vector<1x128xf32>
    %240 = vector.broadcast %239 : vector<1x128xf32> to vector<32x128xf32>
    %241 = arith.mulf %238, %240 : vector<32x128xf32>
    %242 = vector.shape_cast %222 : vector<128xf32> to vector<1x128xf32>
    %243 = vector.broadcast %242 : vector<1x128xf32> to vector<32x128xf32>
    %244 = arith.addf %241, %243 : vector<32x128xf32>
    %245 = arith.truncf %244 : vector<32x128xf32> to vector<32x128xbf16>
    %c1_102 = arith.constant 1 : index
    %c0_103 = arith.constant 0 : index
    %c0_104 = arith.constant 0 : index
    %246 = vector.load %arg5[%c1_102, %c0_103, %c0_104] : memref<2x128x128xbf16, #tpu.memory_space<vmem>>, vector<1x128x128xbf16>
    %247 = vector.shape_cast %246 : vector<1x128x128xbf16> to vector<128x128xbf16>
    %cst_105 = arith.constant dense<0.000000e+00> : vector<32x128xf32>
    %248 = tpu.matmul %245, %247, %cst_105 {dimension_numbers = #tpu.dot_dimension_numbers<[1], [0], [0], [1], [0, 0, 1, 1], [], []>} : vector<32x128xbf16>, vector<128x128xbf16>, vector<32x128xf32> -> vector<32x128xf32>
    %c1_106 = arith.constant 1 : index
    %c0_107 = arith.constant 0 : index
    %249 = vector.load %arg8[%c1_106, %c0_107] : memref<2x128xf32, #tpu.memory_space<vmem>>, vector<1x128xf32>
    %250 = vector.shape_cast %249 : vector<1x128xf32> to vector<128xf32>
    %251 = vector.shape_cast %250 : vector<128xf32> to vector<1x128xf32>
    %252 = vector.broadcast %251 : vector<1x128xf32> to vector<32x128xf32>
    %253 = arith.addf %248, %252 : vector<32x128xf32>
    %c1_108 = arith.constant 1 : index
    %c0_109 = arith.constant 0 : index
    %c0_110 = arith.constant 0 : index
    %254 = vector.load %arg6[%c1_108, %c0_109, %c0_110] : memref<2x128x128xbf16, #tpu.memory_space<vmem>>, vector<1x128x128xbf16>
    %255 = vector.shape_cast %254 : vector<1x128x128xbf16> to vector<128x128xbf16>
    %cst_111 = arith.constant dense<0.000000e+00> : vector<32x128xf32>
    %256 = tpu.matmul %245, %255, %cst_111 {dimension_numbers = #tpu.dot_dimension_numbers<[1], [0], [0], [1], [0, 0, 1, 1], [], []>} : vector<32x128xbf16>, vector<128x128xbf16>, vector<32x128xf32> -> vector<32x128xf32>
    %c1_112 = arith.constant 1 : index
    %c0_113 = arith.constant 0 : index
    %257 = vector.load %arg9[%c1_112, %c0_113] : memref<2x128xf32, #tpu.memory_space<vmem>>, vector<1x128xf32>
    %258 = vector.shape_cast %257 : vector<1x128xf32> to vector<128xf32>
    %259 = vector.shape_cast %258 : vector<128xf32> to vector<1x128xf32>
    %260 = vector.broadcast %259 : vector<1x128xf32> to vector<32x128xf32>
    %261 = arith.addf %256, %260 : vector<32x128xf32>
    %c1_114 = arith.constant 1 : index
    %c0_115 = arith.constant 0 : index
    %c0_116 = arith.constant 0 : index
    %262 = vector.load %arg7[%c1_114, %c0_115, %c0_116] : memref<2x128x128xbf16, #tpu.memory_space<vmem>>, vector<1x128x128xbf16>
    %263 = vector.shape_cast %262 : vector<1x128x128xbf16> to vector<128x128xbf16>
    %cst_117 = arith.constant dense<0.000000e+00> : vector<32x128xf32>
    %264 = tpu.matmul %245, %263, %cst_117 {dimension_numbers = #tpu.dot_dimension_numbers<[1], [0], [0], [1], [0, 0, 1, 1], [], []>} : vector<32x128xbf16>, vector<128x128xbf16>, vector<32x128xf32> -> vector<32x128xf32>
    %c1_118 = arith.constant 1 : index
    %c0_119 = arith.constant 0 : index
    %265 = vector.load %arg10[%c1_118, %c0_119] : memref<2x128xf32, #tpu.memory_space<vmem>>, vector<1x128xf32>
    %266 = vector.shape_cast %265 : vector<1x128xf32> to vector<128xf32>
    %267 = vector.shape_cast %266 : vector<128xf32> to vector<1x128xf32>
    %268 = vector.broadcast %267 : vector<1x128xf32> to vector<32x128xf32>
    %269 = arith.addf %264, %268 : vector<32x128xf32>
    %cst_120 = arith.constant 0.000000e+00 : f32
    %270 = vector.broadcast %cst_120 : f32 to vector<32x128xf32>
    %271 = vector.extract_strided_slice %253 {offsets = [0, 0], sizes = [32, 32], strides = [1, 1]} : vector<32x128xf32> to vector<32x32xf32>
    %272 = arith.truncf %271 : vector<32x32xf32> to vector<32x32xbf16>
    %273 = vector.extract_strided_slice %261 {offsets = [0, 0], sizes = [32, 32], strides = [1, 1]} : vector<32x128xf32> to vector<32x32xf32>
    %274 = arith.truncf %273 : vector<32x32xf32> to vector<32x32xbf16>
    %275 = vector.extract_strided_slice %269 {offsets = [0, 0], sizes = [32, 32], strides = [1, 1]} : vector<32x128xf32> to vector<32x32xf32>
    %276 = arith.truncf %275 : vector<32x32xf32> to vector<32x32xbf16>
    %cst_121 = arith.constant dense<0.000000e+00> : vector<32x32xf32>
    %277 = tpu.matmul %272, %274, %cst_121 {dimension_numbers = #tpu.dot_dimension_numbers<[1], [1], [0], [0], [0, 0, 1, 0], [], []>} : vector<32x32xbf16>, vector<32x32xbf16>, vector<32x32xf32> -> vector<32x32xf32>
    %cst_122 = arith.constant 0.176776692 : f32
    %278 = vector.broadcast %cst_122 : f32 to vector<32x32xf32>
    %279 = arith.mulf %277, %278 : vector<32x32xf32>
    %280 = arith.addf %279, %218 : vector<32x32xf32>
    %cst_123 = arith.constant dense<0xFF800000> : vector<32xf32>
    %281 = vector.multi_reduction <maximumf>, %280, %cst_123 [1] : vector<32x32xf32> to vector<32xf32>
    %282 = vector.shape_cast %281 : vector<32xf32> to vector<32x1xf32>
    %283 = vector.broadcast %282 : vector<32x1xf32> to vector<32x32xf32>
    %284 = arith.subf %280, %283 : vector<32x32xf32>
    %285 = math.exp %284 : vector<32x32xf32>
    %cst_124 = arith.constant dense<0.000000e+00> : vector<32xf32>
    %286 = vector.multi_reduction <add>, %285, %cst_124 [1] : vector<32x32xf32> to vector<32xf32>
    %287 = vector.shape_cast %286 : vector<32xf32> to vector<32x1xf32>
    %288 = tpu.reciprocal %287 {approx = true} : vector<32x1xf32> -> vector<32x1xf32>
    %289 = vector.broadcast %288 : vector<32x1xf32> to vector<32x32xf32>
    %290 = arith.mulf %285, %289 : vector<32x32xf32>
    %291 = arith.truncf %290 : vector<32x32xf32> to vector<32x32xbf16>
    %cst_125 = arith.constant dense<0.000000e+00> : vector<32x32xf32>
    %292 = tpu.matmul %291, %276, %cst_125 {dimension_numbers = #tpu.dot_dimension_numbers<[1], [0], [0], [1], [0, 0, 1, 1], [], []>} : vector<32x32xbf16>, vector<32x32xbf16>, vector<32x32xf32> -> vector<32x32xf32>
    %293 = arith.truncf %292 : vector<32x32xf32> to vector<32x32xbf16>
    %c4 = arith.constant 4 : index
    %c0_126 = arith.constant 0 : index
    %c0_127 = arith.constant 0 : index
    %294 = vector.load %arg11[%c4, %c0_126, %c0_127] : memref<8x32x128xbf16, #tpu.memory_space<vmem>>, vector<1x32x128xbf16>
    %295 = vector.shape_cast %294 : vector<1x32x128xbf16> to vector<32x128xbf16>
    %cst_128 = arith.constant dense<0.000000e+00> : vector<32x128xf32>
    %296 = tpu.matmul %293, %295, %cst_128 {dimension_numbers = #tpu.dot_dimension_numbers<[1], [0], [0], [1], [0, 0, 1, 1], [], []>} : vector<32x32xbf16>, vector<32x128xbf16>, vector<32x128xf32> -> vector<32x128xf32>
    %297 = arith.addf %270, %296 : vector<32x128xf32>
    %298 = vector.extract_strided_slice %253 {offsets = [0, 32], sizes = [32, 32], strides = [1, 1]} : vector<32x128xf32> to vector<32x32xf32>
    %299 = arith.truncf %298 : vector<32x32xf32> to vector<32x32xbf16>
    %300 = vector.extract_strided_slice %261 {offsets = [0, 32], sizes = [32, 32], strides = [1, 1]} : vector<32x128xf32> to vector<32x32xf32>
    %301 = arith.truncf %300 : vector<32x32xf32> to vector<32x32xbf16>
    %302 = vector.extract_strided_slice %269 {offsets = [0, 32], sizes = [32, 32], strides = [1, 1]} : vector<32x128xf32> to vector<32x32xf32>
    %303 = arith.truncf %302 : vector<32x32xf32> to vector<32x32xbf16>
    %cst_129 = arith.constant dense<0.000000e+00> : vector<32x32xf32>
    %304 = tpu.matmul %299, %301, %cst_129 {dimension_numbers = #tpu.dot_dimension_numbers<[1], [1], [0], [0], [0, 0, 1, 0], [], []>} : vector<32x32xbf16>, vector<32x32xbf16>, vector<32x32xf32> -> vector<32x32xf32>
    %cst_130 = arith.constant 0.176776692 : f32
    %305 = vector.broadcast %cst_130 : f32 to vector<32x32xf32>
    %306 = arith.mulf %304, %305 : vector<32x32xf32>
    %307 = arith.addf %306, %218 : vector<32x32xf32>
    %cst_131 = arith.constant dense<0xFF800000> : vector<32xf32>
    %308 = vector.multi_reduction <maximumf>, %307, %cst_131 [1] : vector<32x32xf32> to vector<32xf32>
    %309 = vector.shape_cast %308 : vector<32xf32> to vector<32x1xf32>
    %310 = vector.broadcast %309 : vector<32x1xf32> to vector<32x32xf32>
    %311 = arith.subf %307, %310 : vector<32x32xf32>
    %312 = math.exp %311 : vector<32x32xf32>
    %cst_132 = arith.constant dense<0.000000e+00> : vector<32xf32>
    %313 = vector.multi_reduction <add>, %312, %cst_132 [1] : vector<32x32xf32> to vector<32xf32>
    %314 = vector.shape_cast %313 : vector<32xf32> to vector<32x1xf32>
    %315 = tpu.reciprocal %314 {approx = true} : vector<32x1xf32> -> vector<32x1xf32>
    %316 = vector.broadcast %315 : vector<32x1xf32> to vector<32x32xf32>
    %317 = arith.mulf %312, %316 : vector<32x32xf32>
    %318 = arith.truncf %317 : vector<32x32xf32> to vector<32x32xbf16>
    %cst_133 = arith.constant dense<0.000000e+00> : vector<32x32xf32>
    %319 = tpu.matmul %318, %303, %cst_133 {dimension_numbers = #tpu.dot_dimension_numbers<[1], [0], [0], [1], [0, 0, 1, 1], [], []>} : vector<32x32xbf16>, vector<32x32xbf16>, vector<32x32xf32> -> vector<32x32xf32>
    %320 = arith.truncf %319 : vector<32x32xf32> to vector<32x32xbf16>
    %c5 = arith.constant 5 : index
    %c0_134 = arith.constant 0 : index
    %c0_135 = arith.constant 0 : index
    %321 = vector.load %arg11[%c5, %c0_134, %c0_135] : memref<8x32x128xbf16, #tpu.memory_space<vmem>>, vector<1x32x128xbf16>
    %322 = vector.shape_cast %321 : vector<1x32x128xbf16> to vector<32x128xbf16>
    %cst_136 = arith.constant dense<0.000000e+00> : vector<32x128xf32>
    %323 = tpu.matmul %320, %322, %cst_136 {dimension_numbers = #tpu.dot_dimension_numbers<[1], [0], [0], [1], [0, 0, 1, 1], [], []>} : vector<32x32xbf16>, vector<32x128xbf16>, vector<32x128xf32> -> vector<32x128xf32>
    %324 = arith.addf %297, %323 : vector<32x128xf32>
    %325 = vector.extract_strided_slice %253 {offsets = [0, 64], sizes = [32, 32], strides = [1, 1]} : vector<32x128xf32> to vector<32x32xf32>
    %326 = arith.truncf %325 : vector<32x32xf32> to vector<32x32xbf16>
    %327 = vector.extract_strided_slice %261 {offsets = [0, 64], sizes = [32, 32], strides = [1, 1]} : vector<32x128xf32> to vector<32x32xf32>
    %328 = arith.truncf %327 : vector<32x32xf32> to vector<32x32xbf16>
    %329 = vector.extract_strided_slice %269 {offsets = [0, 64], sizes = [32, 32], strides = [1, 1]} : vector<32x128xf32> to vector<32x32xf32>
    %330 = arith.truncf %329 : vector<32x32xf32> to vector<32x32xbf16>
    %cst_137 = arith.constant dense<0.000000e+00> : vector<32x32xf32>
    %331 = tpu.matmul %326, %328, %cst_137 {dimension_numbers = #tpu.dot_dimension_numbers<[1], [1], [0], [0], [0, 0, 1, 0], [], []>} : vector<32x32xbf16>, vector<32x32xbf16>, vector<32x32xf32> -> vector<32x32xf32>
    %cst_138 = arith.constant 0.176776692 : f32
    %332 = vector.broadcast %cst_138 : f32 to vector<32x32xf32>
    %333 = arith.mulf %331, %332 : vector<32x32xf32>
    %334 = arith.addf %333, %218 : vector<32x32xf32>
    %cst_139 = arith.constant dense<0xFF800000> : vector<32xf32>
    %335 = vector.multi_reduction <maximumf>, %334, %cst_139 [1] : vector<32x32xf32> to vector<32xf32>
    %336 = vector.shape_cast %335 : vector<32xf32> to vector<32x1xf32>
    %337 = vector.broadcast %336 : vector<32x1xf32> to vector<32x32xf32>
    %338 = arith.subf %334, %337 : vector<32x32xf32>
    %339 = math.exp %338 : vector<32x32xf32>
    %cst_140 = arith.constant dense<0.000000e+00> : vector<32xf32>
    %340 = vector.multi_reduction <add>, %339, %cst_140 [1] : vector<32x32xf32> to vector<32xf32>
    %341 = vector.shape_cast %340 : vector<32xf32> to vector<32x1xf32>
    %342 = tpu.reciprocal %341 {approx = true} : vector<32x1xf32> -> vector<32x1xf32>
    %343 = vector.broadcast %342 : vector<32x1xf32> to vector<32x32xf32>
    %344 = arith.mulf %339, %343 : vector<32x32xf32>
    %345 = arith.truncf %344 : vector<32x32xf32> to vector<32x32xbf16>
    %cst_141 = arith.constant dense<0.000000e+00> : vector<32x32xf32>
    %346 = tpu.matmul %345, %330, %cst_141 {dimension_numbers = #tpu.dot_dimension_numbers<[1], [0], [0], [1], [0, 0, 1, 1], [], []>} : vector<32x32xbf16>, vector<32x32xbf16>, vector<32x32xf32> -> vector<32x32xf32>
    %347 = arith.truncf %346 : vector<32x32xf32> to vector<32x32xbf16>
    %c6 = arith.constant 6 : index
    %c0_142 = arith.constant 0 : index
    %c0_143 = arith.constant 0 : index
    %348 = vector.load %arg11[%c6, %c0_142, %c0_143] : memref<8x32x128xbf16, #tpu.memory_space<vmem>>, vector<1x32x128xbf16>
    %349 = vector.shape_cast %348 : vector<1x32x128xbf16> to vector<32x128xbf16>
    %cst_144 = arith.constant dense<0.000000e+00> : vector<32x128xf32>
    %350 = tpu.matmul %347, %349, %cst_144 {dimension_numbers = #tpu.dot_dimension_numbers<[1], [0], [0], [1], [0, 0, 1, 1], [], []>} : vector<32x32xbf16>, vector<32x128xbf16>, vector<32x128xf32> -> vector<32x128xf32>
    %351 = arith.addf %324, %350 : vector<32x128xf32>
    %352 = vector.extract_strided_slice %253 {offsets = [0, 96], sizes = [32, 32], strides = [1, 1]} : vector<32x128xf32> to vector<32x32xf32>
    %353 = arith.truncf %352 : vector<32x32xf32> to vector<32x32xbf16>
    %354 = vector.extract_strided_slice %261 {offsets = [0, 96], sizes = [32, 32], strides = [1, 1]} : vector<32x128xf32> to vector<32x32xf32>
    %355 = arith.truncf %354 : vector<32x32xf32> to vector<32x32xbf16>
    %356 = vector.extract_strided_slice %269 {offsets = [0, 96], sizes = [32, 32], strides = [1, 1]} : vector<32x128xf32> to vector<32x32xf32>
    %357 = arith.truncf %356 : vector<32x32xf32> to vector<32x32xbf16>
    %cst_145 = arith.constant dense<0.000000e+00> : vector<32x32xf32>
    %358 = tpu.matmul %353, %355, %cst_145 {dimension_numbers = #tpu.dot_dimension_numbers<[1], [1], [0], [0], [0, 0, 1, 0], [], []>} : vector<32x32xbf16>, vector<32x32xbf16>, vector<32x32xf32> -> vector<32x32xf32>
    %cst_146 = arith.constant 0.176776692 : f32
    %359 = vector.broadcast %cst_146 : f32 to vector<32x32xf32>
    %360 = arith.mulf %358, %359 : vector<32x32xf32>
    %361 = arith.addf %360, %218 : vector<32x32xf32>
    %cst_147 = arith.constant dense<0xFF800000> : vector<32xf32>
    %362 = vector.multi_reduction <maximumf>, %361, %cst_147 [1] : vector<32x32xf32> to vector<32xf32>
    %363 = vector.shape_cast %362 : vector<32xf32> to vector<32x1xf32>
    %364 = vector.broadcast %363 : vector<32x1xf32> to vector<32x32xf32>
    %365 = arith.subf %361, %364 : vector<32x32xf32>
    %366 = math.exp %365 : vector<32x32xf32>
    %cst_148 = arith.constant dense<0.000000e+00> : vector<32xf32>
    %367 = vector.multi_reduction <add>, %366, %cst_148 [1] : vector<32x32xf32> to vector<32xf32>
    %368 = vector.shape_cast %367 : vector<32xf32> to vector<32x1xf32>
    %369 = tpu.reciprocal %368 {approx = true} : vector<32x1xf32> -> vector<32x1xf32>
    %370 = vector.broadcast %369 : vector<32x1xf32> to vector<32x32xf32>
    %371 = arith.mulf %366, %370 : vector<32x32xf32>
    %372 = arith.truncf %371 : vector<32x32xf32> to vector<32x32xbf16>
    %cst_149 = arith.constant dense<0.000000e+00> : vector<32x32xf32>
    %373 = tpu.matmul %372, %357, %cst_149 {dimension_numbers = #tpu.dot_dimension_numbers<[1], [0], [0], [1], [0, 0, 1, 1], [], []>} : vector<32x32xbf16>, vector<32x32xbf16>, vector<32x32xf32> -> vector<32x32xf32>
    %374 = arith.truncf %373 : vector<32x32xf32> to vector<32x32xbf16>
    %c7 = arith.constant 7 : index
    %c0_150 = arith.constant 0 : index
    %c0_151 = arith.constant 0 : index
    %375 = vector.load %arg11[%c7, %c0_150, %c0_151] : memref<8x32x128xbf16, #tpu.memory_space<vmem>>, vector<1x32x128xbf16>
    %376 = vector.shape_cast %375 : vector<1x32x128xbf16> to vector<32x128xbf16>
    %cst_152 = arith.constant dense<0.000000e+00> : vector<32x128xf32>
    %377 = tpu.matmul %374, %376, %cst_152 {dimension_numbers = #tpu.dot_dimension_numbers<[1], [0], [0], [1], [0, 0, 1, 1], [], []>} : vector<32x32xbf16>, vector<32x128xbf16>, vector<32x128xf32> -> vector<32x128xf32>
    %378 = arith.addf %351, %377 : vector<32x128xf32>
    %379 = arith.addf %216, %378 : vector<32x128xf32>
    %c1_153 = arith.constant 1 : index
    %c0_154 = arith.constant 0 : index
    %380 = vector.load %arg12[%c1_153, %c0_154] : memref<2x128xf32, #tpu.memory_space<vmem>>, vector<1x128xf32>
    %381 = vector.shape_cast %380 : vector<1x128xf32> to vector<128xf32>
    %382 = vector.shape_cast %381 : vector<128xf32> to vector<1x128xf32>
    %383 = vector.broadcast %382 : vector<1x128xf32> to vector<32x128xf32>
    %384 = arith.addf %379, %383 : vector<32x128xf32>
    %c1_155 = arith.constant 1 : index
    %c0_156 = arith.constant 0 : index
    %385 = vector.load %arg13[%c1_155, %c0_156] : memref<2x128xf32, #tpu.memory_space<vmem>>, vector<1x128xf32>
    %386 = vector.shape_cast %385 : vector<1x128xf32> to vector<128xf32>
    %c1_157 = arith.constant 1 : index
    %c0_158 = arith.constant 0 : index
    %387 = vector.load %arg14[%c1_157, %c0_158] : memref<2x128xf32, #tpu.memory_space<vmem>>, vector<1x128xf32>
    %388 = vector.shape_cast %387 : vector<1x128xf32> to vector<128xf32>
    %cst_159 = arith.constant dense<0.000000e+00> : vector<32xf32>
    %389 = vector.multi_reduction <add>, %384, %cst_159 [1] : vector<32x128xf32> to vector<32xf32>
    %390 = vector.shape_cast %389 : vector<32xf32> to vector<32x1xf32>
    %cst_160 = arith.constant 1.280000e+02 : f32
    %391 = vector.broadcast %cst_160 : f32 to vector<32x1xf32>
    %392 = arith.divf %390, %391 : vector<32x1xf32>
    %393 = vector.broadcast %392 : vector<32x1xf32> to vector<32x128xf32>
    %394 = arith.subf %384, %393 : vector<32x128xf32>
    %395 = arith.mulf %394, %394 : vector<32x128xf32>
    %cst_161 = arith.constant dense<0.000000e+00> : vector<32xf32>
    %396 = vector.multi_reduction <add>, %395, %cst_161 [1] : vector<32x128xf32> to vector<32xf32>
    %397 = vector.shape_cast %396 : vector<32xf32> to vector<32x1xf32>
    %cst_162 = arith.constant 1.280000e+02 : f32
    %398 = vector.broadcast %cst_162 : f32 to vector<32x1xf32>
    %399 = arith.divf %397, %398 : vector<32x1xf32>
    %cst_163 = arith.constant 9.99999974E-6 : f32
    %400 = vector.broadcast %cst_163 : f32 to vector<32x1xf32>
    %401 = arith.addf %399, %400 : vector<32x1xf32>
    %402 = math.rsqrt %401 : vector<32x1xf32>
    %403 = vector.broadcast %402 : vector<32x1xf32> to vector<32x128xf32>
    %404 = arith.mulf %394, %403 : vector<32x128xf32>
    %405 = vector.shape_cast %386 : vector<128xf32> to vector<1x128xf32>
    %406 = vector.broadcast %405 : vector<1x128xf32> to vector<32x128xf32>
    %407 = arith.mulf %404, %406 : vector<32x128xf32>
    %408 = vector.shape_cast %388 : vector<128xf32> to vector<1x128xf32>
    %409 = vector.broadcast %408 : vector<1x128xf32> to vector<32x128xf32>
    %410 = arith.addf %407, %409 : vector<32x128xf32>
    %411 = arith.truncf %410 : vector<32x128xf32> to vector<32x128xbf16>
    %c1_164 = arith.constant 1 : index
    %c0_165 = arith.constant 0 : index
    %c0_166 = arith.constant 0 : index
    %412 = vector.load %arg15[%c1_164, %c0_165, %c0_166] : memref<2x128x256xbf16, #tpu.memory_space<vmem>>, vector<1x128x256xbf16>
    %413 = vector.shape_cast %412 : vector<1x128x256xbf16> to vector<128x256xbf16>
    %cst_167 = arith.constant dense<0.000000e+00> : vector<32x256xf32>
    %414 = tpu.matmul %411, %413, %cst_167 {dimension_numbers = #tpu.dot_dimension_numbers<[1], [0], [0], [1], [0, 0, 1, 1], [], []>} : vector<32x128xbf16>, vector<128x256xbf16>, vector<32x256xf32> -> vector<32x256xf32>
    %c1_168 = arith.constant 1 : index
    %c0_169 = arith.constant 0 : index
    %415 = vector.load %arg16[%c1_168, %c0_169] : memref<2x256xf32, #tpu.memory_space<vmem>>, vector<1x256xf32>
    %416 = vector.shape_cast %415 : vector<1x256xf32> to vector<256xf32>
    %417 = vector.shape_cast %416 : vector<256xf32> to vector<1x256xf32>
    %418 = vector.broadcast %417 : vector<1x256xf32> to vector<32x256xf32>
    %419 = arith.addf %414, %418 : vector<32x256xf32>
    %cst_170 = arith.constant 0.000000e+00 : f32
    %420 = vector.broadcast %cst_170 : f32 to vector<32x256xf32>
    %421 = arith.maximumf %419, %420 : vector<32x256xf32>
    %422 = arith.truncf %421 : vector<32x256xf32> to vector<32x256xbf16>
    %c1_171 = arith.constant 1 : index
    %c0_172 = arith.constant 0 : index
    %c0_173 = arith.constant 0 : index
    %423 = vector.load %arg17[%c1_171, %c0_172, %c0_173] : memref<2x256x128xbf16, #tpu.memory_space<vmem>>, vector<1x256x128xbf16>
    %424 = vector.shape_cast %423 : vector<1x256x128xbf16> to vector<256x128xbf16>
    %cst_174 = arith.constant dense<0.000000e+00> : vector<32x128xf32>
    %425 = tpu.matmul %422, %424, %cst_174 {dimension_numbers = #tpu.dot_dimension_numbers<[1], [0], [0], [1], [0, 0, 1, 1], [], []>} : vector<32x256xbf16>, vector<256x128xbf16>, vector<32x128xf32> -> vector<32x128xf32>
    %c1_175 = arith.constant 1 : index
    %c0_176 = arith.constant 0 : index
    %426 = vector.load %arg18[%c1_175, %c0_176] : memref<2x128xf32, #tpu.memory_space<vmem>>, vector<1x128xf32>
    %427 = vector.shape_cast %426 : vector<1x128xf32> to vector<128xf32>
    %428 = vector.shape_cast %427 : vector<128xf32> to vector<1x128xf32>
    %429 = vector.broadcast %428 : vector<1x128xf32> to vector<32x128xf32>
    %430 = arith.addf %425, %429 : vector<32x128xf32>
    %431 = arith.addf %384, %430 : vector<32x128xf32>
    %432 = vector.shape_cast %431 : vector<32x128xf32> to vector<1x4x8x128xf32>
    %c0_177 = arith.constant 0 : index
    %c0_178 = arith.constant 0 : index
    %c0_179 = arith.constant 0 : index
    %c0_180 = arith.constant 0 : index
    %433 = vector.load %arg19[%c0_177, %c0_178, %c0_179, %c0_180] : memref<1x4x8x128xf32, #tpu.memory_space<vmem>>, vector<1x4x8x128xf32>
    tpu.vector_store %arg19[%c0_177, %c0_178, %c0_179, %c0_180], %432 {strides = array<i32>} : memref<1x4x8x128xf32, #tpu.memory_space<vmem>>, vector<1x4x8x128xf32>,
    return
  }
  func.func @transform_0(%arg0: i32) -> (i32, i32, i32, i32) {
    %c0_i32 = arith.constant 0 : i32
    %c0_i32_0 = arith.constant 0 : i32
    %c0_i32_1 = arith.constant 0 : i32
    %c0_i32_2 = arith.constant 0 : i32
    return %arg0, %c0_i32, %c0_i32_0, %c0_i32_1 : i32, i32, i32, i32
  }
  func.func @transform_1(%arg0: i32) -> (i32, i32, i32) {
    %c0_i32 = arith.constant 0 : i32
    %c0_i32_0 = arith.constant 0 : i32
    %c0_i32_1 = arith.constant 0 : i32
    %c0_i32_2 = arith.constant 0 : i32
    return %c0_i32, %c0_i32_0, %c0_i32_1 : i32, i32, i32
  }
  func.func @transform_2(%arg0: i32) -> (i32, i32) {
    %c0_i32 = arith.constant 0 : i32
    %c0_i32_0 = arith.constant 0 : i32
    %c0_i32_1 = arith.constant 0 : i32
    return %c0_i32, %c0_i32_0 : i32, i32
  }
  func.func @transform_3(%arg0: i32) -> (i32, i32) {
    %c0_i32 = arith.constant 0 : i32
    %c0_i32_0 = arith.constant 0 : i32
    %c0_i32_1 = arith.constant 0 : i32
    return %c0_i32, %c0_i32_0 : i32, i32
  }
  func.func @transform_4(%arg0: i32) -> (i32, i32, i32) {
    %c0_i32 = arith.constant 0 : i32
    %c0_i32_0 = arith.constant 0 : i32
    %c0_i32_1 = arith.constant 0 : i32
    %c0_i32_2 = arith.constant 0 : i32
    return %c0_i32, %c0_i32_0, %c0_i32_1 : i32, i32, i32
  }
  func.func @transform_5(%arg0: i32) -> (i32, i32, i32) {
    %c0_i32 = arith.constant 0 : i32
    %c0_i32_0 = arith.constant 0 : i32
    %c0_i32_1 = arith.constant 0 : i32
    %c0_i32_2 = arith.constant 0 : i32
    return %c0_i32, %c0_i32_0, %c0_i32_1 : i32, i32, i32
  }
  func.func @transform_6(%arg0: i32) -> (i32, i32, i32) {
    %c0_i32 = arith.constant 0 : i32
    %c0_i32_0 = arith.constant 0 : i32
    %c0_i32_1 = arith.constant 0 : i32
    %c0_i32_2 = arith.constant 0 : i32
    return %c0_i32, %c0_i32_0, %c0_i32_1 : i32, i32, i32
  }
  func.func @transform_7(%arg0: i32) -> (i32, i32) {
    %c0_i32 = arith.constant 0 : i32
    %c0_i32_0 = arith.constant 0 : i32
    %c0_i32_1 = arith.constant 0 : i32
    return %c0_i32, %c0_i32_0 : i32, i32
  }
  func.func @transform_8(%arg0: i32) -> (i32, i32) {
    %c0_i32 = arith.constant 0 : i32
    %c0_i32_0 = arith.constant 0 : i32
    %c0_i32_1 = arith.constant 0 : i32
    return %c0_i32, %c0_i32_0 : i32, i32
  }
  func.func @transform_9(%arg0: i32) -> (i32, i32) {
    %c0_i32 = arith.constant 0 : i32
    %c0_i32_0 = arith.constant 0 : i32
    %c0_i32_1 = arith.constant 0 : i32
    return %c0_i32, %c0_i32_0 : i32, i32
  }
  func.func @transform_10(%arg0: i32) -> (i32, i32, i32) {
    %c0_i32 = arith.constant 0 : i32
    %c0_i32_0 = arith.constant 0 : i32
    %c0_i32_1 = arith.constant 0 : i32
    %c0_i32_2 = arith.constant 0 : i32
    return %c0_i32, %c0_i32_0, %c0_i32_1 : i32, i32, i32
  }
  func.func @transform_11(%arg0: i32) -> (i32, i32) {
    %c0_i32 = arith.constant 0 : i32
    %c0_i32_0 = arith.constant 0 : i32
    %c0_i32_1 = arith.constant 0 : i32
    return %c0_i32, %c0_i32_0 : i32, i32
  }
  func.func @transform_12(%arg0: i32) -> (i32, i32) {
    %c0_i32 = arith.constant 0 : i32
    %c0_i32_0 = arith.constant 0 : i32
    %c0_i32_1 = arith.constant 0 : i32
    return %c0_i32, %c0_i32_0 : i32, i32
  }
  func.func @transform_13(%arg0: i32) -> (i32, i32) {
    %c0_i32 = arith.constant 0 : i32
    %c0_i32_0 = arith.constant 0 : i32
    %c0_i32_1 = arith.constant 0 : i32
    return %c0_i32, %c0_i32_0 : i32, i32
  }
  func.func @transform_14(%arg0: i32) -> (i32, i32, i32) {
    %c0_i32 = arith.constant 0 : i32
    %c0_i32_0 = arith.constant 0 : i32
    %c0_i32_1 = arith.constant 0 : i32
    %c0_i32_2 = arith.constant 0 : i32
    return %c0_i32, %c0_i32_0, %c0_i32_1 : i32, i32, i32
  }
  func.func @transform_15(%arg0: i32) -> (i32, i32) {
    %c0_i32 = arith.constant 0 : i32
    %c0_i32_0 = arith.constant 0 : i32
    %c0_i32_1 = arith.constant 0 : i32
    return %c0_i32, %c0_i32_0 : i32, i32
  }
  func.func @transform_16(%arg0: i32) -> (i32, i32, i32) {
    %c0_i32 = arith.constant 0 : i32
    %c0_i32_0 = arith.constant 0 : i32
    %c0_i32_1 = arith.constant 0 : i32
    %c0_i32_2 = arith.constant 0 : i32
    return %c0_i32, %c0_i32_0, %c0_i32_1 : i32, i32, i32
  }
  func.func @transform_17(%arg0: i32) -> (i32, i32) {
    %c0_i32 = arith.constant 0 : i32
    %c0_i32_0 = arith.constant 0 : i32
    %c0_i32_1 = arith.constant 0 : i32
    return %c0_i32, %c0_i32_0 : i32, i32
  }
  func.func @transform_18(%arg0: i32) -> (i32, i32, i32, i32) {
    %c0_i32 = arith.constant 0 : i32
    %c0_i32_0 = arith.constant 0 : i32
    %c0_i32_1 = arith.constant 0 : i32
    %c0_i32_2 = arith.constant 0 : i32
    return %arg0, %c0_i32, %c0_i32_0, %c0_i32_1 : i32, i32, i32, i32
  }
}

</mosaic_0001>

<llo_original>
// kernel: tpu_custom_call.1
$region0: #{tpu_custom_call.1}
  #allocation0 [shape = 'u32[]', space=smem, size = 0x4, offset = 0x4, fixed_abs, tag = 'smem constant byte address 0x4 - core index']
  #allocation1 [shape = 'u32[144,128]{1,0:T(1,128)}', space=vmem, size = 0x12000, scoped, tag = 'internal scratch']
  %s0 = inlined_call_operand.hbm [shape: f32[2,4,8,128], index: 0, kind: input, shape index: {}]
  %s1 = inlined_call_operand.hbm [shape: f32[2,32,32], index: 1, kind: input, shape index: {}]
  %s2 = inlined_call_operand.vmem [shape: f32[2,128], index: 2, kind: input, shape index: {}]
  %s3 = inlined_call_operand.hbm [shape: f32[2,128], index: 3, kind: input, shape index: {}]
  %s4 = inlined_call_operand.hbm [shape: bf16[2,128,128], index: 4, kind: input, shape index: {}]
  %s5 = inlined_call_operand.hbm [shape: bf16[2,128,128], index: 5, kind: input, shape index: {}]
  %s6 = inlined_call_operand.hbm [shape: bf16[2,128,128], index: 6, kind: input, shape index: {}]
  %s7 = inlined_call_operand.vmem [shape: f32[2,128], index: 7, kind: input, shape index: {}]
  %s8 = inlined_call_operand.vmem [shape: f32[2,128], index: 8, kind: input, shape index: {}]
  %s9 = inlined_call_operand.vmem [shape: f32[2,128], index: 9, kind: input, shape index: {}]
  %s10 = inlined_call_operand.hbm [shape: bf16[8,32,128], index: 10, kind: input, shape index: {}]
  %s11 = inlined_call_operand.vmem [shape: f32[2,128], index: 11, kind: input, shape index: {}]
  %s12 = inlined_call_operand.vmem [shape: f32[2,128], index: 12, kind: input, shape index: {}]
  %s13 = inlined_call_operand.vmem [shape: f32[2,128], index: 13, kind: input, shape index: {}]
  %s14 = inlined_call_operand.hbm [shape: bf16[2,128,256], index: 14, kind: input, shape index: {}]
  %s15 = inlined_call_operand.vmem [shape: f32[2,256], index: 15, kind: input, shape index: {}]
  %s16 = inlined_call_operand.hbm [shape: bf16[2,256,128], index: 16, kind: input, shape index: {}]
  %s17 = inlined_call_operand.vmem [shape: f32[2,128], index: 17, kind: input, shape index: {}]
  %s18 = inlined_call_operand.hbm [shape: f32[2,4,8,128], index: 18, kind: output, shape index: {}]
  %s19 = sld [smem:[#allocation0]]
  $region141: #{tpu_custom_call.1} parent=0
    _
  %s21 = ssub.s32 1, %s19
  %s22 = scalar_select 0, %s21, %s19
  $region1: #{tpu_custom_call.1} parent=0
    #allocation2 [shape = 'u8[32768]{0}', space=vmem, size = 0x8000, scoped, tag = 'input window, operand 0']
    #allocation3 [shape = 's32[2]{0}', space=sflag, size = 0x8, scoped, tag = 'scoped memory for tpu_custom_call.1']
    #allocation4 [shape = 's32[2]{0}', space=sflag, size = 0x8, scoped, tag = 'scoped memory for tpu_custom_call.1']
    #allocation5 [shape = 'u8[32768]{0}', space=vmem, size = 0x8000, scoped, tag = 'input window, operand 1, single buffered']
    #allocation6 [shape = 's32[1]{0}', space=sflag, size = 0x4, scoped, tag = 'scoped memory for tpu_custom_call.1']
    #allocation7 [shape = 'u8[1024]{0}', space=vmem, size = 0x400, scoped, tag = 'input window, operand 3, single buffered']
    #allocation8 [shape = 'u8[65536]{0}', space=vmem, size = 0x10000, scoped, tag = 'input window, operand 4, single buffered']
    #allocation9 [shape = 's32[1]{0}', space=sflag, size = 0x4, scoped, tag = 'scoped memory for tpu_custom_call.1']
    #allocation10 [shape = 'u8[65536]{0}', space=vmem, size = 0x10000, scoped, tag = 'input window, operand 5, single buffered']
    #allocation11 [shape = 'u8[65536]{0}', space=vmem, size = 0x10000, scoped, tag = 'input window, operand 6, single buffered']
    #allocation12 [shape = 's32[1]{0}', space=sflag, size = 0x4, scoped, tag = 'scoped memory for tpu_custom_call.1']
    #allocation13 [shape = 'u8[65536]{0}', space=vmem, size = 0x10000, scoped, tag = 'input window, operand 10, single buffered']
    #allocation14 [shape = 'u8[131072]{0}', space=vmem, size = 0x20000, scoped, tag = 'input window, operand 14, single buffered']
    #allocation15 [shape = 's32[1]{0}', space=sflag, size = 0x4, scoped, tag = 'scoped memory for tpu_custom_call.1']
    #allocation16 [shape = 'u8[131072]{0}', space=vmem, size = 0x20000, scoped, tag = 'input window, operand 16, single buffered']
    #allocation17 [shape = 'u8[32768]{0}', space=vmem, size = 0x8000, scoped, tag = 'output window, operand 0']
    %23 = vsyncpa [#allocation3], 0
    %s24 = scalar_lea.sflag [#allocation3], 1
    %25 = vsyncpa %s24, 0
    %26 = vsyncpa [#allocation6], 0
    %27 = vsyncpa [#allocation9], 0
    %28 = vsyncpa [#allocation12], 0
    %29 = vsyncpa [#allocation15], 0
    %30 = vsyncpa [#allocation4], 0
    %s31 = scalar_lea.sflag [#allocation4], 1
    %32 = vsyncpa %s31, 0
    loop: start=0, step=1, limit=4
    $region2: #{tpu_custom_call.1} parent=1 // loop_pre_header
      _
    $region3: #{tpu_custom_call.1} parent=1 // loop_header
      %s34 = sphi 0, %s38
      %p35 = scmp.ge.s32.totalorder %s34, 4
      %s44 = sphi 0, %s46
      %s47 = sphi 0, %s44
      %s48 = sphi 0, %s47
      %s64 = sphi 0, %s48
      %s68 = sphi 0, %s68
      %s70 = sphi 0, %s68
      %s71 = sphi 0, %s70
      %s85 = sphi 0, %s71
      %s89 = sphi 0, %s89
      %s91 = sphi 0, %s89
      %s92 = sphi 0, %s91
      %s106 = sphi 0, %s92
      %s110 = sphi 0, %s110
      %s112 = sphi 0, %s110
      %s113 = sphi 0, %s112
      %s127 = sphi 0, %s113
      %s131 = sphi 0, %s131
      %s133 = sphi 0, %s131
      %s134 = sphi 0, %s133
      %s148 = sphi 0, %s134
      %s152 = sphi 0, %s152
      %s154 = sphi 0, %s152
      %s155 = sphi 0, %s154
      %s169 = sphi 0, %s155
      %s173 = sphi 0, %s173
      %s175 = sphi 0, %s173
      %s176 = sphi 0, %s175
      %s190 = sphi 0, %s176
      %s194 = sphi 0, %s194
      %s196 = sphi 0, %s194
      %s197 = sphi 0, %s196
      %s211 = sphi 0, %s197
      %s215 = sphi 0, %s215
      %s217 = sphi 0, %s215
      %s218 = sphi 0, %s217
      %s232 = sphi 0, %s218
      %s236 = sphi 0, %s236
      %s238 = sphi 0, %s236
      %s239 = sphi 0, %s238
      %s253 = sphi 0, %s239
      %s257 = sphi 0, %s257
      %s259 = sphi 0, %s257
      %s260 = sphi 0, %s259
      %s274 = sphi 0, %s260
      %s278 = sphi 0, %s278
      %s280 = sphi 0, %s278
      %s281 = sphi 0, %s280
      %s295 = sphi 0, %s281
      %s299 = sphi 0, %s299
      %s301 = sphi 0, %s299
      %s302 = sphi 0, %s301
      %s316 = sphi 0, %s302
      %s320 = sphi 0, %s320
      %s322 = sphi 0, %s320
      %s323 = sphi 0, %s322
      %s337 = sphi 0, %s323
      %s341 = sphi 0, %s341
      %s343 = sphi 0, %s341
      %s344 = sphi 0, %s343
      %s358 = sphi 0, %s344
      %s362 = sphi 0, %s362
      %s364 = sphi 0, %s362
      %s365 = sphi 0, %s364
      %s379 = sphi 0, %s365
      %s383 = sphi 0, %s383
      %s385 = sphi 0, %s383
      %s386 = sphi 0, %s385
      %s400 = sphi 0, %s386
      %s404 = sphi 0, %s404
      %s406 = sphi 0, %s404
      %s407 = sphi 0, %s406
      %s421 = sphi 0, %s407
      %s427 = sphi 0, %s429
      %s430 = sphi 0, %s427
      %s431 = sphi 0, %s430
      %s447 = sphi 0, %s431
    $region4: #{tpu_custom_call.1} parent=1 // loop_header_branch
      %37 = sbr.rel (%p35) target = $region8
    $region5: #{tpu_custom_call.1} parent=1 // loop_body
      %s39 = ssub.s32 %s34, 1
      %s40 = ssub.s32 %s34, 2
      %s41 = sadd.s32 %s34, 1
      %s42 = ssub.s32 %s34, %s41
      %p43 = scmp.eq.s32.totalorder %s42, 0
      %s45 = sadd.s32 %s44, 1
      %s46 = scalar_select %p43, %s44, %s45
      %p49 = pneg %p43
      %p50 = scmp.eq.s32.totalorder %s34, 1
      %p51 = por %p49, %p50
      %p52 = scmp.ne.s32.totalorder %s44, %s47
      %p53 = scmp.eq.s32.totalorder %s34, 0
      %p54 = por %p52, %p53
      %p55 = scmp.ne.s32.totalorder %s44, %s47
      %p56 = scmp.eq.s32.totalorder %s39, 1
      %p57 = por %p55, %p56
      %p58 = scmp.ne.s32.totalorder %s47, %s48
      %p59 = scmp.eq.s32.totalorder %s39, 0
      %p60 = por %p58, %p59
      %p61 = scmp.ne.s32.totalorder %s47, %s48
      %p62 = scmp.eq.s32.totalorder %s40, 1
      %p63 = por %p61, %p62
      %p65 = scmp.ne.s32.totalorder %s48, %s64
      %p66 = scmp.eq.s32.totalorder %s40, 0
      %p67 = por %p65, %p66
      %s69 = sadd.s32 %s68, 1
      %p72 = scmp.eq.s32.totalorder %s34, 1
      %p73 = scmp.ne.s32.totalorder %s68, %s70
      %p74 = scmp.eq.s32.totalorder %s34, 0
      %p75 = por %p73, %p74
      %p76 = scmp.ne.s32.totalorder %s68, %s70
      %p77 = scmp.eq.s32.totalorder %s39, 1
      %p78 = por %p76, %p77
      %p79 = scmp.ne.s32.totalorder %s70, %s71
      %p80 = scmp.eq.s32.totalorder %s39, 0
      %p81 = por %p79, %p80
      %p82 = scmp.ne.s32.totalorder %s70, %s71
      %p83 = scmp.eq.s32.totalorder %s40, 1
      %p84 = por %p82, %p83
      %p86 = scmp.ne.s32.totalorder %s71, %s85
      %p87 = scmp.eq.s32.totalorder %s40, 0
      %p88 = por %p86, %p87
      %s90 = sadd.s32 %s89, 1
      %p93 = scmp.eq.s32.totalorder %s34, 1
      %p94 = scmp.ne.s32.totalorder %s89, %s91
      %p95 = scmp.eq.s32.totalorder %s34, 0
      %p96 = por %p94, %p95
      %p97 = scmp.ne.s32.totalorder %s89, %s91
      %p98 = scmp.eq.s32.totalorder %s39, 1
      %p99 = por %p97, %p98
      %p100 = scmp.ne.s32.totalorder %s91, %s92
      %p101 = scmp.eq.s32.totalorder %s39, 0
      %p102 = por %p100, %p101
      %p103 = scmp.ne.s32.totalorder %s91, %s92
      %p104 = scmp.eq.s32.totalorder %s40, 1
      %p105 = por %p103, %p104
      %p107 = scmp.ne.s32.totalorder %s92, %s106
      %p108 = scmp.eq.s32.totalorder %s40, 0
      %p109 = por %p107, %p108
      %s111 = sadd.s32 %s110, 1
      %p114 = scmp.eq.s32.totalorder %s34, 1
      %p115 = scmp.ne.s32.totalorder %s110, %s112
      %p116 = scmp.eq.s32.totalorder %s34, 0
      %p117 = por %p115, %p116
      %p118 = scmp.ne.s32.totalorder %s110, %s112
      %p119 = scmp.eq.s32.totalorder %s39, 1
      %p120 = por %p118, %p119
      %p121 = scmp.ne.s32.totalorder %s112, %s113
      %p122 = scmp.eq.s32.totalorder %s39, 0
      %p123 = por %p121, %p122
      %p124 = scmp.ne.s32.totalorder %s112, %s113
      %p125 = scmp.eq.s32.totalorder %s40, 1
      %p126 = por %p124, %p125
      %p128 = scmp.ne.s32.totalorder %s113, %s127
      %p129 = scmp.eq.s32.totalorder %s40, 0
      %p130 = por %p128, %p129
      %s132 = sadd.s32 %s131, 1
      %p135 = scmp.eq.s32.totalorder %s34, 1
      %p136 = scmp.ne.s32.totalorder %s131, %s133
      %p137 = scmp.eq.s32.totalorder %s34, 0
      %p138 = por %p136, %p137
      %p139 = scmp.ne.s32.totalorder %s131, %s133
      %p140 = scmp.eq.s32.totalorder %s39, 1
      %p141 = por %p139, %p140
      %p142 = scmp.ne.s32.totalorder %s133, %s134
      %p143 = scmp.eq.s32.totalorder %s39, 0
      %p144 = por %p142, %p143
      %p145 = scmp.ne.s32.totalorder %s133, %s134
      %p146 = scmp.eq.s32.totalorder %s40, 1
      %p147 = por %p145, %p146
      %p149 = scmp.ne.s32.totalorder %s134, %s148
      %p150 = scmp.eq.s32.totalorder %s40, 0
      %p151 = por %p149, %p150
      %s153 = sadd.s32 %s152, 1
      %p156 = scmp.eq.s32.totalorder %s34, 1
      %p157 = scmp.ne.s32.totalorder %s152, %s154
      %p158 = scmp.eq.s32.totalorder %s34, 0
      %p159 = por %p157, %p158
      %p160 = scmp.ne.s32.totalorder %s152, %s154
      %p161 = scmp.eq.s32.totalorder %s39, 1
      %p162 = por %p160, %p161
      %p163 = scmp.ne.s32.totalorder %s154, %s155
      %p164 = scmp.eq.s32.totalorder %s39, 0
      %p165 = por %p163, %p164
      %p166 = scmp.ne.s32.totalorder %s154, %s155
      %p167 = scmp.eq.s32.totalorder %s40, 1
      %p168 = por %p166, %p167
      %p170 = scmp.ne.s32.totalorder %s155, %s169
      %p171 = scmp.eq.s32.totalorder %s40, 0
      %p172 = por %p170, %p171
      %s174 = sadd.s32 %s173, 1
      %p177 = scmp.eq.s32.totalorder %s34, 1
      %p178 = scmp.ne.s32.totalorder %s173, %s175
      %p179 = scmp.eq.s32.totalorder %s34, 0
      %p180 = por %p178, %p179
      %p181 = scmp.ne.s32.totalorder %s173, %s175
      %p182 = scmp.eq.s32.totalorder %s39, 1
      %p183 = por %p181, %p182
      %p184 = scmp.ne.s32.totalorder %s175, %s176
      %p185 = scmp.eq.s32.totalorder %s39, 0
      %p186 = por %p184, %p185
      %p187 = scmp.ne.s32.totalorder %s175, %s176
      %p188 = scmp.eq.s32.totalorder %s40, 1
      %p189 = por %p187, %p188
      %p191 = scmp.ne.s32.totalorder %s176, %s190
      %p192 = scmp.eq.s32.totalorder %s40, 0
      %p193 = por %p191, %p192
      %s195 = sadd.s32 %s194, 1
      %p198 = scmp.eq.s32.totalorder %s34, 1
      %p199 = scmp.ne.s32.totalorder %s194, %s196
      %p200 = scmp.eq.s32.totalorder %s34, 0
      %p201 = por %p199, %p200
      %p202 = scmp.ne.s32.totalorder %s194, %s196
      %p203 = scmp.eq.s32.totalorder %s39, 1
      %p204 = por %p202, %p203
      %p205 = scmp.ne.s32.totalorder %s196, %s197
      %p206 = scmp.eq.s32.totalorder %s39, 0
      %p207 = por %p205, %p206
      %p208 = scmp.ne.s32.totalorder %s196, %s197
      %p209 = scmp.eq.s32.totalorder %s40, 1
      %p210 = por %p208, %p209
      %p212 = scmp.ne.s32.totalorder %s197, %s211
      %p213 = scmp.eq.s32.totalorder %s40, 0
      %p214 = por %p212, %p213
      %s216 = sadd.s32 %s215, 1
      %p219 = scmp.eq.s32.totalorder %s34, 1
      %p220 = scmp.ne.s32.totalorder %s215, %s217
      %p221 = scmp.eq.s32.totalorder %s34, 0
      %p222 = por %p220, %p221
      %p223 = scmp.ne.s32.totalorder %s215, %s217
      %p224 = scmp.eq.s32.totalorder %s39, 1
      %p225 = por %p223, %p224
      %p226 = scmp.ne.s32.totalorder %s217, %s218
      %p227 = scmp.eq.s32.totalorder %s39, 0
      %p228 = por %p226, %p227
      %p229 = scmp.ne.s32.totalorder %s217, %s218
      %p230 = scmp.eq.s32.totalorder %s40, 1
      %p231 = por %p229, %p230
      %p233 = scmp.ne.s32.totalorder %s218, %s232
      %p234 = scmp.eq.s32.totalorder %s40, 0
      %p235 = por %p233, %p234
      %s237 = sadd.s32 %s236, 1
      %p240 = scmp.eq.s32.totalorder %s34, 1
      %p241 = scmp.ne.s32.totalorder %s236, %s238
      %p242 = scmp.eq.s32.totalorder %s34, 0
      %p243 = por %p241, %p242
      %p244 = scmp.ne.s32.totalorder %s236, %s238
      %p245 = scmp.eq.s32.totalorder %s39, 1
      %p246 = por %p244, %p245
      %p247 = scmp.ne.s32.totalorder %s238, %s239
      %p248 = scmp.eq.s32.totalorder %s39, 0
      %p249 = por %p247, %p248
      %p250 = scmp.ne.s32.totalorder %s238, %s239
      %p251 = scmp.eq.s32.totalorder %s40, 1
      %p252 = por %p250, %p251
      %p254 = scmp.ne.s32.totalorder %s239, %s253
      %p255 = scmp.eq.s32.totalorder %s40, 0
      %p256 = por %p254, %p255
      %s258 = sadd.s32 %s257, 1
      %p261 = scmp.eq.s32.totalorder %s34, 1
      %p262 = scmp.ne.s32.totalorder %s257, %s259
      %p263 = scmp.eq.s32.totalorder %s34, 0
      %p264 = por %p262, %p263
      %p265 = scmp.ne.s32.totalorder %s257, %s259
      %p266 = scmp.eq.s32.totalorder %s39, 1
      %p267 = por %p265, %p266
      %p268 = scmp.ne.s32.totalorder %s259, %s260
      %p269 = scmp.eq.s32.totalorder %s39, 0
      %p270 = por %p268, %p269
      %p271 = scmp.ne.s32.totalorder %s259, %s260
      %p272 = scmp.eq.s32.totalorder %s40, 1
      %p273 = por %p271, %p272
      %p275 = scmp.ne.s32.totalorder %s260, %s274
      %p276 = scmp.eq.s32.totalorder %s40, 0
      %p277 = por %p275, %p276
      %s279 = sadd.s32 %s278, 1
      %p282 = scmp.eq.s32.totalorder %s34, 1
      %p283 = scmp.ne.s32.totalorder %s278, %s280
      %p284 = scmp.eq.s32.totalorder %s34, 0
      %p285 = por %p283, %p284
      %p286 = scmp.ne.s32.totalorder %s278, %s280
      %p287 = scmp.eq.s32.totalorder %s39, 1
      %p288 = por %p286, %p287
      %p289 = scmp.ne.s32.totalorder %s280, %s281
      %p290 = scmp.eq.s32.totalorder %s39, 0
      %p291 = por %p289, %p290
      %p292 = scmp.ne.s32.totalorder %s280, %s281
      %p293 = scmp.eq.s32.totalorder %s40, 1
      %p294 = por %p292, %p293
      %p296 = scmp.ne.s32.totalorder %s281, %s295
      %p297 = scmp.eq.s32.totalorder %s40, 0
      %p298 = por %p296, %p297
      %s300 = sadd.s32 %s299, 1
      %p303 = scmp.eq.s32.totalorder %s34, 1
      %p304 = scmp.ne.s32.totalorder %s299, %s301
      %p305 = scmp.eq.s32.totalorder %s34, 0
      %p306 = por %p304, %p305
      %p307 = scmp.ne.s32.totalorder %s299, %s301
      %p308 = scmp.eq.s32.totalorder %s39, 1
      %p309 = por %p307, %p308
      %p310 = scmp.ne.s32.totalorder %s301, %s302
      %p311 = scmp.eq.s32.totalorder %s39, 0
      %p312 = por %p310, %p311
      %p313 = scmp.ne.s32.totalorder %s301, %s302
      %p314 = scmp.eq.s32.totalorder %s40, 1
      %p315 = por %p313, %p314
      %p317 = scmp.ne.s32.totalorder %s302, %s316
      %p318 = scmp.eq.s32.totalorder %s40, 0
      %p319 = por %p317, %p318
      %s321 = sadd.s32 %s320, 1
      %p324 = scmp.eq.s32.totalorder %s34, 1
      %p325 = scmp.ne.s32.totalorder %s320, %s322
      %p326 = scmp.eq.s32.totalorder %s34, 0
      %p327 = por %p325, %p326
      %p328 = scmp.ne.s32.totalorder %s320, %s322
      %p329 = scmp.eq.s32.totalorder %s39, 1
      %p330 = por %p328, %p329
      %p331 = scmp.ne.s32.totalorder %s322, %s323
      %p332 = scmp.eq.s32.totalorder %s39, 0
      %p333 = por %p331, %p332
      %p334 = scmp.ne.s32.totalorder %s322, %s323
      %p335 = scmp.eq.s32.totalorder %s40, 1
      %p336 = por %p334, %p335
      %p338 = scmp.ne.s32.totalorder %s323, %s337
      %p339 = scmp.eq.s32.totalorder %s40, 0
      %p340 = por %p338, %p339
      %s342 = sadd.s32 %s341, 1
      %p345 = scmp.eq.s32.totalorder %s34, 1
      %p346 = scmp.ne.s32.totalorder %s341, %s343
      %p347 = scmp.eq.s32.totalorder %s34, 0
      %p348 = por %p346, %p347
      %p349 = scmp.ne.s32.totalorder %s341, %s343
      %p350 = scmp.eq.s32.totalorder %s39, 1
      %p351 = por %p349, %p350
      %p352 = scmp.ne.s32.totalorder %s343, %s344
      %p353 = scmp.eq.s32.totalorder %s39, 0
      %p354 = por %p352, %p353
      %p355 = scmp.ne.s32.totalorder %s343, %s344
      %p356 = scmp.eq.s32.totalorder %s40, 1
      %p357 = por %p355, %p356
      %p359 = scmp.ne.s32.totalorder %s344, %s358
      %p360 = scmp.eq.s32.totalorder %s40, 0
      %p361 = por %p359, %p360
      %s363 = sadd.s32 %s362, 1
      %p366 = scmp.eq.s32.totalorder %s34, 1
      %p367 = scmp.ne.s32.totalorder %s362, %s364
      %p368 = scmp.eq.s32.totalorder %s34, 0
      %p369 = por %p367, %p368
      %p370 = scmp.ne.s32.totalorder %s362, %s364
      %p371 = scmp.eq.s32.totalorder %s39, 1
      %p372 = por %p370, %p371
      %p373 = scmp.ne.s32.totalorder %s364, %s365
      %p374 = scmp.eq.s32.totalorder %s39, 0
      %p375 = por %p373, %p374
      %p376 = scmp.ne.s32.totalorder %s364, %s365
      %p377 = scmp.eq.s32.totalorder %s40, 1
      %p378 = por %p376, %p377
      %p380 = scmp.ne.s32.totalorder %s365, %s379
      %p381 = scmp.eq.s32.totalorder %s40, 0
      %p382 = por %p380, %p381
      %s384 = sadd.s32 %s383, 1
      %p387 = scmp.eq.s32.totalorder %s34, 1
      %p388 = scmp.ne.s32.totalorder %s383, %s385
      %p389 = scmp.eq.s32.totalorder %s34, 0
      %p390 = por %p388, %p389
      %p391 = scmp.ne.s32.totalorder %s383, %s385
      %p392 = scmp.eq.s32.totalorder %s39, 1
      %p393 = por %p391, %p392
      %p394 = scmp.ne.s32.totalorder %s385, %s386
      %p395 = scmp.eq.s32.totalorder %s39, 0
      %p396 = por %p394, %p395
      %p397 = scmp.ne.s32.totalorder %s385, %s386
      %p398 = scmp.eq.s32.totalorder %s40, 1
      %p399 = por %p397, %p398
      %p401 = scmp.ne.s32.totalorder %s386, %s400
      %p402 = scmp.eq.s32.totalorder %s40, 0
      %p403 = por %p401, %p402
      %s405 = sadd.s32 %s404, 1
      %p408 = scmp.eq.s32.totalorder %s34, 1
      %p409 = scmp.ne.s32.totalorder %s404, %s406
      %p410 = scmp.eq.s32.totalorder %s34, 0
      %p411 = por %p409, %p410
      %p412 = scmp.ne.s32.totalorder %s404, %s406
      %p413 = scmp.eq.s32.totalorder %s39, 1
      %p414 = por %p412, %p413
      %p415 = scmp.ne.s32.totalorder %s406, %s407
      %p416 = scmp.eq.s32.totalorder %s39, 0
      %p417 = por %p415, %p416
      %p418 = scmp.ne.s32.totalorder %s406, %s407
      %p419 = scmp.eq.s32.totalorder %s40, 1
      %p420 = por %p418, %p419
      %p422 = scmp.ne.s32.totalorder %s407, %s421
      %p423 = scmp.eq.s32.totalorder %s40, 0
      %p424 = por %p422, %p423
      %s425 = ssub.s32 %s34, %s41
      %p426 = scmp.eq.s32.totalorder %s425, 0
      %s428 = sadd.s32 %s427, 1
      %s429 = scalar_select %p426, %s427, %s428
      %p432 = pneg %p426
      %p433 = scmp.eq.s32.totalorder %s34, 1
      %p434 = por %p432, %p433
      %p435 = scmp.ne.s32.totalorder %s427, %s430
      %p436 = scmp.eq.s32.totalorder %s34, 0
      %p437 = por %p435, %p436
      %p438 = scmp.ne.s32.totalorder %s427, %s430
      %p439 = scmp.eq.s32.totalorder %s39, 1
      %p440 = por %p438, %p439
      %p441 = scmp.ne.s32.totalorder %s430, %s431
      %p442 = scmp.eq.s32.totalorder %s39, 0
      %p443 = por %p441, %p442
      %p444 = scmp.ne.s32.totalorder %s430, %s431
      %p445 = scmp.eq.s32.totalorder %s40, 1
      %p446 = por %p444, %p445
      %p448 = scmp.ne.s32.totalorder %s431, %s447
      %p449 = scmp.eq.s32.totalorder %s40, 0
      %p450 = por %p448, %p449
      %p451 = scmp.le.s32.totalorder 1, %s34
      %p452 = scmp.lt.s32.totalorder %s34, 3
      %p453 = pnand %p451, %p452
      %p454 = pneg %p453
      // Predicated region
      $region9: #{tpu_custom_call.1} parent=5 // pred_check
        _
      $region10: #{tpu_custom_call.1} parent=5 // pred_check_branch
        %456 = sbr.rel (%p453) target = $region12
      $region11: #{tpu_custom_call.1} parent=5 // pred_region
        %s457 = ssub.s32 %s34, 1
        // Predicated region
        $region13: #{tpu_custom_call.1} parent=11 // pred_check
          %p458 = pneg %p81
        $region14: #{tpu_custom_call.1} parent=11 // pred_check_branch
          %460 = sbr.rel (%p458) target = $region16
        $region15: #{tpu_custom_call.1} parent=11 // pred_region
          %s462 = ssub.s32 1024, 1024
          %463 = vsyncadd [#allocation6], %s462
          %s464 = sshll.u32 [#allocation5], 4
          %s465 = int_to_ptr.vmem [resolvable:$true] %s464
          %470 = dma.hbm_to_vmem [thread:$0]  %s1, 1024, %s465, [#allocation6], 128, 128, 8
        $region16: #{tpu_custom_call.1} parent=11 // pred_fallthru
          _
        // Predicated region
        $region17: #{tpu_custom_call.1} parent=11 // pred_check
          %p471 = pneg %p102
        $region18: #{tpu_custom_call.1} parent=11 // pred_check_branch
          %473 = sbr.rel (%p471) target = $region20
        $region19: #{tpu_custom_call.1} parent=11 // pred_region
          _
        $region20: #{tpu_custom_call.1} parent=11 // pred_fallthru
          _
        // Predicated region
        $region21: #{tpu_custom_call.1} parent=11 // pred_check
          %p474 = pneg %p123
        $region22: #{tpu_custom_call.1} parent=11 // pred_check_branch
          %476 = sbr.rel (%p474) target = $region24
        $region23: #{tpu_custom_call.1} parent=11 // pred_region
          %s478 = ssub.s32 32, 32
          %479 = vsyncadd [#allocation6], %s478
          %s481 = sshll.u32 [#allocation7], 4
          %s482 = int_to_ptr.vmem [resolvable:$true] %s481
          %484 = dma.hbm_to_vmem [thread:$0]  %s3, 32, %s482, [#allocation6]
        $region24: #{tpu_custom_call.1} parent=11 // pred_fallthru
          _
        // Predicated region
        $region25: #{tpu_custom_call.1} parent=11 // pred_check
          %p485 = pneg %p144
        $region26: #{tpu_custom_call.1} parent=11 // pred_check_branch
          %487 = sbr.rel (%p485) target = $region28
        $region27: #{tpu_custom_call.1} parent=11 // pred_region
          %s489 = ssub.s32 2048, 2048
          %490 = vsyncadd [#allocation9], %s489
          %s491 = sshll.u32 [#allocation8], 4
          %s492 = int_to_ptr.vmem [resolvable:$true] %s491
          %497 = dma.hbm_to_vmem [thread:$0]  %s4, 2048, %s492, [#allocation9], 64, 64, 4
        $region28: #{tpu_custom_call.1} parent=11 // pred_fallthru
          _
        // Predicated region
        $region29: #{tpu_custom_call.1} parent=11 // pred_check
          %p498 = pneg %p165
        $region30: #{tpu_custom_call.1} parent=11 // pred_check_branch
          %500 = sbr.rel (%p498) target = $region32
        $region31: #{tpu_custom_call.1} parent=11 // pred_region
          %s502 = ssub.s32 2048, 2048
          %503 = vsyncadd [#allocation9], %s502
          %s504 = sshll.u32 [#allocation10], 4
          %s505 = int_to_ptr.vmem [resolvable:$true] %s504
          %510 = dma.hbm_to_vmem [thread:$0]  %s5, 2048, %s505, [#allocation9], 64, 64, 4
        $region32: #{tpu_custom_call.1} parent=11 // pred_fallthru
          _
        // Predicated region
        $region33: #{tpu_custom_call.1} parent=11 // pred_check
          %p511 = pneg %p186
        $region34: #{tpu_custom_call.1} parent=11 // pred_check_branch
          %513 = sbr.rel (%p511) target = $region36
        $region35: #{tpu_custom_call.1} parent=11 // pred_region
          %s515 = ssub.s32 2048, 2048
          %516 = vsyncadd [#allocation12], %s515
          %s517 = sshll.u32 [#allocation11], 4
          %s518 = int_to_ptr.vmem [resolvable:$true] %s517
          %523 = dma.hbm_to_vmem [thread:$0]  %s6, 2048, %s518, [#allocation12], 64, 64, 4
        $region36: #{tpu_custom_call.1} parent=11 // pred_fallthru
          _
        // Predicated region
        $region37: #{tpu_custom_call.1} parent=11 // pred_check
          %p524 = pneg %p207
        $region38: #{tpu_custom_call.1} parent=11 // pred_check_branch
          %526 = sbr.rel (%p524) target = $region40
        $region39: #{tpu_custom_call.1} parent=11 // pred_region
          _
        $region40: #{tpu_custom_call.1} parent=11 // pred_fallthru
          _
        // Predicated region
        $region41: #{tpu_custom_call.1} parent=11 // pred_check
          %p527 = pneg %p228
        $region42: #{tpu_custom_call.1} parent=11 // pred_check_branch
          %529 = sbr.rel (%p527) target = $region44
        $region43: #{tpu_custom_call.1} parent=11 // pred_region
          _
        $region44: #{tpu_custom_call.1} parent=11 // pred_fallthru
          _
        // Predicated region
        $region45: #{tpu_custom_call.1} parent=11 // pred_check
          %p530 = pneg %p249
        $region46: #{tpu_custom_call.1} parent=11 // pred_check_branch
          %532 = sbr.rel (%p530) target = $region48
        $region47: #{tpu_custom_call.1} parent=11 // pred_region
          _
        $region48: #{tpu_custom_call.1} parent=11 // pred_fallthru
          _
        // Predicated region
        $region49: #{tpu_custom_call.1} parent=11 // pred_check
          %p533 = pneg %p270
        $region50: #{tpu_custom_call.1} parent=11 // pred_check_branch
          %535 = sbr.rel (%p533) target = $region52
        $region51: #{tpu_custom_call.1} parent=11 // pred_region
          %s537 = ssub.s32 2048, 2048
          %538 = vsyncadd [#allocation12], %s537
          %s539 = sshll.u32 [#allocation13], 4
          %s540 = int_to_ptr.vmem [resolvable:$true] %s539
          %545 = dma.hbm_to_vmem [thread:$0]  %s10, 2048, %s540, [#allocation12], 64, 64, 4
        $region52: #{tpu_custom_call.1} parent=11 // pred_fallthru
          _
        // Predicated region
        $region53: #{tpu_custom_call.1} parent=11 // pred_check
          %p546 = pneg %p291
        $region54: #{tpu_custom_call.1} parent=11 // pred_check_branch
          %548 = sbr.rel (%p546) target = $region56
        $region55: #{tpu_custom_call.1} parent=11 // pred_region
          _
        $region56: #{tpu_custom_call.1} parent=11 // pred_fallthru
          _
        // Predicated region
        $region57: #{tpu_custom_call.1} parent=11 // pred_check
          %p549 = pneg %p312
        $region58: #{tpu_custom_call.1} parent=11 // pred_check_branch
          %551 = sbr.rel (%p549) target = $region60
        $region59: #{tpu_custom_call.1} parent=11 // pred_region
          _
        $region60: #{tpu_custom_call.1} parent=11 // pred_fallthru
          _
        // Predicated region
        $region61: #{tpu_custom_call.1} parent=11 // pred_check
          %p552 = pneg %p333
        $region62: #{tpu_custom_call.1} parent=11 // pred_check_branch
          %554 = sbr.rel (%p552) target = $region64
        $region63: #{tpu_custom_call.1} parent=11 // pred_region
          _
        $region64: #{tpu_custom_call.1} parent=11 // pred_fallthru
          _
        // Predicated region
        $region65: #{tpu_custom_call.1} parent=11 // pred_check
          %p555 = pneg %p354
        $region66: #{tpu_custom_call.1} parent=11 // pred_check_branch
          %557 = sbr.rel (%p555) target = $region68
        $region67: #{tpu_custom_call.1} parent=11 // pred_region
          %s559 = ssub.s32 4096, 4096
          %560 = vsyncadd [#allocation15], %s559
          %s561 = sshll.u32 [#allocation14], 4
          %s562 = int_to_ptr.vmem [resolvable:$true] %s561
          %567 = dma.hbm_to_vmem [thread:$0]  %s14, 4096, %s562, [#allocation15], 128, 128, 8
        $region68: #{tpu_custom_call.1} parent=11 // pred_fallthru
          _
        // Predicated region
        $region69: #{tpu_custom_call.1} parent=11 // pred_check
          %p568 = pneg %p375
        $region70: #{tpu_custom_call.1} parent=11 // pred_check_branch
          %570 = sbr.rel (%p568) target = $region72
        $region71: #{tpu_custom_call.1} parent=11 // pred_region
          _
        $region72: #{tpu_custom_call.1} parent=11 // pred_fallthru
          _
        // Predicated region
        $region73: #{tpu_custom_call.1} parent=11 // pred_check
          %p571 = pneg %p396
        $region74: #{tpu_custom_call.1} parent=11 // pred_check_branch
          %573 = sbr.rel (%p571) target = $region76
        $region75: #{tpu_custom_call.1} parent=11 // pred_region
          %s575 = ssub.s32 4096, 4096
          %576 = vsyncadd [#allocation15], %s575
          %s577 = sshll.u32 [#allocation16], 4
          %s578 = int_to_ptr.vmem [resolvable:$true] %s577
          %583 = dma.hbm_to_vmem [thread:$0]  %s16, 4096, %s578, [#allocation15], 64, 64, 4
        $region76: #{tpu_custom_call.1} parent=11 // pred_fallthru
          _
        // Predicated region
        $region77: #{tpu_custom_call.1} parent=11 // pred_check
          %p584 = pneg %p417
        $region78: #{tpu_custom_call.1} parent=11 // pred_check_branch
          %586 = sbr.rel (%p584) target = $region80
        $region79: #{tpu_custom_call.1} parent=11 // pred_region
          _
        $region80: #{tpu_custom_call.1} parent=11 // pred_fallthru
          _
      $region12: #{tpu_custom_call.1} parent=5 // pred_fallthru
        _
      %p587 = scmp.lt.s32.totalorder %s34, 2
      // Predicated region
      $region81: #{tpu_custom_call.1} parent=5 // pred_check
        %p588 = pneg %p587
      $region82: #{tpu_custom_call.1} parent=5 // pred_check_branch
        %590 = sbr.rel (%p588) target = $region84
      $region83: #{tpu_custom_call.1} parent=5 // pred_region
        // Predicated region
        $region85: #{tpu_custom_call.1} parent=83 // pred_check
          %p591 = pneg %p54
        $region86: #{tpu_custom_call.1} parent=83 // pred_check_branch
          %593 = sbr.rel (%p591) target = $region88
        $region87: #{tpu_custom_call.1} parent=83 // pred_region
          %s594 = sand.u32 %s44, 1
          %s595 = scalar_lea.sflag [#allocation3], %s594
          %s596 = sand.u32 %s44, 1
          %s597 = smul.addr %s596, 32
          %s598 = scalar_lea.vmem [#allocation2], %s597
          %s600 = ssub.s32 512, 512
          %601 = vsyncadd %s595, %s600
          %s602 = smul.addr %s34, 4
          %s603 = smul.addr %s602, 128
          %s604 = scalar_lea.hbm %s0, %s603
          %s605 = sshll.u32 %s598, 4
          %s606 = int_to_ptr.vmem [resolvable:$true] %s605
          %611 = dma.hbm_to_vmem [thread:$0]  %s604, 512, %s606, %s595, 128, 128, 8
        $region88: #{tpu_custom_call.1} parent=83 // pred_fallthru
          _
      $region84: #{tpu_custom_call.1} parent=5 // pred_fallthru
        _
      %p612 = scmp.le.s32.totalorder 1, %s34
      %p613 = scmp.lt.s32.totalorder %s34, 3
      %p614 = pnand %p612, %p613
      %p615 = pneg %p614
      // Predicated region
      $region89: #{tpu_custom_call.1} parent=5 // pred_check
        _
      $region90: #{tpu_custom_call.1} parent=5 // pred_check_branch
        %617 = sbr.rel (%p614) target = $region92
      $region91: #{tpu_custom_call.1} parent=5 // pred_region
        %s618 = ssub.s32 %s34, 1
        %s619 = sand.u32 %s47, 1
        %s620 = scalar_lea.sflag [#allocation3], %s619
        %s621 = sand.u32 %s47, 1
        %s622 = smul.addr %s621, 32
        %s623 = scalar_lea.vmem [#allocation2], %s622
        // Predicated region
        $region93: #{tpu_custom_call.1} parent=91 // pred_check
          %p624 = pneg %p60
        $region94: #{tpu_custom_call.1} parent=91 // pred_check_branch
          %626 = sbr.rel (%p624) target = $region96
        $region95: #{tpu_custom_call.1} parent=91 // pred_region
          %627 = dma.done %s620, 512
        $region96: #{tpu_custom_call.1} parent=91 // pred_fallthru
          _
        // Predicated region
        $region97: #{tpu_custom_call.1} parent=91 // pred_check
          %p628 = pneg %p81
        $region98: #{tpu_custom_call.1} parent=91 // pred_check_branch
          %630 = sbr.rel (%p628) target = $region100
        $region99: #{tpu_custom_call.1} parent=91 // pred_region
          %631 = dma.done [#allocation6], 1024
        $region100: #{tpu_custom_call.1} parent=91 // pred_fallthru
          _
        // Predicated region
        $region101: #{tpu_custom_call.1} parent=91 // pred_check
          %p632 = pneg %p123
        $region102: #{tpu_custom_call.1} parent=91 // pred_check_branch
          %634 = sbr.rel (%p632) target = $region104
        $region103: #{tpu_custom_call.1} parent=91 // pred_region
          %635 = dma.done [#allocation6], 32
        $region104: #{tpu_custom_call.1} parent=91 // pred_fallthru
          _
        // Predicated region
        $region105: #{tpu_custom_call.1} parent=91 // pred_check
          %p636 = pneg %p144
        $region106: #{tpu_custom_call.1} parent=91 // pred_check_branch
          %638 = sbr.rel (%p636) target = $region108
        $region107: #{tpu_custom_call.1} parent=91 // pred_region
          %639 = dma.done [#allocation9], 2048
        $region108: #{tpu_custom_call.1} parent=91 // pred_fallthru
          _
        // Predicated region
        $region109: #{tpu_custom_call.1} parent=91 // pred_check
          %p640 = pneg %p165
        $region110: #{tpu_custom_call.1} parent=91 // pred_check_branch
          %642 = sbr.rel (%p640) target = $region112
        $region111: #{tpu_custom_call.1} parent=91 // pred_region
          %643 = dma.done [#allocation9], 2048
        $region112: #{tpu_custom_call.1} parent=91 // pred_fallthru
          _
        // Predicated region
        $region113: #{tpu_custom_call.1} parent=91 // pred_check
          %p644 = pneg %p186
        $region114: #{tpu_custom_call.1} parent=91 // pred_check_branch
          %646 = sbr.rel (%p644) target = $region116
        $region115: #{tpu_custom_call.1} parent=91 // pred_region
          %647 = dma.done [#allocation12], 2048
        $region116: #{tpu_custom_call.1} parent=91 // pred_fallthru
          _
        // Predicated region
        $region117: #{tpu_custom_call.1} parent=91 // pred_check
          %p648 = pneg %p270
        $region118: #{tpu_custom_call.1} parent=91 // pred_check_branch
          %650 = sbr.rel (%p648) target = $region120
        $region119: #{tpu_custom_call.1} parent=91 // pred_region
          %651 = dma.done [#allocation12], 2048
        $region120: #{tpu_custom_call.1} parent=91 // pred_fallthru
          _
        // Predicated region
        $region121: #{tpu_custom_call.1} parent=91 // pred_check
          %p652 = pneg %p354
        $region122: #{tpu_custom_call.1} parent=91 // pred_check_branch
          %654 = sbr.rel (%p652) target = $region124
        $region123: #{tpu_custom_call.1} parent=91 // pred_region
          %655 = dma.done [#allocation15], 4096
        $region124: #{tpu_custom_call.1} parent=91 // pred_fallthru
          _
        // Predicated region
        $region125: #{tpu_custom_call.1} parent=91 // pred_check
          %p656 = pneg %p396
        $region126: #{tpu_custom_call.1} parent=91 // pred_check_branch
          %658 = sbr.rel (%p656) target = $region128
        $region127: #{tpu_custom_call.1} parent=91 // pred_region
          %659 = dma.done [#allocation15], 4096
        $region128: #{tpu_custom_call.1} parent=91 // pred_fallthru
          _
        %s660 = sand.u32 %s47, 1
        %s661 = scalar_lea.sflag [#allocation3], %s660
        %s662 = sand.u32 %s47, 1
        %s663 = smul.addr %s662, 32
        %s664 = scalar_lea.vmem [#allocation2], %s663
        %p665 = pneg %p60
        %p666 = pneg %p57
        %p667 = pneg %p81
        %p668 = pneg %p78
        %p669 = pneg %p102
        %p670 = pneg %p99
        %p671 = pneg %p123
        %p672 = pneg %p120
        %p673 = pneg %p144
        %p674 = pneg %p141
        %p675 = pneg %p165
        %p676 = pneg %p162
        %p677 = pneg %p186
        %p678 = pneg %p183
        %p679 = pneg %p207
        %p680 = pneg %p204
        %p681 = pneg %p228
        %p682 = pneg %p225
        %p683 = pneg %p249
        %p684 = pneg %p246
        %p685 = pneg %p270
        %p686 = pneg %p267
        %p687 = pneg %p291
        %p688 = pneg %p288
        %p689 = pneg %p312
        %p690 = pneg %p309
        %p691 = pneg %p333
        %p692 = pneg %p330
        %p693 = pneg %p354
        %p694 = pneg %p351
        %p695 = pneg %p375
        %p696 = pneg %p372
        %p697 = pneg %p396
        %p698 = pneg %p393
        %p699 = pneg %p417
        %p700 = pneg %p414
        %p701 = pneg %p443
        %p702 = pneg %p440
        %s703 = sand.u32 %s430, 1
        %s704 = scalar_lea.sflag [#allocation4], %s703
        %s705 = sand.u32 %s430, 1
        %s706 = smul.addr %s705, 32
        %s707 = scalar_lea.vmem [#allocation17], %s706
        %v709 = vld [vmem:[%s623] sm:$0xff]
        %v710 = vld [vmem:[%s623 + $0x8] sm:$0xff]
        %v711 = vld [vmem:[%s623 + $0x10] sm:$0xff]
        %v712 = vld [vmem:[%s623 + $0x18] sm:$0xff]
        %v713 = vld [vmem:[#allocation5] sm:$0xff]
        %v714 = vld [vmem:[#allocation5 + $0x8] sm:$0xff]
        %v715 = vld [vmem:[#allocation5 + $0x10] sm:$0xff]
        %v716 = vld [vmem:[#allocation5 + $0x18] sm:$0xff]
        %v717 = vld [vmem:[%s2] sm:$0x1]
        %v718 = vld [vmem:[#allocation7] sm:$0x1]
        %719 = vadd.xlane.f32.xlu0 %v709
        %v720 = vpop.xlane.xlu0 %719
        %721 = vadd.xlane.f32.xlu0 %v710
        %v722 = vpop.xlane.xlu0 %721
        %723 = vadd.xlane.f32.xlu0 %v711
        %v724 = vpop.xlane.xlu0 %723
        %725 = vadd.xlane.f32.xlu0 %v712
        %v726 = vpop.xlane.xlu0 %725
        %v727 = vrcp.pop 128.0
        %v728 = vmul.f32 %v720, %v727
        %v729 = vmul.f32 %v722, %v727
        %v730 = vmul.f32 %v724, %v727
        %v731 = vmul.f32 %v726, %v727
        %v732 = vsub.f32 %v709, %v728
        %v733 = vsub.f32 %v710, %v729
        %v734 = vsub.f32 %v711, %v730
        %v735 = vsub.f32 %v712, %v731
        %v736 = vmul.f32 %v732, %v732
        %v737 = vmul.f32 %v733, %v733
        %v738 = vmul.f32 %v734, %v734
        %v739 = vmul.f32 %v735, %v735
        %740 = vadd.xlane.f32.xlu0 %v736
        %v741 = vpop.xlane.xlu0 %740
        %742 = vadd.xlane.f32.xlu0 %v737
        %v743 = vpop.xlane.xlu0 %742
        %744 = vadd.xlane.f32.xlu0 %v738
        %v745 = vpop.xlane.xlu0 %744
        %746 = vadd.xlane.f32.xlu0 %v739
        %v747 = vpop.xlane.xlu0 %746
        %v748 = vmul.f32 %v741, %v727
        %v749 = vmul.f32 %v743, %v727
        %v750 = vmul.f32 %v745, %v727
        %v751 = vmul.f32 %v747, %v727
        %v752 = vadd.f32 %v748, 1e-05
        %v753 = vadd.f32 %v749, 1e-05
        %v754 = vadd.f32 %v750, 1e-05
        %v755 = vadd.f32 %v751, 1e-05
        %v756 = vrsqrt.pop %v752
        %v757 = vrsqrt.pop %v753
        %v758 = vrsqrt.pop %v754
        %v759 = vrsqrt.pop %v755
        %v760 = vmul.f32 %v732, %v756
        %v761 = vmul.f32 %v733, %v757
        %v762 = vmul.f32 %v734, %v758
        %v763 = vmul.f32 %v735, %v759
        %v764 = vlaneseq
        %v765 = vshrl.u32 %v764, 7
        %v766 = vsub.s32 0, %v765
        %v767 = vrot.slane %v717, %v766
        %v768 = vmul.f32 %v760, %v767
        %v769 = vmul.f32 %v761, %v767
        %v770 = vmul.f32 %v762, %v767
        %v771 = vmul.f32 %v763, %v767
        %v772 = vlaneseq
        %v773 = vshrl.u32 %v772, 7
        %v774 = vsub.s32 0, %v773
        %v775 = vrot.slane %v718, %v774
        %v776 = vadd.f32 %v768, %v775
        %v777 = vadd.f32 %v769, %v775
        %v778 = vadd.f32 %v770, %v775
        %v779 = vadd.f32 %v771, %v775
        %v780 = vpack.c.bf16 %v777, %v776
        %v781 = vpack.c.bf16 %v779, %v778
        %v782 = vld [vmem:[#allocation8] sm:$0xf]
        %v783 = vld [vmem:[#allocation8 + $0x4] sm:$0xf]
        %v784 = vld [vmem:[#allocation8 + $0x8] sm:$0xf]
        %v785 = vld [vmem:[#allocation8 + $0xc] sm:$0xf]
        %v786 = vld [vmem:[#allocation8 + $0x10] sm:$0xf]
        %v787 = vld [vmem:[#allocation8 + $0x14] sm:$0xf]
        %v788 = vld [vmem:[#allocation8 + $0x18] sm:$0xf]
        %v789 = vld [vmem:[#allocation8 + $0x1c] sm:$0xf]
        %v790 = vld [vmem:[#allocation8 + $0x20] sm:$0xf]
        %v791 = vld [vmem:[#allocation8 + $0x24] sm:$0xf]
        %v792 = vld [vmem:[#allocation8 + $0x28] sm:$0xf]
        %v793 = vld [vmem:[#allocation8 + $0x2c] sm:$0xf]
        %v794 = vld [vmem:[#allocation8 + $0x30] sm:$0xf]
        %v795 = vld [vmem:[#allocation8 + $0x34] sm:$0xf]
        %v796 = vld [vmem:[#allocation8 + $0x38] sm:$0xf]
        %v797 = vld [vmem:[#allocation8 + $0x3c] sm:$0xf]
        %v798 = vld [vmem:[%s7] sm:$0x1]
        %v799 = vlaneseq
        %v800 = vshrl.u32 %v799, 7
        %v801 = vsub.s32 0, %v800
        %v802 = vrot.slane %v798, %v801
        %v819 = vunpack.c.l.b16 %v782
        %v820 = vunpack.c.l.b16 %v783
        %v821 = vunpack.c.l.b16 %v784
        %v822 = vunpack.c.l.b16 %v785
        %v823 = vunpack.c.l.b16 %v786
        %v824 = vunpack.c.l.b16 %v787
        %v825 = vunpack.c.l.b16 %v788
        %v826 = vunpack.c.l.b16 %v789
        %v827 = vunpack.c.l.b16 %v790
        %v828 = vunpack.c.l.b16 %v791
        %v829 = vunpack.c.l.b16 %v792
        %v830 = vunpack.c.l.b16 %v793
        %v831 = vunpack.c.l.b16 %v794
        %v832 = vunpack.c.l.b16 %v795
        %v833 = vunpack.c.l.b16 %v796
        %v834 = vunpack.c.l.b16 %v797
        %v835 = vpack.c.b16 %v820, %v819
        %v836 = vpack.c.b16 %v822, %v821
        %v837 = vpack.c.b16 %v824, %v823
        %v838 = vpack.c.b16 %v826, %v825
        %v839 = vpack.c.b16 %v828, %v827
        %v840 = vpack.c.b16 %v830, %v829
        %v841 = vpack.c.b16 %v832, %v831
        %v842 = vpack.c.b16 %v834, %v833
        %851 = vmatprep.subr.bf16.mxu0 0
        %852 = vmatpush1.bf16.msra.mxu0 %v842
        %853 = vmatprep.subr.bf16.mxu0 0
        %854 = vmatpush1.bf16.msra.mxu0 %v841
        %855 = vmatprep.subr.bf16.mxu0 0
        %856 = vmatpush1.bf16.msra.mxu0 %v840
        %857 = vmatprep.subr.bf16.mxu0 0
        %858 = vmatpush1.bf16.msra.mxu0 %v839
        %859 = vmatprep.subr.bf16.mxu0 0
        %860 = vmatpush1.bf16.msra.mxu0 %v838
        %861 = vmatprep.subr.bf16.mxu0 0
        %862 = vmatpush1.bf16.msra.mxu0 %v837
        %863 = vmatprep.subr.bf16.mxu0 0
        %864 = vmatpush1.bf16.msra.mxu0 %v836
        %865 = vmatprep.subr.bf16.mxu0 0
        %866 = vmatpush1.bf16.msra.mxu0 %v835
        %867 = vmatprep.subr.bf16.mxu0 0
        %868 = vmatpush2.bf16.msra.mxu0 0
        %869 = vmatprep.subr.bf16.mxu0 0
        %870 = vmatpush2.bf16.msra.mxu0 0
        %871 = vmatprep.subr.bf16.mxu0 0
        %872 = vmatpush2.bf16.msra.mxu0 0
        %873 = vmatprep.subr.bf16.mxu0 0
        %874 = vmatpush2.bf16.msra.mxu0 0
        %875 = vmatprep.subr.bf16.mxu0 0
        %876 = vmatpush2.bf16.msra.mxu0 0
        %877 = vmatprep.subr.bf16.mxu0 0
        %878 = vmatpush2.bf16.msra.mxu0 0
        %879 = vmatprep.subr.bf16.mxu0 0
        %880 = vmatpush2.bf16.msra.mxu0 0
        %881 = vmatprep.subr.bf16.mxu0 0
        %882 = vmatpush2.bf16.msra.mxu0 0
        %883 = vmatprep.mubr.bf16.mxu0 0
        %884 = vmatmul.mubr.bf16.gmra.mxu0 %v780
        %v885 = vpop.f32.mrf.mxu0
        %v886 = vadd.f32 %v802, %v885
        %v887 = vpop.f32.mrf.mxu0
        %v888 = vpop.f32.mrf.mxu0
        %v889 = vadd.f32 %v802, %v888
        %v890 = vpop.f32.mrf.mxu0
        %891 = vmatprep.mubr.bf16.mxu0 0
        %892 = vmatmul.mubr.bf16.gmra.mxu0 %v781
        %v893 = vpop.f32.mrf.mxu0
        %v894 = vadd.f32 %v802, %v893
        %v895 = vpop.f32.mrf.mxu0
        %v896 = vpop.f32.mrf.mxu0
        %v897 = vadd.f32 %v802, %v896
        %v898 = vpop.f32.mrf.mxu0
        %899 = vdwg.mxu0
        %v900 = vld [vmem:[#allocation10] sm:$0xf]
        %v901 = vld [vmem:[#allocation10 + $0x4] sm:$0xf]
        %v902 = vld [vmem:[#allocation10 + $0x8] sm:$0xf]
        %v903 = vld [vmem:[#allocation10 + $0xc] sm:$0xf]
        %v904 = vld [vmem:[#allocation10 + $0x10] sm:$0xf]
        %v905 = vld [vmem:[#allocation10 + $0x14] sm:$0xf]
        %v906 = vld [vmem:[#allocation10 + $0x18] sm:$0xf]
        %v907 = vld [vmem:[#allocation10 + $0x1c] sm:$0xf]
        %v908 = vld [vmem:[#allocation10 + $0x20] sm:$0xf]
        %v909 = vld [vmem:[#allocation10 + $0x24] sm:$0xf]
        %v910 = vld [vmem:[#allocation10 + $0x28] sm:$0xf]
        %v911 = vld [vmem:[#allocation10 + $0x2c] sm:$0xf]
        %v912 = vld [vmem:[#allocation10 + $0x30] sm:$0xf]
        %v913 = vld [vmem:[#allocation10 + $0x34] sm:$0xf]
        %v914 = vld [vmem:[#allocation10 + $0x38] sm:$0xf]
        %v915 = vld [vmem:[#allocation10 + $0x3c] sm:$0xf]
        %v916 = vld [vmem:[%s8] sm:$0x1]
        %v917 = vlaneseq
        %v918 = vshrl.u32 %v917, 7
        %v919 = vsub.s32 0, %v918
        %v920 = vrot.slane %v916, %v919
        %v937 = vunpack.c.l.b16 %v900
        %v938 = vunpack.c.l.b16 %v901
        %v939 = vunpack.c.l.b16 %v902
        %v940 = vunpack.c.l.b16 %v903
        %v941 = vunpack.c.l.b16 %v904
        %v942 = vunpack.c.l.b16 %v905
        %v943 = vunpack.c.l.b16 %v906
        %v944 = vunpack.c.l.b16 %v907
        %v945 = vunpack.c.l.b16 %v908
        %v946 = vunpack.c.l.b16 %v909
        %v947 = vunpack.c.l.b16 %v910
        %v948 = vunpack.c.l.b16 %v911
        %v949 = vunpack.c.l.b16 %v912
        %v950 = vunpack.c.l.b16 %v913
        %v951 = vunpack.c.l.b16 %v914
        %v952 = vunpack.c.l.b16 %v915
        %v953 = vpack.c.b16 %v938, %v937
        %v954 = vpack.c.b16 %v940, %v939
        %v955 = vpack.c.b16 %v942, %v941
        %v956 = vpack.c.b16 %v944, %v943
        %v957 = vpack.c.b16 %v946, %v945
        %v958 = vpack.c.b16 %v948, %v947
        %v959 = vpack.c.b16 %v950, %v949
        %v960 = vpack.c.b16 %v952, %v951
        %969 = vmatprep.subr.bf16.mxu0 0
        %970 = vmatpush1.bf16.msra.mxu0 %v960
        %971 = vmatprep.subr.bf16.mxu0 0
        %972 = vmatpush1.bf16.msra.mxu0 %v959
        %973 = vmatprep.subr.bf16.mxu0 0
        %974 = vmatpush1.bf16.msra.mxu0 %v958
        %975 = vmatprep.subr.bf16.mxu0 0
        %976 = vmatpush1.bf16.msra.mxu0 %v957
        %977 = vmatprep.subr.bf16.mxu0 0
        %978 = vmatpush1.bf16.msra.mxu0 %v956
        %979 = vmatprep.subr.bf16.mxu0 0
        %980 = vmatpush1.bf16.msra.mxu0 %v955
        %981 = vmatprep.subr.bf16.mxu0 0
        %982 = vmatpush1.bf16.msra.mxu0 %v954
        %983 = vmatprep.subr.bf16.mxu0 0
        %984 = vmatpush1.bf16.msra.mxu0 %v953
        %985 = vmatprep.subr.bf16.mxu0 0
        %986 = vmatpush2.bf16.msra.mxu0 0
        %987 = vmatprep.subr.bf16.mxu0 0
        %988 = vmatpush2.bf16.msra.mxu0 0
        %989 = vmatprep.subr.bf16.mxu0 0
        %990 = vmatpush2.bf16.msra.mxu0 0
        %991 = vmatprep.subr.bf16.mxu0 0
        %992 = vmatpush2.bf16.msra.mxu0 0
        %993 = vmatprep.subr.bf16.mxu0 0
        %994 = vmatpush2.bf16.msra.mxu0 0
        %995 = vmatprep.subr.bf16.mxu0 0
        %996 = vmatpush2.bf16.msra.mxu0 0
        %997 = vmatprep.subr.bf16.mxu0 0
        %998 = vmatpush2.bf16.msra.mxu0 0
        %999 = vmatprep.subr.bf16.mxu0 0
        %1000 = vmatpush2.bf16.msra.mxu0 0
        %1001 = vmatprep.mubr.bf16.mxu0 0
        %1002 = vmatmul.mubr.bf16.gmra.mxu0 %v780
        %v1003 = vpop.f32.mrf.mxu0
        %v1004 = vadd.f32 %v920, %v1003
        %v1005 = vpop.f32.mrf.mxu0
        %v1006 = vpop.f32.mrf.mxu0
        %v1007 = vadd.f32 %v920, %v1006
        %v1008 = vpop.f32.mrf.mxu0
        %1009 = vmatprep.mubr.bf16.mxu0 0
        %1010 = vmatmul.mubr.bf16.gmra.mxu0 %v781
        %v1011 = vpop.f32.mrf.mxu0
        %v1012 = vadd.f32 %v920, %v1011
        %v1013 = vpop.f32.mrf.mxu0
        %v1014 = vpop.f32.mrf.mxu0
        %v1015 = vadd.f32 %v920, %v1014
        %v1016 = vpop.f32.mrf.mxu0
        %1017 = vdwg.mxu0
        %v1018 = vld [vmem:[#allocation11] sm:$0xf]
        %v1019 = vld [vmem:[#allocation11 + $0x4] sm:$0xf]
        %v1020 = vld [vmem:[#allocation11 + $0x8] sm:$0xf]
        %v1021 = vld [vmem:[#allocation11 + $0xc] sm:$0xf]
        %v1022 = vld [vmem:[#allocation11 + $0x10] sm:$0xf]
        %v1023 = vld [vmem:[#allocation11 + $0x14] sm:$0xf]
        %v1024 = vld [vmem:[#allocation11 + $0x18] sm:$0xf]
        %v1025 = vld [vmem:[#allocation11 + $0x1c] sm:$0xf]
        %v1026 = vld [vmem:[#allocation11 + $0x20] sm:$0xf]
        %v1027 = vld [vmem:[#allocation11 + $0x24] sm:$0xf]
        %v1028 = vld [vmem:[#allocation11 + $0x28] sm:$0xf]
        %v1029 = vld [vmem:[#allocation11 + $0x2c] sm:$0xf]
        %v1030 = vld [vmem:[#allocation11 + $0x30] sm:$0xf]
        %v1031 = vld [vmem:[#allocation11 + $0x34] sm:$0xf]
        %v1032 = vld [vmem:[#allocation11 + $0x38] sm:$0xf]
        %v1033 = vld [vmem:[#allocation11 + $0x3c] sm:$0xf]
        %v1034 = vld [vmem:[%s9] sm:$0x1]
        %v1035 = vlaneseq
        %v1036 = vshrl.u32 %v1035, 7
        %v1037 = vsub.s32 0, %v1036
        %v1038 = vrot.slane %v1034, %v1037
        %v1055 = vunpack.c.l.b16 %v1018
        %v1056 = vunpack.c.l.b16 %v1019
        %v1057 = vunpack.c.l.b16 %v1020
        %v1058 = vunpack.c.l.b16 %v1021
        %v1059 = vunpack.c.l.b16 %v1022
        %v1060 = vunpack.c.l.b16 %v1023
        %v1061 = vunpack.c.l.b16 %v1024
        %v1062 = vunpack.c.l.b16 %v1025
        %v1063 = vunpack.c.l.b16 %v1026
        %v1064 = vunpack.c.l.b16 %v1027
        %v1065 = vunpack.c.l.b16 %v1028
        %v1066 = vunpack.c.l.b16 %v1029
        %v1067 = vunpack.c.l.b16 %v1030
        %v1068 = vunpack.c.l.b16 %v1031
        %v1069 = vunpack.c.l.b16 %v1032
        %v1070 = vunpack.c.l.b16 %v1033
        %v1071 = vpack.c.b16 %v1056, %v1055
        %v1072 = vpack.c.b16 %v1058, %v1057
        %v1073 = vpack.c.b16 %v1060, %v1059
        %v1074 = vpack.c.b16 %v1062, %v1061
        %v1075 = vpack.c.b16 %v1064, %v1063
        %v1076 = vpack.c.b16 %v1066, %v1065
        %v1077 = vpack.c.b16 %v1068, %v1067
        %v1078 = vpack.c.b16 %v1070, %v1069
        %1087 = vmatprep.subr.bf16.mxu0 0
        %1088 = vmatpush1.bf16.msra.mxu0 %v1078
        %1089 = vmatprep.subr.bf16.mxu0 0
        %1090 = vmatpush1.bf16.msra.mxu0 %v1077
        %1091 = vmatprep.subr.bf16.mxu0 0
        %1092 = vmatpush1.bf16.msra.mxu0 %v1076
        %1093 = vmatprep.subr.bf16.mxu0 0
        %1094 = vmatpush1.bf16.msra.mxu0 %v1075
        %1095 = vmatprep.subr.bf16.mxu0 0
        %1096 = vmatpush1.bf16.msra.mxu0 %v1074
        %1097 = vmatprep.subr.bf16.mxu0 0
        %1098 = vmatpush1.bf16.msra.mxu0 %v1073
        %1099 = vmatprep.subr.bf16.mxu0 0
        %1100 = vmatpush1.bf16.msra.mxu0 %v1072
        %1101 = vmatprep.subr.bf16.mxu0 0
        %1102 = vmatpush1.bf16.msra.mxu0 %v1071
        %1103 = vmatprep.subr.bf16.mxu0 0
        %1104 = vmatpush2.bf16.msra.mxu0 0
        %1105 = vmatprep.subr.bf16.mxu0 0
        %1106 = vmatpush2.bf16.msra.mxu0 0
        %1107 = vmatprep.subr.bf16.mxu0 0
        %1108 = vmatpush2.bf16.msra.mxu0 0
        %1109 = vmatprep.subr.bf16.mxu0 0
        %1110 = vmatpush2.bf16.msra.mxu0 0
        %1111 = vmatprep.subr.bf16.mxu0 0
        %1112 = vmatpush2.bf16.msra.mxu0 0
        %1113 = vmatprep.subr.bf16.mxu0 0
        %1114 = vmatpush2.bf16.msra.mxu0 0
        %1115 = vmatprep.subr.bf16.mxu0 0
        %1116 = vmatpush2.bf16.msra.mxu0 0
        %1117 = vmatprep.subr.bf16.mxu0 0
        %1118 = vmatpush2.bf16.msra.mxu0 0
        %1119 = vmatprep.mubr.bf16.mxu0 0
        %1120 = vmatmul.mubr.bf16.gmra.mxu0 %v780
        %v1121 = vpop.f32.mrf.mxu0
        %v1122 = vadd.f32 %v1038, %v1121
        %v1123 = vpop.f32.mrf.mxu0
        %v1124 = vpop.f32.mrf.mxu0
        %v1125 = vadd.f32 %v1038, %v1124
        %v1126 = vpop.f32.mrf.mxu0
        %1127 = vmatprep.mubr.bf16.mxu0 0
        %1128 = vmatmul.mubr.bf16.gmra.mxu0 %v781
        %v1129 = vpop.f32.mrf.mxu0
        %v1130 = vadd.f32 %v1038, %v1129
        %v1131 = vpop.f32.mrf.mxu0
        %v1132 = vpop.f32.mrf.mxu0
        %v1133 = vadd.f32 %v1038, %v1132
        %v1134 = vpop.f32.mrf.mxu0
        %1135 = vdwg.mxu0
        %v1136 = vpack.c.bf16 %v889, %v886
        %v1137 = vpack.c.bf16 %v897, %v894
        %v1138 = vpack.c.bf16 %v1007, %v1004
        %v1139 = vpack.c.bf16 %v1015, %v1012
        %v1140 = vpack.c.bf16 %v1125, %v1122
        %v1141 = vpack.c.bf16 %v1133, %v1130
        %vm1142 = vcmask 261120
        %v1144 = vsel %vm1142, %v1136, 0
        %v1147 = vsel %vm1142, %v1137, 0
        %v1150 = vsel %vm1142, %v1138, 0
        %v1153 = vsel %vm1142, %v1139, 0
        %1155 = vmatprep.subr.bf16.mxu0 0
        %1156 = vmatpush1.bf16.xpose.msra.mxu0 0
        %1157 = vmatprep.subr.bf16.mxu0 0
        %1158 = vmatpush1.bf16.xpose.msra.mxu0 0
        %1159 = vmatprep.subr.bf16.mxu0 0
        %1160 = vmatpush1.bf16.xpose.msra.mxu0 0
        %1161 = vmatprep.subr.bf16.mxu0 0
        %1162 = vmatpush1.bf16.xpose.msra.mxu0 0
        %1163 = vmatprep.subr.bf16.mxu0 0
        %1164 = vmatpush1.bf16.xpose.msra.mxu0 0
        %1165 = vmatprep.subr.bf16.mxu0 0
        %1166 = vmatpush1.bf16.xpose.msra.mxu0 0
        %1167 = vmatprep.subr.bf16.mxu0 0
        %1168 = vmatpush1.bf16.xpose.msra.mxu0 %v1153
        %1169 = vmatprep.subr.bf16.mxu0 0
        %1170 = vmatpush1.bf16.xpose.msra.mxu0 %v1150
        %1171 = vmatprep.subr.bf16.mxu0 0
        %1172 = vmatpush2.bf16.xpose.msra.mxu0 0
        %1173 = vmatprep.subr.bf16.mxu0 0
        %1174 = vmatpush2.bf16.xpose.msra.mxu0 0
        %1175 = vmatprep.subr.bf16.mxu0 0
        %1176 = vmatpush2.bf16.xpose.msra.mxu0 0
        %1177 = vmatprep.subr.bf16.mxu0 0
        %1178 = vmatpush2.bf16.xpose.msra.mxu0 0
        %1179 = vmatprep.subr.bf16.mxu0 0
        %1180 = vmatpush2.bf16.xpose.msra.mxu0 0
        %1181 = vmatprep.subr.bf16.mxu0 0
        %1182 = vmatpush2.bf16.xpose.msra.mxu0 0
        %1183 = vmatprep.subr.bf16.mxu0 0
        %1184 = vmatpush2.bf16.xpose.msra.mxu0 0
        %1185 = vmatprep.subr.bf16.mxu0 0
        %1186 = vmatpush2.bf16.xpose.msra.mxu0 0
        %1187 = vmatprep.mubr.bf16.mxu0 0
        %1188 = vmatmul.mubr.bf16.gmra.mxu0 %v1144
        %v1189 = vpop.f32.mrf.mxu0
        %v1190 = vadd.f32 0.0, %v1189
        %v1191 = vpop.f32.mrf.mxu0
        %v1192 = vpop.f32.mrf.mxu0
        %v1193 = vadd.f32 0.0, %v1192
        %v1194 = vpop.f32.mrf.mxu0
        %1195 = vmatprep.mubr.bf16.mxu0 0
        %1196 = vmatmul.mubr.bf16.gmra.mxu0 %v1147
        %v1197 = vpop.f32.mrf.mxu0
        %v1198 = vadd.f32 0.0, %v1197
        %v1199 = vpop.f32.mrf.mxu0
        %v1200 = vpop.f32.mrf.mxu0
        %v1201 = vadd.f32 0.0, %v1200
        %v1202 = vpop.f32.mrf.mxu0
        %1203 = vdwg.mxu0
        %v1204 = vmul.f32 %v1190, 0.17677669
        %v1205 = vmul.f32 %v1193, 0.17677669
        %v1206 = vmul.f32 %v1198, 0.17677669
        %v1207 = vmul.f32 %v1201, 0.17677669
        %v1208 = vadd.f32 %v1204, %v713
        %v1209 = vadd.f32 %v1205, %v714
        %v1210 = vadd.f32 %v1206, %v715
        %v1211 = vadd.f32 %v1207, %v716
        %v1212 = vsel %vm1142, %v1208, -inf
        %1213 = vmax.xlane.f32.xlu0 %v1212
        %v1214 = vpop.xlane.xlu0 %1213
        %v1215 = vsel %vm1142, %v1209, -inf
        %1216 = vmax.xlane.f32.xlu0 %v1215
        %v1217 = vpop.xlane.xlu0 %1216
        %v1218 = vsel %vm1142, %v1210, -inf
        %1219 = vmax.xlane.f32.xlu0 %v1218
        %v1220 = vpop.xlane.xlu0 %1219
        %v1221 = vsel %vm1142, %v1211, -inf
        %1222 = vmax.xlane.f32.xlu0 %v1221
        %v1223 = vpop.xlane.xlu0 %1222
        %v1224 = vsub.f32 %v1208, %v1214
        %v1225 = vsub.f32 %v1209, %v1217
        %v1226 = vsub.f32 %v1210, %v1220
        %v1227 = vsub.f32 %v1211, %v1223
        %v1228 = vmul.f32 %v1224, 1.442695
        %v1229 = vpow.pop %v1228
        %v1230 = vmul.f32 %v1225, 1.442695
        %v1231 = vpow.pop %v1230
        %v1232 = vmul.f32 %v1226, 1.442695
        %v1233 = vpow.pop %v1232
        %v1234 = vmul.f32 %v1227, 1.442695
        %v1235 = vpow.pop %v1234
        %v1236 = vsel %vm1142, %v1229, 0.0
        %1237 = vadd.xlane.f32.xlu0 %v1236
        %v1238 = vpop.xlane.xlu0 %1237
        %v1239 = vsel %vm1142, %v1231, 0.0
        %1240 = vadd.xlane.f32.xlu0 %v1239
        %v1241 = vpop.xlane.xlu0 %1240
        %v1242 = vsel %vm1142, %v1233, 0.0
        %1243 = vadd.xlane.f32.xlu0 %v1242
        %v1244 = vpop.xlane.xlu0 %1243
        %v1245 = vsel %vm1142, %v1235, 0.0
        %1246 = vadd.xlane.f32.xlu0 %v1245
        %v1247 = vpop.xlane.xlu0 %1246
        %v1248 = vrcp.pop %v1238
        %v1249 = vrcp.pop %v1241
        %v1250 = vrcp.pop %v1244
        %v1251 = vrcp.pop %v1247
        %v1252 = vmul.f32 %v1229, %v1248
        %v1253 = vmul.f32 %v1231, %v1249
        %v1254 = vmul.f32 %v1233, %v1250
        %v1255 = vmul.f32 %v1235, %v1251
        %v1256 = vpack.c.bf16 %v1253, %v1252
        %v1257 = vpack.c.bf16 %v1255, %v1254
        %v1259 = vsel %vm1142, %v1256, 0
        %v1262 = vsel %vm1142, %v1257, 0
        %1264 = vmatprep.subr.bf16.mxu0 0
        %1265 = vmatpush1.bf16.msra.mxu0 0
        %1266 = vmatprep.subr.bf16.mxu0 0
        %1267 = vmatpush1.bf16.msra.mxu0 0
        %1268 = vmatprep.subr.bf16.mxu0 0
        %1269 = vmatpush1.bf16.msra.mxu0 0
        %1270 = vmatprep.subr.bf16.mxu0 0
        %1271 = vmatpush1.bf16.msra.mxu0 0
        %1272 = vmatprep.subr.bf16.mxu0 0
        %1273 = vmatpush1.bf16.msra.mxu0 0
        %1274 = vmatprep.subr.bf16.mxu0 0
        %1275 = vmatpush1.bf16.msra.mxu0 0
        %1276 = vmatprep.subr.bf16.mxu0 0
        %1277 = vmatpush1.bf16.msra.mxu0 %v1141
        %1278 = vmatprep.subr.bf16.mxu0 0
        %1279 = vmatpush1.bf16.msra.mxu0 %v1140
        %1280 = vmatprep.subr.bf16.mxu0 0
        %1281 = vmatpush2.bf16.msra.mxu0 0
        %1282 = vmatprep.subr.bf16.mxu0 0
        %1283 = vmatpush2.bf16.msra.mxu0 0
        %1284 = vmatprep.subr.bf16.mxu0 0
        %1285 = vmatpush2.bf16.msra.mxu0 0
        %1286 = vmatprep.subr.bf16.mxu0 0
        %1287 = vmatpush2.bf16.msra.mxu0 0
        %1288 = vmatprep.subr.bf16.mxu0 0
        %1289 = vmatpush2.bf16.msra.mxu0 0
        %1290 = vmatprep.subr.bf16.mxu0 0
        %1291 = vmatpush2.bf16.msra.mxu0 0
        %1292 = vmatprep.subr.bf16.mxu0 0
        %1293 = vmatpush2.bf16.msra.mxu0 0
        %1294 = vmatprep.subr.bf16.mxu0 0
        %1295 = vmatpush2.bf16.msra.mxu0 0
        %1296 = vmatprep.mubr.bf16.mxu0 0
        %1297 = vmatmul.mubr.bf16.gmra.mxu0 %v1259
        %v1298 = vpop.f32.mrf.mxu0
        %v1299 = vadd.f32 0.0, %v1298
        %v1300 = vpop.f32.mrf.mxu0
        %v1301 = vpop.f32.mrf.mxu0
        %v1302 = vadd.f32 0.0, %v1301
        %v1303 = vpop.f32.mrf.mxu0
        %1304 = vmatprep.mubr.bf16.mxu0 0
        %1305 = vmatmul.mubr.bf16.gmra.mxu0 %v1262
        %v1306 = vpop.f32.mrf.mxu0
        %v1307 = vadd.f32 0.0, %v1306
        %v1308 = vpop.f32.mrf.mxu0
        %v1309 = vpop.f32.mrf.mxu0
        %v1310 = vadd.f32 0.0, %v1309
        %v1311 = vpop.f32.mrf.mxu0
        %1312 = vdwg.mxu0
        %v1313 = vpack.c.bf16 %v1302, %v1299
        %v1314 = vpack.c.bf16 %v1310, %v1307
        %v1315 = vld [vmem:[#allocation13] sm:$0xf]
        %v1316 = vld [vmem:[#allocation13 + $0x4] sm:$0xf]
        %v1317 = vld [vmem:[#allocation13 + $0x8] sm:$0xf]
        %v1318 = vld [vmem:[#allocation13 + $0xc] sm:$0xf]
        %1321 = vrot.lane.b32.xlu0 %v1136, 96
        %v1322 = vpop.permute.xlu0 %1321
        %1323 = vrot.lane.b32.xlu0 %v1137, 96
        %v1324 = vpop.permute.xlu0 %1323
        %1327 = vrot.lane.b32.xlu0 %v1138, 96
        %v1328 = vpop.permute.xlu0 %1327
        %1329 = vrot.lane.b32.xlu0 %v1139, 96
        %v1330 = vpop.permute.xlu0 %1329
        %v1332 = vsel %vm1142, %v1322, 0
        %v1335 = vsel %vm1142, %v1324, 0
        %v1338 = vsel %vm1142, %v1328, 0
        %v1341 = vsel %vm1142, %v1330, 0
        %1343 = vmatprep.subr.bf16.mxu0 0
        %1344 = vmatpush1.bf16.xpose.msra.mxu0 0
        %1345 = vmatprep.subr.bf16.mxu0 0
        %1346 = vmatpush1.bf16.xpose.msra.mxu0 0
        %1347 = vmatprep.subr.bf16.mxu0 0
        %1348 = vmatpush1.bf16.xpose.msra.mxu0 0
        %1349 = vmatprep.subr.bf16.mxu0 0
        %1350 = vmatpush1.bf16.xpose.msra.mxu0 0
        %1351 = vmatprep.subr.bf16.mxu0 0
        %1352 = vmatpush1.bf16.xpose.msra.mxu0 0
        %1353 = vmatprep.subr.bf16.mxu0 0
        %1354 = vmatpush1.bf16.xpose.msra.mxu0 0
        %1355 = vmatprep.subr.bf16.mxu0 0
        %1356 = vmatpush1.bf16.xpose.msra.mxu0 %v1341
        %1357 = vmatprep.subr.bf16.mxu0 0
        %1358 = vmatpush1.bf16.xpose.msra.mxu0 %v1338
        %1359 = vmatprep.subr.bf16.mxu0 0
        %1360 = vmatpush2.bf16.xpose.msra.mxu0 0
        %1361 = vmatprep.subr.bf16.mxu0 0
        %1362 = vmatpush2.bf16.xpose.msra.mxu0 0
        %1363 = vmatprep.subr.bf16.mxu0 0
        %1364 = vmatpush2.bf16.xpose.msra.mxu0 0
        %1365 = vmatprep.subr.bf16.mxu0 0
        %1366 = vmatpush2.bf16.xpose.msra.mxu0 0
        %1367 = vmatprep.subr.bf16.mxu0 0
        %1368 = vmatpush2.bf16.xpose.msra.mxu0 0
        %1369 = vmatprep.subr.bf16.mxu0 0
        %1370 = vmatpush2.bf16.xpose.msra.mxu0 0
        %1371 = vmatprep.subr.bf16.mxu0 0
        %1372 = vmatpush2.bf16.xpose.msra.mxu0 0
        %1373 = vmatprep.subr.bf16.mxu0 0
        %1374 = vmatpush2.bf16.xpose.msra.mxu0 0
        %1375 = vmatprep.mubr.bf16.mxu0 0
        %1376 = vmatmul.mubr.bf16.gmra.mxu0 %v1332
        %v1377 = vpop.f32.mrf.mxu0
        %v1378 = vadd.f32 0.0, %v1377
        %v1379 = vpop.f32.mrf.mxu0
        %v1380 = vpop.f32.mrf.mxu0
        %v1381 = vadd.f32 0.0, %v1380
        %v1382 = vpop.f32.mrf.mxu0
        %1383 = vmatprep.mubr.bf16.mxu0 0
        %1384 = vmatmul.mubr.bf16.gmra.mxu0 %v1335
        %v1385 = vpop.f32.mrf.mxu0
        %v1386 = vadd.f32 0.0, %v1385
        %v1387 = vpop.f32.mrf.mxu0
        %v1388 = vpop.f32.mrf.mxu0
        %v1389 = vadd.f32 0.0, %v1388
        %v1390 = vpop.f32.mrf.mxu0
        %1391 = vdwg.mxu0
        %v1392 = vmul.f32 %v1378, 0.17677669
        %v1393 = vmul.f32 %v1381, 0.17677669
        %v1394 = vmul.f32 %v1386, 0.17677669
        %v1395 = vmul.f32 %v1389, 0.17677669
        %v1396 = vadd.f32 %v1392, %v713
        %v1397 = vadd.f32 %v1393, %v714
        %v1398 = vadd.f32 %v1394, %v715
        %v1399 = vadd.f32 %v1395, %v716
        %v1400 = vsel %vm1142, %v1396, -inf
        %1401 = vmax.xlane.f32.xlu0 %v1400
        %v1402 = vpop.xlane.xlu0 %1401
        %v1403 = vsel %vm1142, %v1397, -inf
        %1404 = vmax.xlane.f32.xlu0 %v1403
        %v1405 = vpop.xlane.xlu0 %1404
        %v1406 = vsel %vm1142, %v1398, -inf
        %1407 = vmax.xlane.f32.xlu0 %v1406
        %v1408 = vpop.xlane.xlu0 %1407
        %v1409 = vsel %vm1142, %v1399, -inf
        %1410 = vmax.xlane.f32.xlu0 %v1409
        %v1411 = vpop.xlane.xlu0 %1410
        %v1412 = vsub.f32 %v1396, %v1402
        %v1413 = vsub.f32 %v1397, %v1405
        %v1414 = vsub.f32 %v1398, %v1408
        %v1415 = vsub.f32 %v1399, %v1411
        %v1416 = vmul.f32 %v1412, 1.442695
        %v1417 = vpow.pop %v1416
        %v1418 = vmul.f32 %v1413, 1.442695
        %v1419 = vpow.pop %v1418
        %v1420 = vmul.f32 %v1414, 1.442695
        %v1421 = vpow.pop %v1420
        %v1422 = vmul.f32 %v1415, 1.442695
        %v1423 = vpow.pop %v1422
        %v1424 = vsel %vm1142, %v1417, 0.0
        %1425 = vadd.xlane.f32.xlu0 %v1424
        %v1426 = vpop.xlane.xlu0 %1425
        %v1427 = vsel %vm1142, %v1419, 0.0
        %1428 = vadd.xlane.f32.xlu0 %v1427
        %v1429 = vpop.xlane.xlu0 %1428
        %v1430 = vsel %vm1142, %v1421, 0.0
        %1431 = vadd.xlane.f32.xlu0 %v1430
        %v1432 = vpop.xlane.xlu0 %1431
        %v1433 = vsel %vm1142, %v1423, 0.0
        %1434 = vadd.xlane.f32.xlu0 %v1433
        %v1435 = vpop.xlane.xlu0 %1434
        %v1436 = vrcp.pop %v1426
        %v1437 = vrcp.pop %v1429
        %v1438 = vrcp.pop %v1432
        %v1439 = vrcp.pop %v1435
        %v1440 = vmul.f32 %v1417, %v1436
        %v1441 = vmul.f32 %v1419, %v1437
        %v1442 = vmul.f32 %v1421, %v1438
        %v1443 = vmul.f32 %v1423, %v1439
        %v1444 = vpack.c.bf16 %v1441, %v1440
        %v1445 = vpack.c.bf16 %v1443, %v1442
        %1448 = vrot.lane.b32.xlu0 %v1140, 96
        %v1449 = vpop.permute.xlu0 %1448
        %1450 = vrot.lane.b32.xlu0 %v1141, 96
        %v1451 = vpop.permute.xlu0 %1450
        %v1455 = vsel %vm1142, %v1444, 0
        %v1458 = vsel %vm1142, %v1445, 0
        %1460 = vmatprep.subr.bf16.mxu0 0
        %1461 = vmatpush1.bf16.msra.mxu0 0
        %1462 = vmatprep.subr.bf16.mxu0 0
        %1463 = vmatpush1.bf16.msra.mxu0 0
        %1464 = vmatprep.subr.bf16.mxu0 0
        %1465 = vmatpush1.bf16.msra.mxu0 0
        %1466 = vmatprep.subr.bf16.mxu0 0
        %1467 = vmatpush1.bf16.msra.mxu0 0
        %1468 = vmatprep.subr.bf16.mxu0 0
        %1469 = vmatpush1.bf16.msra.mxu0 0
        %1470 = vmatprep.subr.bf16.mxu0 0
        %1471 = vmatpush1.bf16.msra.mxu0 0
        %1472 = vmatprep.subr.bf16.mxu0 0
        %1473 = vmatpush1.bf16.msra.mxu0 %v1451
        %1474 = vmatprep.subr.bf16.mxu0 0
        %1475 = vmatpush1.bf16.msra.mxu0 %v1449
        %1476 = vmatprep.subr.bf16.mxu0 0
        %1477 = vmatpush2.bf16.msra.mxu0 0
        %1478 = vmatprep.subr.bf16.mxu0 0
        %1479 = vmatpush2.bf16.msra.mxu0 0
        %1480 = vmatprep.subr.bf16.mxu0 0
        %1481 = vmatpush2.bf16.msra.mxu0 0
        %1482 = vmatprep.subr.bf16.mxu0 0
        %1483 = vmatpush2.bf16.msra.mxu0 0
        %1484 = vmatprep.subr.bf16.mxu0 0
        %1485 = vmatpush2.bf16.msra.mxu0 0
        %1486 = vmatprep.subr.bf16.mxu0 0
        %1487 = vmatpush2.bf16.msra.mxu0 0
        %1488 = vmatprep.subr.bf16.mxu0 0
        %1489 = vmatpush2.bf16.msra.mxu0 0
        %1490 = vmatprep.subr.bf16.mxu0 0
        %1491 = vmatpush2.bf16.msra.mxu0 0
        %1492 = vmatprep.mubr.bf16.mxu0 0
        %1493 = vmatmul.mubr.bf16.gmra.mxu0 %v1455
        %v1494 = vpop.f32.mrf.mxu0
        %v1495 = vadd.f32 0.0, %v1494
        %v1496 = vpop.f32.mrf.mxu0
        %v1497 = vpop.f32.mrf.mxu0
        %v1498 = vadd.f32 0.0, %v1497
        %v1499 = vpop.f32.mrf.mxu0
        %1500 = vmatprep.mubr.bf16.mxu0 0
        %1501 = vmatmul.mubr.bf16.gmra.mxu0 %v1458
        %v1502 = vpop.f32.mrf.mxu0
        %v1503 = vadd.f32 0.0, %v1502
        %v1504 = vpop.f32.mrf.mxu0
        %v1505 = vpop.f32.mrf.mxu0
        %v1506 = vadd.f32 0.0, %v1505
        %v1507 = vpop.f32.mrf.mxu0
        %1508 = vdwg.mxu0
        %v1509 = vpack.c.bf16 %v1498, %v1495
        %v1510 = vpack.c.bf16 %v1506, %v1503
        %s1511 = scalar_lea.vmem [#allocation13], 16
        %v1512 = vld [vmem:[%s1511] sm:$0xf]
        %v1513 = vld [vmem:[%s1511 + $0x4] sm:$0xf]
        %v1514 = vld [vmem:[%s1511 + $0x8] sm:$0xf]
        %v1515 = vld [vmem:[%s1511 + $0xc] sm:$0xf]
        %v1520 = vunpack.c.l.b16 %v1512
        %v1521 = vunpack.c.l.b16 %v1513
        %v1522 = vunpack.c.l.b16 %v1514
        %v1523 = vunpack.c.l.b16 %v1515
        %v1524 = vpack.c.b16 %v1521, %v1520
        %v1525 = vpack.c.b16 %v1523, %v1522
        %v1529 = vsel %vm1142, %v1509, 0
        %v1532 = vsel %vm1142, %v1510, 0
        %1534 = vmatprep.subr.bf16.mxu0 0
        %1535 = vmatpush1.bf16.msra.mxu0 0
        %1536 = vmatprep.subr.bf16.mxu0 0
        %1537 = vmatpush1.bf16.msra.mxu0 0
        %1538 = vmatprep.subr.bf16.mxu0 0
        %1539 = vmatpush1.bf16.msra.mxu0 0
        %1540 = vmatprep.subr.bf16.mxu0 0
        %1541 = vmatpush1.bf16.msra.mxu0 0
        %1542 = vmatprep.subr.bf16.mxu0 0
        %1543 = vmatpush1.bf16.msra.mxu0 0
        %1544 = vmatprep.subr.bf16.mxu0 0
        %1545 = vmatpush1.bf16.msra.mxu0 0
        %1546 = vmatprep.subr.bf16.mxu0 0
        %1547 = vmatpush1.bf16.msra.mxu0 %v1525
        %1548 = vmatprep.subr.bf16.mxu0 0
        %1549 = vmatpush1.bf16.msra.mxu0 %v1524
        %1550 = vmatprep.subr.bf16.mxu0 0
        %1551 = vmatpush2.bf16.msra.mxu0 0
        %1552 = vmatprep.subr.bf16.mxu0 0
        %1553 = vmatpush2.bf16.msra.mxu0 0
        %1554 = vmatprep.subr.bf16.mxu0 0
        %1555 = vmatpush2.bf16.msra.mxu0 0
        %1556 = vmatprep.subr.bf16.mxu0 0
        %1557 = vmatpush2.bf16.msra.mxu0 0
        %1558 = vmatprep.subr.bf16.mxu0 0
        %1559 = vmatpush2.bf16.msra.mxu0 0
        %1560 = vmatprep.subr.bf16.mxu0 0
        %1561 = vmatpush2.bf16.msra.mxu0 0
        %1562 = vmatprep.subr.bf16.mxu0 0
        %1563 = vmatpush2.bf16.msra.mxu0 0
        %1564 = vmatprep.subr.bf16.mxu0 0
        %1565 = vmatpush2.bf16.msra.mxu0 0
        %1566 = vmatprep.mubr.bf16.mxu0 0
        %1567 = vmatmul.mubr.bf16.gmra.mxu0 %v1529
        %v1568 = vpop.f32.mrf.mxu0
        %v1569 = vadd.f32 0.0, %v1568
        %v1570 = vpop.f32.mrf.mxu0
        %v1571 = vpop.f32.mrf.mxu0
        %v1572 = vadd.f32 0.0, %v1571
        %v1573 = vpop.f32.mrf.mxu0
        %1574 = vmatprep.mubr.bf16.mxu0 0
        %1575 = vmatmul.mubr.bf16.gmra.mxu0 %v1532
        %v1576 = vpop.f32.mrf.mxu0
        %v1577 = vadd.f32 0.0, %v1576
        %v1578 = vpop.f32.mrf.mxu0
        %v1579 = vpop.f32.mrf.mxu0
        %v1580 = vadd.f32 0.0, %v1579
        %v1581 = vpop.f32.mrf.mxu0
        %1582 = vdwg.mxu0
        %v1587 = vunpack.c.l.b16 %v1315
        %v1588 = vunpack.c.l.b16 %v1316
        %v1589 = vunpack.c.l.b16 %v1317
        %v1590 = vunpack.c.l.b16 %v1318
        %v1591 = vpack.c.b16 %v1588, %v1587
        %v1592 = vpack.c.b16 %v1590, %v1589
        %v1596 = vsel %vm1142, %v1313, 0
        %v1599 = vsel %vm1142, %v1314, 0
        %1601 = vmatprep.subr.bf16.mxu0 0
        %1602 = vmatpush1.bf16.msra.mxu0 0
        %1603 = vmatprep.subr.bf16.mxu0 0
        %1604 = vmatpush1.bf16.msra.mxu0 0
        %1605 = vmatprep.subr.bf16.mxu0 0
        %1606 = vmatpush1.bf16.msra.mxu0 0
        %1607 = vmatprep.subr.bf16.mxu0 0
        %1608 = vmatpush1.bf16.msra.mxu0 0
        %1609 = vmatprep.subr.bf16.mxu0 0
        %1610 = vmatpush1.bf16.msra.mxu0 0
        %1611 = vmatprep.subr.bf16.mxu0 0
        %1612 = vmatpush1.bf16.msra.mxu0 0
        %1613 = vmatprep.subr.bf16.mxu0 0
        %1614 = vmatpush1.bf16.msra.mxu0 %v1592
        %1615 = vmatprep.subr.bf16.mxu0 0
        %1616 = vmatpush1.bf16.msra.mxu0 %v1591
        %1617 = vmatprep.subr.bf16.mxu0 0
        %1618 = vmatpush2.bf16.msra.mxu0 0
        %1619 = vmatprep.subr.bf16.mxu0 0
        %1620 = vmatpush2.bf16.msra.mxu0 0
        %1621 = vmatprep.subr.bf16.mxu0 0
        %1622 = vmatpush2.bf16.msra.mxu0 0
        %1623 = vmatprep.subr.bf16.mxu0 0
        %1624 = vmatpush2.bf16.msra.mxu0 0
        %1625 = vmatprep.subr.bf16.mxu0 0
        %1626 = vmatpush2.bf16.msra.mxu0 0
        %1627 = vmatprep.subr.bf16.mxu0 0
        %1628 = vmatpush2.bf16.msra.mxu0 0
        %1629 = vmatprep.subr.bf16.mxu0 0
        %1630 = vmatpush2.bf16.msra.mxu0 0
        %1631 = vmatprep.subr.bf16.mxu0 0
        %1632 = vmatpush2.bf16.msra.mxu0 0
        %1633 = vmatprep.mubr.bf16.mxu0 0
        %1634 = vmatmul.mubr.bf16.gmra.mxu0 %v1596
        %v1635 = vpop.f32.mrf.mxu0
        %v1636 = vadd.f32 %v1569, %v1635
        %v1637 = vpop.f32.mrf.mxu0
        %v1638 = vpop.f32.mrf.mxu0
        %v1639 = vadd.f32 %v1572, %v1638
        %v1640 = vpop.f32.mrf.mxu0
        %1641 = vmatprep.mubr.bf16.mxu0 0
        %1642 = vmatmul.mubr.bf16.gmra.mxu0 %v1599
        %v1643 = vpop.f32.mrf.mxu0
        %v1644 = vadd.f32 %v1577, %v1643
        %v1645 = vpop.f32.mrf.mxu0
        %v1646 = vpop.f32.mrf.mxu0
        %v1647 = vadd.f32 %v1580, %v1646
        %v1648 = vpop.f32.mrf.mxu0
        %1649 = vdwg.mxu0
        %1650 = vrot.lane.b32.xlu0 %v1136, 64
        %v1651 = vpop.permute.xlu0 %1650
        %1652 = vrot.lane.b32.xlu0 %v1137, 64
        %v1653 = vpop.permute.xlu0 %1652
        %1654 = vrot.lane.b32.xlu0 %v1138, 64
        %v1655 = vpop.permute.xlu0 %1654
        %1656 = vrot.lane.b32.xlu0 %v1139, 64
        %v1657 = vpop.permute.xlu0 %1656
        %v1659 = vsel %vm1142, %v1651, 0
        %v1662 = vsel %vm1142, %v1653, 0
        %v1665 = vsel %vm1142, %v1655, 0
        %v1668 = vsel %vm1142, %v1657, 0
        %1670 = vmatprep.subr.bf16.mxu0 0
        %1671 = vmatpush1.bf16.xpose.msra.mxu0 0
        %1672 = vmatprep.subr.bf16.mxu0 0
        %1673 = vmatpush1.bf16.xpose.msra.mxu0 0
        %1674 = vmatprep.subr.bf16.mxu0 0
        %1675 = vmatpush1.bf16.xpose.msra.mxu0 0
        %1676 = vmatprep.subr.bf16.mxu0 0
        %1677 = vmatpush1.bf16.xpose.msra.mxu0 0
        %1678 = vmatprep.subr.bf16.mxu0 0
        %1679 = vmatpush1.bf16.xpose.msra.mxu0 0
        %1680 = vmatprep.subr.bf16.mxu0 0
        %1681 = vmatpush1.bf16.xpose.msra.mxu0 0
        %1682 = vmatprep.subr.bf16.mxu0 0
        %1683 = vmatpush1.bf16.xpose.msra.mxu0 %v1668
        %1684 = vmatprep.subr.bf16.mxu0 0
        %1685 = vmatpush1.bf16.xpose.msra.mxu0 %v1665
        %1686 = vmatprep.subr.bf16.mxu0 0
        %1687 = vmatpush2.bf16.xpose.msra.mxu0 0
        %1688 = vmatprep.subr.bf16.mxu0 0
        %1689 = vmatpush2.bf16.xpose.msra.mxu0 0
        %1690 = vmatprep.subr.bf16.mxu0 0
        %1691 = vmatpush2.bf16.xpose.msra.mxu0 0
        %1692 = vmatprep.subr.bf16.mxu0 0
        %1693 = vmatpush2.bf16.xpose.msra.mxu0 0
        %1694 = vmatprep.subr.bf16.mxu0 0
        %1695 = vmatpush2.bf16.xpose.msra.mxu0 0
        %1696 = vmatprep.subr.bf16.mxu0 0
        %1697 = vmatpush2.bf16.xpose.msra.mxu0 0
        %1698 = vmatprep.subr.bf16.mxu0 0
        %1699 = vmatpush2.bf16.xpose.msra.mxu0 0
        %1700 = vmatprep.subr.bf16.mxu0 0
        %1701 = vmatpush2.bf16.xpose.msra.mxu0 0
        %1702 = vmatprep.mubr.bf16.mxu0 0
        %1703 = vmatmul.mubr.bf16.gmra.mxu0 %v1659
        %v1704 = vpop.f32.mrf.mxu0
        %v1705 = vadd.f32 0.0, %v1704
        %v1706 = vpop.f32.mrf.mxu0
        %v1707 = vpop.f32.mrf.mxu0
        %v1708 = vadd.f32 0.0, %v1707
        %v1709 = vpop.f32.mrf.mxu0
        %1710 = vmatprep.mubr.bf16.mxu0 0
        %1711 = vmatmul.mubr.bf16.gmra.mxu0 %v1662
        %v1712 = vpop.f32.mrf.mxu0
        %v1713 = vadd.f32 0.0, %v1712
        %v1714 = vpop.f32.mrf.mxu0
        %v1715 = vpop.f32.mrf.mxu0
        %v1716 = vadd.f32 0.0, %v1715
        %v1717 = vpop.f32.mrf.mxu0
        %1718 = vdwg.mxu0
        %v1719 = vmul.f32 %v1705, 0.17677669
        %v1720 = vmul.f32 %v1708, 0.17677669
        %v1721 = vmul.f32 %v1713, 0.17677669
        %v1722 = vmul.f32 %v1716, 0.17677669
        %v1723 = vadd.f32 %v1719, %v713
        %v1724 = vadd.f32 %v1720, %v714
        %v1725 = vadd.f32 %v1721, %v715
        %v1726 = vadd.f32 %v1722, %v716
        %v1727 = vsel %vm1142, %v1723, -inf
        %1728 = vmax.xlane.f32.xlu0 %v1727
        %v1729 = vpop.xlane.xlu0 %1728
        %v1730 = vsel %vm1142, %v1724, -inf
        %1731 = vmax.xlane.f32.xlu0 %v1730
        %v1732 = vpop.xlane.xlu0 %1731
        %v1733 = vsel %vm1142, %v1725, -inf
        %1734 = vmax.xlane.f32.xlu0 %v1733
        %v1735 = vpop.xlane.xlu0 %1734
        %v1736 = vsel %vm1142, %v1726, -inf
        %1737 = vmax.xlane.f32.xlu0 %v1736
        %v1738 = vpop.xlane.xlu0 %1737
        %v1739 = vsub.f32 %v1723, %v1729
        %v1740 = vsub.f32 %v1724, %v1732
        %v1741 = vsub.f32 %v1725, %v1735
        %v1742 = vsub.f32 %v1726, %v1738
        %v1743 = vmul.f32 %v1739, 1.442695
        %v1744 = vpow.pop %v1743
        %v1745 = vmul.f32 %v1740, 1.442695
        %v1746 = vpow.pop %v1745
        %v1747 = vmul.f32 %v1741, 1.442695
        %v1748 = vpow.pop %v1747
        %v1749 = vmul.f32 %v1742, 1.442695
        %v1750 = vpow.pop %v1749
        %v1751 = vsel %vm1142, %v1744, 0.0
        %1752 = vadd.xlane.f32.xlu0 %v1751
        %v1753 = vpop.xlane.xlu0 %1752
        %v1754 = vsel %vm1142, %v1746, 0.0
        %1755 = vadd.xlane.f32.xlu0 %v1754
        %v1756 = vpop.xlane.xlu0 %1755
        %v1757 = vsel %vm1142, %v1748, 0.0
        %1758 = vadd.xlane.f32.xlu0 %v1757
        %v1759 = vpop.xlane.xlu0 %1758
        %v1760 = vsel %vm1142, %v1750, 0.0
        %1761 = vadd.xlane.f32.xlu0 %v1760
        %v1762 = vpop.xlane.xlu0 %1761
        %v1763 = vrcp.pop %v1753
        %v1764 = vrcp.pop %v1756
        %v1765 = vrcp.pop %v1759
        %v1766 = vrcp.pop %v1762
        %v1767 = vmul.f32 %v1744, %v1763
        %v1768 = vmul.f32 %v1746, %v1764
        %v1769 = vmul.f32 %v1748, %v1765
        %v1770 = vmul.f32 %v1750, %v1766
        %v1771 = vpack.c.bf16 %v1768, %v1767
        %v1772 = vpack.c.bf16 %v1770, %v1769
        %1773 = vrot.lane.b32.xlu0 %v1140, 64
        %v1774 = vpop.permute.xlu0 %1773
        %1775 = vrot.lane.b32.xlu0 %v1141, 64
        %v1776 = vpop.permute.xlu0 %1775
        %v1780 = vsel %vm1142, %v1771, 0
        %v1783 = vsel %vm1142, %v1772, 0
        %1785 = vmatprep.subr.bf16.mxu0 0
        %1786 = vmatpush1.bf16.msra.mxu0 0
        %1787 = vmatprep.subr.bf16.mxu0 0
        %1788 = vmatpush1.bf16.msra.mxu0 0
        %1789 = vmatprep.subr.bf16.mxu0 0
        %1790 = vmatpush1.bf16.msra.mxu0 0
        %1791 = vmatprep.subr.bf16.mxu0 0
        %1792 = vmatpush1.bf16.msra.mxu0 0
        %1793 = vmatprep.subr.bf16.mxu0 0
        %1794 = vmatpush1.bf16.msra.mxu0 0
        %1795 = vmatprep.subr.bf16.mxu0 0
        %1796 = vmatpush1.bf16.msra.mxu0 0
        %1797 = vmatprep.subr.bf16.mxu0 0
        %1798 = vmatpush1.bf16.msra.mxu0 %v1776
        %1799 = vmatprep.subr.bf16.mxu0 0
        %1800 = vmatpush1.bf16.msra.mxu0 %v1774
        %1801 = vmatprep.subr.bf16.mxu0 0
        %1802 = vmatpush2.bf16.msra.mxu0 0
        %1803 = vmatprep.subr.bf16.mxu0 0
        %1804 = vmatpush2.bf16.msra.mxu0 0
        %1805 = vmatprep.subr.bf16.mxu0 0
        %1806 = vmatpush2.bf16.msra.mxu0 0
        %1807 = vmatprep.subr.bf16.mxu0 0
        %1808 = vmatpush2.bf16.msra.mxu0 0
        %1809 = vmatprep.subr.bf16.mxu0 0
        %1810 = vmatpush2.bf16.msra.mxu0 0
        %1811 = vmatprep.subr.bf16.mxu0 0
        %1812 = vmatpush2.bf16.msra.mxu0 0
        %1813 = vmatprep.subr.bf16.mxu0 0
        %1814 = vmatpush2.bf16.msra.mxu0 0
        %1815 = vmatprep.subr.bf16.mxu0 0
        %1816 = vmatpush2.bf16.msra.mxu0 0
        %1817 = vmatprep.mubr.bf16.mxu0 0
        %1818 = vmatmul.mubr.bf16.gmra.mxu0 %v1780
        %v1819 = vpop.f32.mrf.mxu0
        %v1820 = vadd.f32 0.0, %v1819
        %v1821 = vpop.f32.mrf.mxu0
        %v1822 = vpop.f32.mrf.mxu0
        %v1823 = vadd.f32 0.0, %v1822
        %v1824 = vpop.f32.mrf.mxu0
        %1825 = vmatprep.mubr.bf16.mxu0 0
        %1826 = vmatmul.mubr.bf16.gmra.mxu0 %v1783
        %v1827 = vpop.f32.mrf.mxu0
        %v1828 = vadd.f32 0.0, %v1827
        %v1829 = vpop.f32.mrf.mxu0
        %v1830 = vpop.f32.mrf.mxu0
        %v1831 = vadd.f32 0.0, %v1830
        %v1832 = vpop.f32.mrf.mxu0
        %1833 = vdwg.mxu0
        %v1834 = vpack.c.bf16 %v1823, %v1820
        %v1835 = vpack.c.bf16 %v1831, %v1828
        %s1836 = scalar_lea.vmem [#allocation13], 32
        %v1837 = vld [vmem:[%s1836] sm:$0xf]
        %v1838 = vld [vmem:[%s1836 + $0x4] sm:$0xf]
        %v1839 = vld [vmem:[%s1836 + $0x8] sm:$0xf]
        %v1840 = vld [vmem:[%s1836 + $0xc] sm:$0xf]
        %v1845 = vunpack.c.l.b16 %v1837
        %v1846 = vunpack.c.l.b16 %v1838
        %v1847 = vunpack.c.l.b16 %v1839
        %v1848 = vunpack.c.l.b16 %v1840
        %v1849 = vpack.c.b16 %v1846, %v1845
        %v1850 = vpack.c.b16 %v1848, %v1847
        %v1854 = vsel %vm1142, %v1834, 0
        %v1857 = vsel %vm1142, %v1835, 0
        %1859 = vmatprep.subr.bf16.mxu0 0
        %1860 = vmatpush1.bf16.msra.mxu0 0
        %1861 = vmatprep.subr.bf16.mxu0 0
        %1862 = vmatpush1.bf16.msra.mxu0 0
        %1863 = vmatprep.subr.bf16.mxu0 0
        %1864 = vmatpush1.bf16.msra.mxu0 0
        %1865 = vmatprep.subr.bf16.mxu0 0
        %1866 = vmatpush1.bf16.msra.mxu0 0
        %1867 = vmatprep.subr.bf16.mxu0 0
        %1868 = vmatpush1.bf16.msra.mxu0 0
        %1869 = vmatprep.subr.bf16.mxu0 0
        %1870 = vmatpush1.bf16.msra.mxu0 0
        %1871 = vmatprep.subr.bf16.mxu0 0
        %1872 = vmatpush1.bf16.msra.mxu0 %v1850
        %1873 = vmatprep.subr.bf16.mxu0 0
        %1874 = vmatpush1.bf16.msra.mxu0 %v1849
        %1875 = vmatprep.subr.bf16.mxu0 0
        %1876 = vmatpush2.bf16.msra.mxu0 0
        %1877 = vmatprep.subr.bf16.mxu0 0
        %1878 = vmatpush2.bf16.msra.mxu0 0
        %1879 = vmatprep.subr.bf16.mxu0 0
        %1880 = vmatpush2.bf16.msra.mxu0 0
        %1881 = vmatprep.subr.bf16.mxu0 0
        %1882 = vmatpush2.bf16.msra.mxu0 0
        %1883 = vmatprep.subr.bf16.mxu0 0
        %1884 = vmatpush2.bf16.msra.mxu0 0
        %1885 = vmatprep.subr.bf16.mxu0 0
        %1886 = vmatpush2.bf16.msra.mxu0 0
        %1887 = vmatprep.subr.bf16.mxu0 0
        %1888 = vmatpush2.bf16.msra.mxu0 0
        %1889 = vmatprep.subr.bf16.mxu0 0
        %1890 = vmatpush2.bf16.msra.mxu0 0
        %1891 = vmatprep.mubr.bf16.mxu0 0
        %1892 = vmatmul.mubr.bf16.gmra.mxu0 %v1854
        %v1893 = vpop.f32.mrf.mxu0
        %v1894 = vadd.f32 0.0, %v1893
        %v1895 = vpop.f32.mrf.mxu0
        %v1896 = vpop.f32.mrf.mxu0
        %v1897 = vadd.f32 0.0, %v1896
        %v1898 = vpop.f32.mrf.mxu0
        %1899 = vmatprep.mubr.bf16.mxu0 0
        %1900 = vmatmul.mubr.bf16.gmra.mxu0 %v1857
        %v1901 = vpop.f32.mrf.mxu0
        %v1902 = vadd.f32 0.0, %v1901
        %v1903 = vpop.f32.mrf.mxu0
        %v1904 = vpop.f32.mrf.mxu0
        %v1905 = vadd.f32 0.0, %v1904
        %v1906 = vpop.f32.mrf.mxu0
        %1907 = vdwg.mxu0
        %v1908 = vadd.f32 %v1636, %v1894
        %v1909 = vadd.f32 %v1639, %v1897
        %v1910 = vadd.f32 %v1644, %v1902
        %v1911 = vadd.f32 %v1647, %v1905
        %1912 = vrot.lane.b32.xlu0 %v1136, 32
        %v1913 = vpop.permute.xlu0 %1912
        %1914 = vrot.lane.b32.xlu0 %v1137, 32
        %v1915 = vpop.permute.xlu0 %1914
        %1916 = vrot.lane.b32.xlu0 %v1138, 32
        %v1917 = vpop.permute.xlu0 %1916
        %1918 = vrot.lane.b32.xlu0 %v1139, 32
        %v1919 = vpop.permute.xlu0 %1918
        %v1921 = vsel %vm1142, %v1913, 0
        %v1924 = vsel %vm1142, %v1915, 0
        %v1927 = vsel %vm1142, %v1917, 0
        %v1930 = vsel %vm1142, %v1919, 0
        %1932 = vmatprep.subr.bf16.mxu0 0
        %1933 = vmatpush1.bf16.xpose.msra.mxu0 0
        %1934 = vmatprep.subr.bf16.mxu0 0
        %1935 = vmatpush1.bf16.xpose.msra.mxu0 0
        %1936 = vmatprep.subr.bf16.mxu0 0
        %1937 = vmatpush1.bf16.xpose.msra.mxu0 0
        %1938 = vmatprep.subr.bf16.mxu0 0
        %1939 = vmatpush1.bf16.xpose.msra.mxu0 0
        %1940 = vmatprep.subr.bf16.mxu0 0
        %1941 = vmatpush1.bf16.xpose.msra.mxu0 0
        %1942 = vmatprep.subr.bf16.mxu0 0
        %1943 = vmatpush1.bf16.xpose.msra.mxu0 0
        %1944 = vmatprep.subr.bf16.mxu0 0
        %1945 = vmatpush1.bf16.xpose.msra.mxu0 %v1930
        %1946 = vmatprep.subr.bf16.mxu0 0
        %1947 = vmatpush1.bf16.xpose.msra.mxu0 %v1927
        %1948 = vmatprep.subr.bf16.mxu0 0
        %1949 = vmatpush2.bf16.xpose.msra.mxu0 0
        %1950 = vmatprep.subr.bf16.mxu0 0
        %1951 = vmatpush2.bf16.xpose.msra.mxu0 0
        %1952 = vmatprep.subr.bf16.mxu0 0
        %1953 = vmatpush2.bf16.xpose.msra.mxu0 0
        %1954 = vmatprep.subr.bf16.mxu0 0
        %1955 = vmatpush2.bf16.xpose.msra.mxu0 0
        %1956 = vmatprep.subr.bf16.mxu0 0
        %1957 = vmatpush2.bf16.xpose.msra.mxu0 0
        %1958 = vmatprep.subr.bf16.mxu0 0
        %1959 = vmatpush2.bf16.xpose.msra.mxu0 0
        %1960 = vmatprep.subr.bf16.mxu0 0
        %1961 = vmatpush2.bf16.xpose.msra.mxu0 0
        %1962 = vmatprep.subr.bf16.mxu0 0
        %1963 = vmatpush2.bf16.xpose.msra.mxu0 0
        %1964 = vmatprep.mubr.bf16.mxu0 0
        %1965 = vmatmul.mubr.bf16.gmra.mxu0 %v1921
        %v1966 = vpop.f32.mrf.mxu0
        %v1967 = vadd.f32 0.0, %v1966
        %v1968 = vpop.f32.mrf.mxu0
        %v1969 = vpop.f32.mrf.mxu0
        %v1970 = vadd.f32 0.0, %v1969
        %v1971 = vpop.f32.mrf.mxu0
        %1972 = vmatprep.mubr.bf16.mxu0 0
        %1973 = vmatmul.mubr.bf16.gmra.mxu0 %v1924
        %v1974 = vpop.f32.mrf.mxu0
        %v1975 = vadd.f32 0.0, %v1974
        %v1976 = vpop.f32.mrf.mxu0
        %v1977 = vpop.f32.mrf.mxu0
        %v1978 = vadd.f32 0.0, %v1977
        %v1979 = vpop.f32.mrf.mxu0
        %1980 = vdwg.mxu0
        %v1981 = vmul.f32 %v1967, 0.17677669
        %v1982 = vmul.f32 %v1970, 0.17677669
        %v1983 = vmul.f32 %v1975, 0.17677669
        %v1984 = vmul.f32 %v1978, 0.17677669
        %v1985 = vadd.f32 %v1981, %v713
        %v1986 = vadd.f32 %v1982, %v714
        %v1987 = vadd.f32 %v1983, %v715
        %v1988 = vadd.f32 %v1984, %v716
        %v1989 = vsel %vm1142, %v1985, -inf
        %1990 = vmax.xlane.f32.xlu0 %v1989
        %v1991 = vpop.xlane.xlu0 %1990
        %v1992 = vsel %vm1142, %v1986, -inf
        %1993 = vmax.xlane.f32.xlu0 %v1992
        %v1994 = vpop.xlane.xlu0 %1993
        %v1995 = vsel %vm1142, %v1987, -inf
        %1996 = vmax.xlane.f32.xlu0 %v1995
        %v1997 = vpop.xlane.xlu0 %1996
        %v1998 = vsel %vm1142, %v1988, -inf
        %1999 = vmax.xlane.f32.xlu0 %v1998
        %v2000 = vpop.xlane.xlu0 %1999
        %v2001 = vsub.f32 %v1985, %v1991
        %v2002 = vsub.f32 %v1986, %v1994
        %v2003 = vsub.f32 %v1987, %v1997
        %v2004 = vsub.f32 %v1988, %v2000
        %v2005 = vmul.f32 %v2001, 1.442695
        %v2006 = vpow.pop %v2005
        %v2007 = vmul.f32 %v2002, 1.442695
        %v2008 = vpow.pop %v2007
        %v2009 = vmul.f32 %v2003, 1.442695
        %v2010 = vpow.pop %v2009
        %v2011 = vmul.f32 %v2004, 1.442695
        %v2012 = vpow.pop %v2011
        %v2013 = vsel %vm1142, %v2006, 0.0
        %2014 = vadd.xlane.f32.xlu0 %v2013
        %v2015 = vpop.xlane.xlu0 %2014
        %v2016 = vsel %vm1142, %v2008, 0.0
        %2017 = vadd.xlane.f32.xlu0 %v2016
        %v2018 = vpop.xlane.xlu0 %2017
        %v2019 = vsel %vm1142, %v2010, 0.0
        %2020 = vadd.xlane.f32.xlu0 %v2019
        %v2021 = vpop.xlane.xlu0 %2020
        %v2022 = vsel %vm1142, %v2012, 0.0
        %2023 = vadd.xlane.f32.xlu0 %v2022
        %v2024 = vpop.xlane.xlu0 %2023
        %v2025 = vrcp.pop %v2015
        %v2026 = vrcp.pop %v2018
        %v2027 = vrcp.pop %v2021
        %v2028 = vrcp.pop %v2024
        %v2029 = vmul.f32 %v2006, %v2025
        %v2030 = vmul.f32 %v2008, %v2026
        %v2031 = vmul.f32 %v2010, %v2027
        %v2032 = vmul.f32 %v2012, %v2028
        %v2033 = vpack.c.bf16 %v2030, %v2029
        %v2034 = vpack.c.bf16 %v2032, %v2031
        %2035 = vrot.lane.b32.xlu0 %v1140, 32
        %v2036 = vpop.permute.xlu0 %2035
        %2037 = vrot.lane.b32.xlu0 %v1141, 32
        %v2038 = vpop.permute.xlu0 %2037
        %v2042 = vsel %vm1142, %v2033, 0
        %v2045 = vsel %vm1142, %v2034, 0
        %2047 = vmatprep.subr.bf16.mxu0 0
        %2048 = vmatpush1.bf16.msra.mxu0 0
        %2049 = vmatprep.subr.bf16.mxu0 0
        %2050 = vmatpush1.bf16.msra.mxu0 0
        %2051 = vmatprep.subr.bf16.mxu0 0
        %2052 = vmatpush1.bf16.msra.mxu0 0
        %2053 = vmatprep.subr.bf16.mxu0 0
        %2054 = vmatpush1.bf16.msra.mxu0 0
        %2055 = vmatprep.subr.bf16.mxu0 0
        %2056 = vmatpush1.bf16.msra.mxu0 0
        %2057 = vmatprep.subr.bf16.mxu0 0
        %2058 = vmatpush1.bf16.msra.mxu0 0
        %2059 = vmatprep.subr.bf16.mxu0 0
        %2060 = vmatpush1.bf16.msra.mxu0 %v2038
        %2061 = vmatprep.subr.bf16.mxu0 0
        %2062 = vmatpush1.bf16.msra.mxu0 %v2036
        %2063 = vmatprep.subr.bf16.mxu0 0
        %2064 = vmatpush2.bf16.msra.mxu0 0
        %2065 = vmatprep.subr.bf16.mxu0 0
        %2066 = vmatpush2.bf16.msra.mxu0 0
        %2067 = vmatprep.subr.bf16.mxu0 0
        %2068 = vmatpush2.bf16.msra.mxu0 0
        %2069 = vmatprep.subr.bf16.mxu0 0
        %2070 = vmatpush2.bf16.msra.mxu0 0
        %2071 = vmatprep.subr.bf16.mxu0 0
        %2072 = vmatpush2.bf16.msra.mxu0 0
        %2073 = vmatprep.subr.bf16.mxu0 0
        %2074 = vmatpush2.bf16.msra.mxu0 0
        %2075 = vmatprep.subr.bf16.mxu0 0
        %2076 = vmatpush2.bf16.msra.mxu0 0
        %2077 = vmatprep.subr.bf16.mxu0 0
        %2078 = vmatpush2.bf16.msra.mxu0 0
        %2079 = vmatprep.mubr.bf16.mxu0 0
        %2080 = vmatmul.mubr.bf16.gmra.mxu0 %v2042
        %v2081 = vpop.f32.mrf.mxu0
        %v2082 = vadd.f32 0.0, %v2081
        %v2083 = vpop.f32.mrf.mxu0
        %v2084 = vpop.f32.mrf.mxu0
        %v2085 = vadd.f32 0.0, %v2084
        %v2086 = vpop.f32.mrf.mxu0
        %2087 = vmatprep.mubr.bf16.mxu0 0
        %2088 = vmatmul.mubr.bf16.gmra.mxu0 %v2045
        %v2089 = vpop.f32.mrf.mxu0
        %v2090 = vadd.f32 0.0, %v2089
        %v2091 = vpop.f32.mrf.mxu0
        %v2092 = vpop.f32.mrf.mxu0
        %v2093 = vadd.f32 0.0, %v2092
        %v2094 = vpop.f32.mrf.mxu0
        %2095 = vdwg.mxu0
        %v2096 = vpack.c.bf16 %v2085, %v2082
        %v2097 = vpack.c.bf16 %v2093, %v2090
        %s2098 = scalar_lea.vmem [#allocation13], 48
        %v2099 = vld [vmem:[%s2098] sm:$0xf]
        %v2100 = vld [vmem:[%s2098 + $0x4] sm:$0xf]
        %v2101 = vld [vmem:[%s2098 + $0x8] sm:$0xf]
        %v2102 = vld [vmem:[%s2098 + $0xc] sm:$0xf]
        %v2107 = vunpack.c.l.b16 %v2099
        %v2108 = vunpack.c.l.b16 %v2100
        %v2109 = vunpack.c.l.b16 %v2101
        %v2110 = vunpack.c.l.b16 %v2102
        %v2111 = vpack.c.b16 %v2108, %v2107
        %v2112 = vpack.c.b16 %v2110, %v2109
        %v2116 = vsel %vm1142, %v2096, 0
        %v2119 = vsel %vm1142, %v2097, 0
        %2121 = vmatprep.subr.bf16.mxu0 0
        %2122 = vmatpush1.bf16.msra.mxu0 0
        %2123 = vmatprep.subr.bf16.mxu0 0
        %2124 = vmatpush1.bf16.msra.mxu0 0
        %2125 = vmatprep.subr.bf16.mxu0 0
        %2126 = vmatpush1.bf16.msra.mxu0 0
        %2127 = vmatprep.subr.bf16.mxu0 0
        %2128 = vmatpush1.bf16.msra.mxu0 0
        %2129 = vmatprep.subr.bf16.mxu0 0
        %2130 = vmatpush1.bf16.msra.mxu0 0
        %2131 = vmatprep.subr.bf16.mxu0 0
        %2132 = vmatpush1.bf16.msra.mxu0 0
        %2133 = vmatprep.subr.bf16.mxu0 0
        %2134 = vmatpush1.bf16.msra.mxu0 %v2112
        %2135 = vmatprep.subr.bf16.mxu0 0
        %2136 = vmatpush1.bf16.msra.mxu0 %v2111
        %2137 = vmatprep.subr.bf16.mxu0 0
        %2138 = vmatpush2.bf16.msra.mxu0 0
        %2139 = vmatprep.subr.bf16.mxu0 0
        %2140 = vmatpush2.bf16.msra.mxu0 0
        %2141 = vmatprep.subr.bf16.mxu0 0
        %2142 = vmatpush2.bf16.msra.mxu0 0
        %2143 = vmatprep.subr.bf16.mxu0 0
        %2144 = vmatpush2.bf16.msra.mxu0 0
        %2145 = vmatprep.subr.bf16.mxu0 0
        %2146 = vmatpush2.bf16.msra.mxu0 0
        %2147 = vmatprep.subr.bf16.mxu0 0
        %2148 = vmatpush2.bf16.msra.mxu0 0
        %2149 = vmatprep.subr.bf16.mxu0 0
        %2150 = vmatpush2.bf16.msra.mxu0 0
        %2151 = vmatprep.subr.bf16.mxu0 0
        %2152 = vmatpush2.bf16.msra.mxu0 0
        %2153 = vmatprep.mubr.bf16.mxu0 0
        %2154 = vmatmul.mubr.bf16.gmra.mxu0 %v2116
        %v2155 = vpop.f32.mrf.mxu0
        %v2156 = vadd.f32 0.0, %v2155
        %v2157 = vpop.f32.mrf.mxu0
        %v2158 = vpop.f32.mrf.mxu0
        %v2159 = vadd.f32 0.0, %v2158
        %v2160 = vpop.f32.mrf.mxu0
        %2161 = vmatprep.mubr.bf16.mxu0 0
        %2162 = vmatmul.mubr.bf16.gmra.mxu0 %v2119
        %v2163 = vpop.f32.mrf.mxu0
        %v2164 = vadd.f32 0.0, %v2163
        %v2165 = vpop.f32.mrf.mxu0
        %v2166 = vpop.f32.mrf.mxu0
        %v2167 = vadd.f32 0.0, %v2166
        %v2168 = vpop.f32.mrf.mxu0
        %2169 = vdwg.mxu0
        %v2170 = vadd.f32 %v1908, %v2156
        %v2171 = vadd.f32 %v1909, %v2159
        %v2172 = vadd.f32 %v1910, %v2164
        %v2173 = vadd.f32 %v1911, %v2167
        %v2174 = vadd.f32 %v709, %v2170
        %v2175 = vadd.f32 %v710, %v2171
        %v2176 = vadd.f32 %v711, %v2172
        %v2177 = vadd.f32 %v712, %v2173
        %v2178 = vld [vmem:[%s11] sm:$0x1]
        %v2179 = vlaneseq
        %v2180 = vshrl.u32 %v2179, 7
        %v2181 = vsub.s32 0, %v2180
        %v2182 = vrot.slane %v2178, %v2181
        %v2183 = vadd.f32 %v2174, %v2182
        %v2184 = vadd.f32 %v2175, %v2182
        %v2185 = vadd.f32 %v2176, %v2182
        %v2186 = vadd.f32 %v2177, %v2182
        %v2187 = vld [vmem:[%s12] sm:$0x1]
        %v2188 = vld [vmem:[%s13] sm:$0x1]
        %2189 = vadd.xlane.f32.xlu0 %v2183
        %v2190 = vpop.xlane.xlu0 %2189
        %2191 = vadd.xlane.f32.xlu0 %v2184
        %v2192 = vpop.xlane.xlu0 %2191
        %2193 = vadd.xlane.f32.xlu0 %v2185
        %v2194 = vpop.xlane.xlu0 %2193
        %2195 = vadd.xlane.f32.xlu0 %v2186
        %v2196 = vpop.xlane.xlu0 %2195
        %v2197 = vmul.f32 %v2190, %v727
        %v2198 = vmul.f32 %v2192, %v727
        %v2199 = vmul.f32 %v2194, %v727
        %v2200 = vmul.f32 %v2196, %v727
        %v2201 = vsub.f32 %v2183, %v2197
        %v2202 = vsub.f32 %v2184, %v2198
        %v2203 = vsub.f32 %v2185, %v2199
        %v2204 = vsub.f32 %v2186, %v2200
        %v2205 = vmul.f32 %v2201, %v2201
        %v2206 = vmul.f32 %v2202, %v2202
        %v2207 = vmul.f32 %v2203, %v2203
        %v2208 = vmul.f32 %v2204, %v2204
        %2209 = vadd.xlane.f32.xlu0 %v2205
        %v2210 = vpop.xlane.xlu0 %2209
        %2211 = vadd.xlane.f32.xlu0 %v2206
        %v2212 = vpop.xlane.xlu0 %2211
        %2213 = vadd.xlane.f32.xlu0 %v2207
        %v2214 = vpop.xlane.xlu0 %2213
        %2215 = vadd.xlane.f32.xlu0 %v2208
        %v2216 = vpop.xlane.xlu0 %2215
        %v2217 = vmul.f32 %v2210, %v727
        %v2218 = vmul.f32 %v2212, %v727
        %v2219 = vmul.f32 %v2214, %v727
        %v2220 = vmul.f32 %v2216, %v727
        %v2221 = vadd.f32 %v2217, 1e-05
        %v2222 = vadd.f32 %v2218, 1e-05
        %v2223 = vadd.f32 %v2219, 1e-05
        %v2224 = vadd.f32 %v2220, 1e-05
        %v2225 = vrsqrt.pop %v2221
        %v2226 = vrsqrt.pop %v2222
        %v2227 = vrsqrt.pop %v2223
        %v2228 = vrsqrt.pop %v2224
        %v2229 = vmul.f32 %v2201, %v2225
        %v2230 = vmul.f32 %v2202, %v2226
        %v2231 = vmul.f32 %v2203, %v2227
        %v2232 = vmul.f32 %v2204, %v2228
        %v2233 = vlaneseq
        %v2234 = vshrl.u32 %v2233, 7
        %v2235 = vsub.s32 0, %v2234
        %v2236 = vrot.slane %v2187, %v2235
        %v2237 = vmul.f32 %v2229, %v2236
        %v2238 = vmul.f32 %v2230, %v2236
        %v2239 = vmul.f32 %v2231, %v2236
        %v2240 = vmul.f32 %v2232, %v2236
        %v2241 = vlaneseq
        %v2242 = vshrl.u32 %v2241, 7
        %v2243 = vsub.s32 0, %v2242
        %v2244 = vrot.slane %v2188, %v2243
        %v2245 = vadd.f32 %v2237, %v2244
        %v2246 = vadd.f32 %v2238, %v2244
        %v2247 = vadd.f32 %v2239, %v2244
        %v2248 = vadd.f32 %v2240, %v2244
        %v2249 = vpack.c.bf16 %v2246, %v2245
        %v2250 = vpack.c.bf16 %v2248, %v2247
        %v2251 = vld [vmem:[#allocation14] sm:$0xff]
        %v2252 = vld [vmem:[#allocation14 + $0x8] sm:$0xff]
        %v2253 = vld [vmem:[#allocation14 + $0x10] sm:$0xff]
        %v2254 = vld [vmem:[#allocation14 + $0x18] sm:$0xff]
        %v2255 = vld [vmem:[#allocation14 + $0x20] sm:$0xff]
        %v2256 = vld [vmem:[#allocation14 + $0x28] sm:$0xff]
        %v2257 = vld [vmem:[#allocation14 + $0x30] sm:$0xff]
        %v2258 = vld [vmem:[#allocation14 + $0x38] sm:$0xff]
        %v2259 = vld [vmem:[#allocation14 + $0x40] sm:$0xff]
        %v2260 = vld [vmem:[#allocation14 + $0x48] sm:$0xff]
        %v2261 = vld [vmem:[#allocation14 + $0x50] sm:$0xff]
        %v2262 = vld [vmem:[#allocation14 + $0x58] sm:$0xff]
        %v2263 = vld [vmem:[#allocation14 + $0x60] sm:$0xff]
        %v2264 = vld [vmem:[#allocation14 + $0x68] sm:$0xff]
        %v2265 = vld [vmem:[#allocation14 + $0x70] sm:$0xff]
        %v2266 = vld [vmem:[#allocation14 + $0x78] sm:$0xff]
        %v2267 = vld [vmem:[%s15] ss:$2 sm:$0x3]
        %v2269 = vlaneseq
        %v2270 = vshrl.u32 %v2269, 7
        %v2271 = vsub.s32 0, %v2270
        %v2272 = vrot.slane %v2267, %v2271
        %v2273 = vlaneseq
        %v2274 = vshrl.u32 %v2273, 7
        %v2275 = vsub.s32 1, %v2274
        %v2276 = vrot.slane %v2267, %v2275
        %v2295 = vunpack.c.l.b16 %v2251
        %v2296 = vunpack.c.h.b16 %v2251
        %v2297 = vunpack.c.l.b16 %v2252
        %v2298 = vunpack.c.h.b16 %v2252
        %v2299 = vunpack.c.l.b16 %v2253
        %v2300 = vunpack.c.h.b16 %v2253
        %v2301 = vunpack.c.l.b16 %v2254
        %v2302 = vunpack.c.h.b16 %v2254
        %v2303 = vunpack.c.l.b16 %v2255
        %v2304 = vunpack.c.h.b16 %v2255
        %v2305 = vunpack.c.l.b16 %v2256
        %v2306 = vunpack.c.h.b16 %v2256
        %v2307 = vunpack.c.l.b16 %v2257
        %v2308 = vunpack.c.h.b16 %v2257
        %v2309 = vunpack.c.l.b16 %v2258
        %v2310 = vunpack.c.h.b16 %v2258
        %v2311 = vunpack.c.l.b16 %v2259
        %v2312 = vunpack.c.h.b16 %v2259
        %v2313 = vunpack.c.l.b16 %v2260
        %v2314 = vunpack.c.h.b16 %v2260
        %v2315 = vunpack.c.l.b16 %v2261
        %v2316 = vunpack.c.h.b16 %v2261
        %v2317 = vunpack.c.l.b16 %v2262
        %v2318 = vunpack.c.h.b16 %v2262
        %v2319 = vunpack.c.l.b16 %v2263
        %v2320 = vunpack.c.h.b16 %v2263
        %v2321 = vunpack.c.l.b16 %v2264
        %v2322 = vunpack.c.h.b16 %v2264
        %v2323 = vunpack.c.l.b16 %v2265
        %v2324 = vunpack.c.h.b16 %v2265
        %v2325 = vunpack.c.l.b16 %v2266
        %v2326 = vunpack.c.h.b16 %v2266
        %v2327 = vpack.c.b16 %v2297, %v2295
        %v2328 = vpack.c.b16 %v2298, %v2296
        %v2329 = vpack.c.b16 %v2301, %v2299
        %v2330 = vpack.c.b16 %v2302, %v2300
        %v2331 = vpack.c.b16 %v2305, %v2303
        %v2332 = vpack.c.b16 %v2306, %v2304
        %v2333 = vpack.c.b16 %v2309, %v2307
        %v2334 = vpack.c.b16 %v2310, %v2308
        %v2335 = vpack.c.b16 %v2313, %v2311
        %v2336 = vpack.c.b16 %v2314, %v2312
        %v2337 = vpack.c.b16 %v2317, %v2315
        %v2338 = vpack.c.b16 %v2318, %v2316
        %v2339 = vpack.c.b16 %v2321, %v2319
        %v2340 = vpack.c.b16 %v2322, %v2320
        %v2341 = vpack.c.b16 %v2325, %v2323
        %v2342 = vpack.c.b16 %v2326, %v2324
        %2359 = vmatprep.subr.bf16.mxu0 %v2342
        %2360 = vmatpush1.bf16.msra.mxu0 %v2341
        %2361 = vmatprep.subr.bf16.mxu0 %v2340
        %2362 = vmatpush1.bf16.msra.mxu0 %v2339
        %2363 = vmatprep.subr.bf16.mxu0 %v2338
        %2364 = vmatpush1.bf16.msra.mxu0 %v2337
        %2365 = vmatprep.subr.bf16.mxu0 %v2336
        %2366 = vmatpush1.bf16.msra.mxu0 %v2335
        %2367 = vmatprep.subr.bf16.mxu0 %v2334
        %2368 = vmatpush1.bf16.msra.mxu0 %v2333
        %2369 = vmatprep.subr.bf16.mxu0 %v2332
        %2370 = vmatpush1.bf16.msra.mxu0 %v2331
        %2371 = vmatprep.subr.bf16.mxu0 %v2330
        %2372 = vmatpush1.bf16.msra.mxu0 %v2329
        %2373 = vmatprep.subr.bf16.mxu0 %v2328
        %2374 = vmatpush1.bf16.msra.mxu0 %v2327
        %2375 = vmatprep.subr.bf16.mxu0 0
        %2376 = vmatpush2.bf16.msra.mxu0 0
        %2377 = vmatprep.subr.bf16.mxu0 0
        %2378 = vmatpush2.bf16.msra.mxu0 0
        %2379 = vmatprep.subr.bf16.mxu0 0
        %2380 = vmatpush2.bf16.msra.mxu0 0
        %2381 = vmatprep.subr.bf16.mxu0 0
        %2382 = vmatpush2.bf16.msra.mxu0 0
        %2383 = vmatprep.subr.bf16.mxu0 0
        %2384 = vmatpush2.bf16.msra.mxu0 0
        %2385 = vmatprep.subr.bf16.mxu0 0
        %2386 = vmatpush2.bf16.msra.mxu0 0
        %2387 = vmatprep.subr.bf16.mxu0 0
        %2388 = vmatpush2.bf16.msra.mxu0 0
        %2389 = vmatprep.subr.bf16.mxu0 0
        %2390 = vmatpush2.bf16.msra.mxu0 0
        %2391 = vmatprep.mubr.bf16.mxu0 0
        %2392 = vmatmul.mubr.bf16.gmra.mxu0 %v2249
        %v2393 = vpop.f32.mrf.mxu0
        %v2394 = vadd.f32 %v2272, %v2393
        %v2395 = vpop.f32.mrf.mxu0
        %v2396 = vadd.f32 %v2276, %v2395
        %v2397 = vpop.f32.mrf.mxu0
        %v2398 = vadd.f32 %v2272, %v2397
        %v2399 = vpop.f32.mrf.mxu0
        %v2400 = vadd.f32 %v2276, %v2399
        %2401 = vmatprep.mubr.bf16.mxu0 0
        %2402 = vmatmul.mubr.bf16.gmra.mxu0 %v2250
        %v2403 = vpop.f32.mrf.mxu0
        %v2404 = vadd.f32 %v2272, %v2403
        %v2405 = vpop.f32.mrf.mxu0
        %v2406 = vadd.f32 %v2276, %v2405
        %v2407 = vpop.f32.mrf.mxu0
        %v2408 = vadd.f32 %v2272, %v2407
        %v2409 = vpop.f32.mrf.mxu0
        %v2410 = vadd.f32 %v2276, %v2409
        %2411 = vdwg.mxu0
        %v2412 = vmax.f32 %v2394, 0.0
        %v2413 = vmax.f32 %v2396, 0.0
        %v2414 = vmax.f32 %v2398, 0.0
        %v2415 = vmax.f32 %v2400, 0.0
        %v2416 = vmax.f32 %v2404, 0.0
        %v2417 = vmax.f32 %v2406, 0.0
        %v2418 = vmax.f32 %v2408, 0.0
        %v2419 = vmax.f32 %v2410, 0.0
        %v2420 = vpack.c.bf16 %v2414, %v2412
        %v2421 = vpack.c.bf16 %v2415, %v2413
        %v2422 = vpack.c.bf16 %v2418, %v2416
        %v2423 = vpack.c.bf16 %v2419, %v2417
        %v2424 = vld [vmem:[#allocation16] sm:$0xf]
        %v2425 = vld [vmem:[#allocation16 + $0x4] sm:$0xf]
        %v2426 = vld [vmem:[#allocation16 + $0x8] sm:$0xf]
        %v2427 = vld [vmem:[#allocation16 + $0xc] sm:$0xf]
        %v2428 = vld [vmem:[#allocation16 + $0x10] sm:$0xf]
        %v2429 = vld [vmem:[#allocation16 + $0x14] sm:$0xf]
        %v2430 = vld [vmem:[#allocation16 + $0x18] sm:$0xf]
        %v2431 = vld [vmem:[#allocation16 + $0x1c] sm:$0xf]
        %v2432 = vld [vmem:[#allocation16 + $0x20] sm:$0xf]
        %v2433 = vld [vmem:[#allocation16 + $0x24] sm:$0xf]
        %v2434 = vld [vmem:[#allocation16 + $0x28] sm:$0xf]
        %v2435 = vld [vmem:[#allocation16 + $0x2c] sm:$0xf]
        %v2436 = vld [vmem:[#allocation16 + $0x30] sm:$0xf]
        %v2437 = vld [vmem:[#allocation16 + $0x34] sm:$0xf]
        %v2438 = vld [vmem:[#allocation16 + $0x38] sm:$0xf]
        %v2439 = vld [vmem:[#allocation16 + $0x3c] sm:$0xf]
        %v2440 = vld [vmem:[#allocation16 + $0x40] sm:$0xf]
        %v2441 = vld [vmem:[#allocation16 + $0x44] sm:$0xf]
        %v2442 = vld [vmem:[#allocation16 + $0x48] sm:$0xf]
        %v2443 = vld [vmem:[#allocation16 + $0x4c] sm:$0xf]
        %v2444 = vld [vmem:[#allocation16 + $0x50] sm:$0xf]
        %v2445 = vld [vmem:[#allocation16 + $0x54] sm:$0xf]
        %v2446 = vld [vmem:[#allocation16 + $0x58] sm:$0xf]
        %v2447 = vld [vmem:[#allocation16 + $0x5c] sm:$0xf]
        %v2448 = vld [vmem:[#allocation16 + $0x60] sm:$0xf]
        %v2449 = vld [vmem:[#allocation16 + $0x64] sm:$0xf]
        %v2450 = vld [vmem:[#allocation16 + $0x68] sm:$0xf]
        %v2451 = vld [vmem:[#allocation16 + $0x6c] sm:$0xf]
        %v2452 = vld [vmem:[#allocation16 + $0x70] sm:$0xf]
        %v2453 = vld [vmem:[#allocation16 + $0x74] sm:$0xf]
        %v2454 = vld [vmem:[#allocation16 + $0x78] sm:$0xf]
        %v2455 = vld [vmem:[#allocation16 + $0x7c] sm:$0xf]
        %v2456 = vld [vmem:[%s17] sm:$0x1]
        %v2457 = vlaneseq
        %v2458 = vshrl.u32 %v2457, 7
        %v2459 = vsub.s32 0, %v2458
        %v2460 = vrot.slane %v2456, %v2459
        %v2493 = vunpack.c.l.b16 %v2424
        %v2494 = vunpack.c.l.b16 %v2425
        %v2495 = vunpack.c.l.b16 %v2426
        %v2496 = vunpack.c.l.b16 %v2427
        %v2497 = vunpack.c.l.b16 %v2428
        %v2498 = vunpack.c.l.b16 %v2429
        %v2499 = vunpack.c.l.b16 %v2430
        %v2500 = vunpack.c.l.b16 %v2431
        %v2501 = vunpack.c.l.b16 %v2432
        %v2502 = vunpack.c.l.b16 %v2433
        %v2503 = vunpack.c.l.b16 %v2434
        %v2504 = vunpack.c.l.b16 %v2435
        %v2505 = vunpack.c.l.b16 %v2436
        %v2506 = vunpack.c.l.b16 %v2437
        %v2507 = vunpack.c.l.b16 %v2438
        %v2508 = vunpack.c.l.b16 %v2439
        %v2509 = vunpack.c.l.b16 %v2440
        %v2510 = vunpack.c.l.b16 %v2441
        %v2511 = vunpack.c.l.b16 %v2442
        %v2512 = vunpack.c.l.b16 %v2443
        %v2513 = vunpack.c.l.b16 %v2444
        %v2514 = vunpack.c.l.b16 %v2445
        %v2515 = vunpack.c.l.b16 %v2446
        %v2516 = vunpack.c.l.b16 %v2447
        %v2517 = vunpack.c.l.b16 %v2448
        %v2518 = vunpack.c.l.b16 %v2449
        %v2519 = vunpack.c.l.b16 %v2450
        %v2520 = vunpack.c.l.b16 %v2451
        %v2521 = vunpack.c.l.b16 %v2452
        %v2522 = vunpack.c.l.b16 %v2453
        %v2523 = vunpack.c.l.b16 %v2454
        %v2524 = vunpack.c.l.b16 %v2455
        %v2525 = vpack.c.b16 %v2494, %v2493
        %v2526 = vpack.c.b16 %v2496, %v2495
        %v2527 = vpack.c.b16 %v2498, %v2497
        %v2528 = vpack.c.b16 %v2500, %v2499
        %v2529 = vpack.c.b16 %v2502, %v2501
        %v2530 = vpack.c.b16 %v2504, %v2503
        %v2531 = vpack.c.b16 %v2506, %v2505
        %v2532 = vpack.c.b16 %v2508, %v2507
        %v2533 = vpack.c.b16 %v2510, %v2509
        %v2534 = vpack.c.b16 %v2512, %v2511
        %v2535 = vpack.c.b16 %v2514, %v2513
        %v2536 = vpack.c.b16 %v2516, %v2515
        %v2537 = vpack.c.b16 %v2518, %v2517
        %v2538 = vpack.c.b16 %v2520, %v2519
        %v2539 = vpack.c.b16 %v2522, %v2521
        %v2540 = vpack.c.b16 %v2524, %v2523
        %2557 = vmatprep.subr.bf16.mxu0 0
        %2558 = vmatpush1.bf16.msra.mxu0 %v2532
        %2559 = vmatprep.subr.bf16.mxu0 0
        %2560 = vmatpush1.bf16.msra.mxu0 %v2531
        %2561 = vmatprep.subr.bf16.mxu0 0
        %2562 = vmatpush1.bf16.msra.mxu0 %v2530
        %2563 = vmatprep.subr.bf16.mxu0 0
        %2564 = vmatpush1.bf16.msra.mxu0 %v2529
        %2565 = vmatprep.subr.bf16.mxu0 0
        %2566 = vmatpush1.bf16.msra.mxu0 %v2528
        %2567 = vmatprep.subr.bf16.mxu0 0
        %2568 = vmatpush1.bf16.msra.mxu0 %v2527
        %2569 = vmatprep.subr.bf16.mxu0 0
        %2570 = vmatpush1.bf16.msra.mxu0 %v2526
        %2571 = vmatprep.subr.bf16.mxu0 0
        %2572 = vmatpush1.bf16.msra.mxu0 %v2525
        %2573 = vmatprep.subr.bf16.mxu0 0
        %2574 = vmatpush2.bf16.msra.mxu0 %v2540
        %2575 = vmatprep.subr.bf16.mxu0 0
        %2576 = vmatpush2.bf16.msra.mxu0 %v2539
        %2577 = vmatprep.subr.bf16.mxu0 0
        %2578 = vmatpush2.bf16.msra.mxu0 %v2538
        %2579 = vmatprep.subr.bf16.mxu0 0
        %2580 = vmatpush2.bf16.msra.mxu0 %v2537
        %2581 = vmatprep.subr.bf16.mxu0 0
        %2582 = vmatpush2.bf16.msra.mxu0 %v2536
        %2583 = vmatprep.subr.bf16.mxu0 0
        %2584 = vmatpush2.bf16.msra.mxu0 %v2535
        %2585 = vmatprep.subr.bf16.mxu0 0
        %2586 = vmatpush2.bf16.msra.mxu0 %v2534
        %2587 = vmatprep.subr.bf16.mxu0 0
        %2588 = vmatpush2.bf16.msra.mxu0 %v2533
        %2589 = vmatprep.mubr.bf16.mxu0 %v2421
        %2590 = vmatmul.mubr.bf16.gmra.mxu0 %v2420
        %v2591 = vpop.f32.mrf.mxu0
        %v2592 = vadd.f32 %v2460, %v2591
        %v2593 = vpop.f32.mrf.mxu0
        %v2594 = vpop.f32.mrf.mxu0
        %v2595 = vadd.f32 %v2460, %v2594
        %v2596 = vpop.f32.mrf.mxu0
        %2597 = vmatprep.mubr.bf16.mxu0 %v2423
        %2598 = vmatmul.mubr.bf16.gmra.mxu0 %v2422
        %v2599 = vpop.f32.mrf.mxu0
        %v2600 = vadd.f32 %v2460, %v2599
        %v2601 = vpop.f32.mrf.mxu0
        %v2602 = vpop.f32.mrf.mxu0
        %v2603 = vadd.f32 %v2460, %v2602
        %v2604 = vpop.f32.mrf.mxu0
        %2605 = vdwg.mxu0
        %v2606 = vadd.f32 %v2183, %v2592
        %v2607 = vadd.f32 %v2184, %v2595
        %v2608 = vadd.f32 %v2185, %v2600
        %v2609 = vadd.f32 %v2186, %v2603
        %s2610 = scalar_lea.vmem [#allocation5], 32
        %v2611 = vld [vmem:[%s2610] sm:$0xff]
        %v2612 = vld [vmem:[%s2610 + $0x8] sm:$0xff]
        %v2613 = vld [vmem:[%s2610 + $0x10] sm:$0xff]
        %v2614 = vld [vmem:[%s2610 + $0x18] sm:$0xff]
        %v2615 = vld [vmem:[%s2 + $0x1] sm:$0x1]
        %v2616 = vld [vmem:[#allocation7 + $0x1] sm:$0x1]
        %2617 = vadd.xlane.f32.xlu0 %v2606
        %v2618 = vpop.xlane.xlu0 %2617
        %2619 = vadd.xlane.f32.xlu0 %v2607
        %v2620 = vpop.xlane.xlu0 %2619
        %2621 = vadd.xlane.f32.xlu0 %v2608
        %v2622 = vpop.xlane.xlu0 %2621
        %2623 = vadd.xlane.f32.xlu0 %v2609
        %v2624 = vpop.xlane.xlu0 %2623
        %v2625 = vmul.f32 %v2618, %v727
        %v2626 = vmul.f32 %v2620, %v727
        %v2627 = vmul.f32 %v2622, %v727
        %v2628 = vmul.f32 %v2624, %v727
        %v2629 = vsub.f32 %v2606, %v2625
        %v2630 = vsub.f32 %v2607, %v2626
        %v2631 = vsub.f32 %v2608, %v2627
        %v2632 = vsub.f32 %v2609, %v2628
        %v2633 = vmul.f32 %v2629, %v2629
        %v2634 = vmul.f32 %v2630, %v2630
        %v2635 = vmul.f32 %v2631, %v2631
        %v2636 = vmul.f32 %v2632, %v2632
        %2637 = vadd.xlane.f32.xlu0 %v2633
        %v2638 = vpop.xlane.xlu0 %2637
        %2639 = vadd.xlane.f32.xlu0 %v2634
        %v2640 = vpop.xlane.xlu0 %2639
        %2641 = vadd.xlane.f32.xlu0 %v2635
        %v2642 = vpop.xlane.xlu0 %2641
        %2643 = vadd.xlane.f32.xlu0 %v2636
        %v2644 = vpop.xlane.xlu0 %2643
        %v2645 = vmul.f32 %v2638, %v727
        %v2646 = vmul.f32 %v2640, %v727
        %v2647 = vmul.f32 %v2642, %v727
        %v2648 = vmul.f32 %v2644, %v727
        %v2649 = vadd.f32 %v2645, 1e-05
        %v2650 = vadd.f32 %v2646, 1e-05
        %v2651 = vadd.f32 %v2647, 1e-05
        %v2652 = vadd.f32 %v2648, 1e-05
        %v2653 = vrsqrt.pop %v2649
        %v2654 = vrsqrt.pop %v2650
        %v2655 = vrsqrt.pop %v2651
        %v2656 = vrsqrt.pop %v2652
        %v2657 = vmul.f32 %v2629, %v2653
        %v2658 = vmul.f32 %v2630, %v2654
        %v2659 = vmul.f32 %v2631, %v2655
        %v2660 = vmul.f32 %v2632, %v2656
        %v2661 = vlaneseq
        %v2662 = vshrl.u32 %v2661, 7
        %v2663 = vsub.s32 0, %v2662
        %v2664 = vrot.slane %v2615, %v2663
        %v2665 = vmul.f32 %v2657, %v2664
        %v2666 = vmul.f32 %v2658, %v2664
        %v2667 = vmul.f32 %v2659, %v2664
        %v2668 = vmul.f32 %v2660, %v2664
        %v2669 = vlaneseq
        %v2670 = vshrl.u32 %v2669, 7
        %v2671 = vsub.s32 0, %v2670
        %v2672 = vrot.slane %v2616, %v2671
        %v2673 = vadd.f32 %v2665, %v2672
        %v2674 = vadd.f32 %v2666, %v2672
        %v2675 = vadd.f32 %v2667, %v2672
        %v2676 = vadd.f32 %v2668, %v2672
        %v2677 = vpack.c.bf16 %v2674, %v2673
        %v2678 = vpack.c.bf16 %v2676, %v2675
        %s2679 = scalar_lea.vmem [#allocation8], 64
        %v2680 = vld [vmem:[%s2679] sm:$0xf]
        %v2681 = vld [vmem:[%s2679 + $0x4] sm:$0xf]
        %v2682 = vld [vmem:[%s2679 + $0x8] sm:$0xf]
        %v2683 = vld [vmem:[%s2679 + $0xc] sm:$0xf]
        %v2684 = vld [vmem:[%s2679 + $0x10] sm:$0xf]
        %v2685 = vld [vmem:[%s2679 + $0x14] sm:$0xf]
        %v2686 = vld [vmem:[%s2679 + $0x18] sm:$0xf]
        %v2687 = vld [vmem:[%s2679 + $0x1c] sm:$0xf]
        %v2688 = vld [vmem:[%s2679 + $0x20] sm:$0xf]
        %v2689 = vld [vmem:[%s2679 + $0x24] sm:$0xf]
        %v2690 = vld [vmem:[%s2679 + $0x28] sm:$0xf]
        %v2691 = vld [vmem:[%s2679 + $0x2c] sm:$0xf]
        %v2692 = vld [vmem:[%s2679 + $0x30] sm:$0xf]
        %v2693 = vld [vmem:[%s2679 + $0x34] sm:$0xf]
        %v2694 = vld [vmem:[%s2679 + $0x38] sm:$0xf]
        %v2695 = vld [vmem:[%s2679 + $0x3c] sm:$0xf]
        %v2696 = vld [vmem:[%s7 + $0x1] sm:$0x1]
        %v2697 = vlaneseq
        %v2698 = vshrl.u32 %v2697, 7
        %v2699 = vsub.s32 0, %v2698
        %v2700 = vrot.slane %v2696, %v2699
        %v2717 = vunpack.c.l.b16 %v2680
        %v2718 = vunpack.c.l.b16 %v2681
        %v2719 = vunpack.c.l.b16 %v2682
        %v2720 = vunpack.c.l.b16 %v2683
        %v2721 = vunpack.c.l.b16 %v2684
        %v2722 = vunpack.c.l.b16 %v2685
        %v2723 = vunpack.c.l.b16 %v2686
        %v2724 = vunpack.c.l.b16 %v2687
        %v2725 = vunpack.c.l.b16 %v2688
        %v2726 = vunpack.c.l.b16 %v2689
        %v2727 = vunpack.c.l.b16 %v2690
        %v2728 = vunpack.c.l.b16 %v2691
        %v2729 = vunpack.c.l.b16 %v2692
        %v2730 = vunpack.c.l.b16 %v2693
        %v2731 = vunpack.c.l.b16 %v2694
        %v2732 = vunpack.c.l.b16 %v2695
        %v2733 = vpack.c.b16 %v2718, %v2717
        %v2734 = vpack.c.b16 %v2720, %v2719
        %v2735 = vpack.c.b16 %v2722, %v2721
        %v2736 = vpack.c.b16 %v2724, %v2723
        %v2737 = vpack.c.b16 %v2726, %v2725
        %v2738 = vpack.c.b16 %v2728, %v2727
        %v2739 = vpack.c.b16 %v2730, %v2729
        %v2740 = vpack.c.b16 %v2732, %v2731
        %2749 = vmatprep.subr.bf16.mxu0 0
        %2750 = vmatpush1.bf16.msra.mxu0 %v2740
        %2751 = vmatprep.subr.bf16.mxu0 0
        %2752 = vmatpush1.bf16.msra.mxu0 %v2739
        %2753 = vmatprep.subr.bf16.mxu0 0
        %2754 = vmatpush1.bf16.msra.mxu0 %v2738
        %2755 = vmatprep.subr.bf16.mxu0 0
        %2756 = vmatpush1.bf16.msra.mxu0 %v2737
        %2757 = vmatprep.subr.bf16.mxu0 0
        %2758 = vmatpush1.bf16.msra.mxu0 %v2736
        %2759 = vmatprep.subr.bf16.mxu0 0
        %2760 = vmatpush1.bf16.msra.mxu0 %v2735
        %2761 = vmatprep.subr.bf16.mxu0 0
        %2762 = vmatpush1.bf16.msra.mxu0 %v2734
        %2763 = vmatprep.subr.bf16.mxu0 0
        %2764 = vmatpush1.bf16.msra.mxu0 %v2733
        %2765 = vmatprep.subr.bf16.mxu0 0
        %2766 = vmatpush2.bf16.msra.mxu0 0
        %2767 = vmatprep.subr.bf16.mxu0 0
        %2768 = vmatpush2.bf16.msra.mxu0 0
        %2769 = vmatprep.subr.bf16.mxu0 0
        %2770 = vmatpush2.bf16.msra.mxu0 0
        %2771 = vmatprep.subr.bf16.mxu0 0
        %2772 = vmatpush2.bf16.msra.mxu0 0
        %2773 = vmatprep.subr.bf16.mxu0 0
        %2774 = vmatpush2.bf16.msra.mxu0 0
        %2775 = vmatprep.subr.bf16.mxu0 0
        %2776 = vmatpush2.bf16.msra.mxu0 0
        %2777 = vmatprep.subr.bf16.mxu0 0
        %2778 = vmatpush2.bf16.msra.mxu0 0
        %2779 = vmatprep.subr.bf16.mxu0 0
        %2780 = vmatpush2.bf16.msra.mxu0 0
        %2781 = vmatprep.mubr.bf16.mxu0 0
        %2782 = vmatmul.mubr.bf16.gmra.mxu0 %v2677
        %v2783 = vpop.f32.mrf.mxu0
        %v2784 = vadd.f32 %v2700, %v2783
        %v2785 = vpop.f32.mrf.mxu0
        %v2786 = vpop.f32.mrf.mxu0
        %v2787 = vadd.f32 %v2700, %v2786
        %v2788 = vpop.f32.mrf.mxu0
        %2789 = vmatprep.mubr.bf16.mxu0 0
        %2790 = vmatmul.mubr.bf16.gmra.mxu0 %v2678
        %v2791 = vpop.f32.mrf.mxu0
        %v2792 = vadd.f32 %v2700, %v2791
        %v2793 = vpop.f32.mrf.mxu0
        %v2794 = vpop.f32.mrf.mxu0
        %v2795 = vadd.f32 %v2700, %v2794
        %v2796 = vpop.f32.mrf.mxu0
        %2797 = vdwg.mxu0
        %s2798 = scalar_lea.vmem [#allocation10], 64
        %v2799 = vld [vmem:[%s2798] sm:$0xf]
        %v2800 = vld [vmem:[%s2798 + $0x4] sm:$0xf]
        %v2801 = vld [vmem:[%s2798 + $0x8] sm:$0xf]
        %v2802 = vld [vmem:[%s2798 + $0xc] sm:$0xf]
        %v2803 = vld [vmem:[%s2798 + $0x10] sm:$0xf]
        %v2804 = vld [vmem:[%s2798 + $0x14] sm:$0xf]
        %v2805 = vld [vmem:[%s2798 + $0x18] sm:$0xf]
        %v2806 = vld [vmem:[%s2798 + $0x1c] sm:$0xf]
        %v2807 = vld [vmem:[%s2798 + $0x20] sm:$0xf]
        %v2808 = vld [vmem:[%s2798 + $0x24] sm:$0xf]
        %v2809 = vld [vmem:[%s2798 + $0x28] sm:$0xf]
        %v2810 = vld [vmem:[%s2798 + $0x2c] sm:$0xf]
        %v2811 = vld [vmem:[%s2798 + $0x30] sm:$0xf]
        %v2812 = vld [vmem:[%s2798 + $0x34] sm:$0xf]
        %v2813 = vld [vmem:[%s2798 + $0x38] sm:$0xf]
        %v2814 = vld [vmem:[%s2798 + $0x3c] sm:$0xf]
        %v2815 = vld [vmem:[%s8 + $0x1] sm:$0x1]
        %v2816 = vlaneseq
        %v2817 = vshrl.u32 %v2816, 7
        %v2818 = vsub.s32 0, %v2817
        %v2819 = vrot.slane %v2815, %v2818
        %v2836 = vunpack.c.l.b16 %v2799
        %v2837 = vunpack.c.l.b16 %v2800
        %v2838 = vunpack.c.l.b16 %v2801
        %v2839 = vunpack.c.l.b16 %v2802
        %v2840 = vunpack.c.l.b16 %v2803
        %v2841 = vunpack.c.l.b16 %v2804
        %v2842 = vunpack.c.l.b16 %v2805
        %v2843 = vunpack.c.l.b16 %v2806
        %v2844 = vunpack.c.l.b16 %v2807
        %v2845 = vunpack.c.l.b16 %v2808
        %v2846 = vunpack.c.l.b16 %v2809
        %v2847 = vunpack.c.l.b16 %v2810
        %v2848 = vunpack.c.l.b16 %v2811
        %v2849 = vunpack.c.l.b16 %v2812
        %v2850 = vunpack.c.l.b16 %v2813
        %v2851 = vunpack.c.l.b16 %v2814
        %v2852 = vpack.c.b16 %v2837, %v2836
        %v2853 = vpack.c.b16 %v2839, %v2838
        %v2854 = vpack.c.b16 %v2841, %v2840
        %v2855 = vpack.c.b16 %v2843, %v2842
        %v2856 = vpack.c.b16 %v2845, %v2844
        %v2857 = vpack.c.b16 %v2847, %v2846
        %v2858 = vpack.c.b16 %v2849, %v2848
        %v2859 = vpack.c.b16 %v2851, %v2850
        %2868 = vmatprep.subr.bf16.mxu0 0
        %2869 = vmatpush1.bf16.msra.mxu0 %v2859
        %2870 = vmatprep.subr.bf16.mxu0 0
        %2871 = vmatpush1.bf16.msra.mxu0 %v2858
        %2872 = vmatprep.subr.bf16.mxu0 0
        %2873 = vmatpush1.bf16.msra.mxu0 %v2857
        %2874 = vmatprep.subr.bf16.mxu0 0
        %2875 = vmatpush1.bf16.msra.mxu0 %v2856
        %2876 = vmatprep.subr.bf16.mxu0 0
        %2877 = vmatpush1.bf16.msra.mxu0 %v2855
        %2878 = vmatprep.subr.bf16.mxu0 0
        %2879 = vmatpush1.bf16.msra.mxu0 %v2854
        %2880 = vmatprep.subr.bf16.mxu0 0
        %2881 = vmatpush1.bf16.msra.mxu0 %v2853
        %2882 = vmatprep.subr.bf16.mxu0 0
        %2883 = vmatpush1.bf16.msra.mxu0 %v2852
        %2884 = vmatprep.subr.bf16.mxu0 0
        %2885 = vmatpush2.bf16.msra.mxu0 0
        %2886 = vmatprep.subr.bf16.mxu0 0
        %2887 = vmatpush2.bf16.msra.mxu0 0
        %2888 = vmatprep.subr.bf16.mxu0 0
        %2889 = vmatpush2.bf16.msra.mxu0 0
        %2890 = vmatprep.subr.bf16.mxu0 0
        %2891 = vmatpush2.bf16.msra.mxu0 0
        %2892 = vmatprep.subr.bf16.mxu0 0
        %2893 = vmatpush2.bf16.msra.mxu0 0
        %2894 = vmatprep.subr.bf16.mxu0 0
        %2895 = vmatpush2.bf16.msra.mxu0 0
        %2896 = vmatprep.subr.bf16.mxu0 0
        %2897 = vmatpush2.bf16.msra.mxu0 0
        %2898 = vmatprep.subr.bf16.mxu0 0
        %2899 = vmatpush2.bf16.msra.mxu0 0
        %2900 = vmatprep.mubr.bf16.mxu0 0
        %2901 = vmatmul.mubr.bf16.gmra.mxu0 %v2677
        %v2902 = vpop.f32.mrf.mxu0
        %v2903 = vadd.f32 %v2819, %v2902
        %v2904 = vpop.f32.mrf.mxu0
        %v2905 = vpop.f32.mrf.mxu0
        %v2906 = vadd.f32 %v2819, %v2905
        %v2907 = vpop.f32.mrf.mxu0
        %2908 = vmatprep.mubr.bf16.mxu0 0
        %2909 = vmatmul.mubr.bf16.gmra.mxu0 %v2678
        %v2910 = vpop.f32.mrf.mxu0
        %v2911 = vadd.f32 %v2819, %v2910
        %v2912 = vpop.f32.mrf.mxu0
        %v2913 = vpop.f32.mrf.mxu0
        %v2914 = vadd.f32 %v2819, %v2913
        %v2915 = vpop.f32.mrf.mxu0
        %2916 = vdwg.mxu0
        %s2917 = scalar_lea.vmem [#allocation11], 64
        %v2918 = vld [vmem:[%s2917] sm:$0xf]
        %v2919 = vld [vmem:[%s2917 + $0x4] sm:$0xf]
        %v2920 = vld [vmem:[%s2917 + $0x8] sm:$0xf]
        %v2921 = vld [vmem:[%s2917 + $0xc] sm:$0xf]
        %v2922 = vld [vmem:[%s2917 + $0x10] sm:$0xf]
        %v2923 = vld [vmem:[%s2917 + $0x14] sm:$0xf]
        %v2924 = vld [vmem:[%s2917 + $0x18] sm:$0xf]
        %v2925 = vld [vmem:[%s2917 + $0x1c] sm:$0xf]
        %v2926 = vld [vmem:[%s2917 + $0x20] sm:$0xf]
        %v2927 = vld [vmem:[%s2917 + $0x24] sm:$0xf]
        %v2928 = vld [vmem:[%s2917 + $0x28] sm:$0xf]
        %v2929 = vld [vmem:[%s2917 + $0x2c] sm:$0xf]
        %v2930 = vld [vmem:[%s2917 + $0x30] sm:$0xf]
        %v2931 = vld [vmem:[%s2917 + $0x34] sm:$0xf]
        %v2932 = vld [vmem:[%s2917 + $0x38] sm:$0xf]
        %v2933 = vld [vmem:[%s2917 + $0x3c] sm:$0xf]
        %v2934 = vld [vmem:[%s9 + $0x1] sm:$0x1]
        %v2935 = vlaneseq
        %v2936 = vshrl.u32 %v2935, 7
        %v2937 = vsub.s32 0, %v2936
        %v2938 = vrot.slane %v2934, %v2937
        %v2955 = vunpack.c.l.b16 %v2918
        %v2956 = vunpack.c.l.b16 %v2919
        %v2957 = vunpack.c.l.b16 %v2920
        %v2958 = vunpack.c.l.b16 %v2921
        %v2959 = vunpack.c.l.b16 %v2922
        %v2960 = vunpack.c.l.b16 %v2923
        %v2961 = vunpack.c.l.b16 %v2924
        %v2962 = vunpack.c.l.b16 %v2925
        %v2963 = vunpack.c.l.b16 %v2926
        %v2964 = vunpack.c.l.b16 %v2927
        %v2965 = vunpack.c.l.b16 %v2928
        %v2966 = vunpack.c.l.b16 %v2929
        %v2967 = vunpack.c.l.b16 %v2930
        %v2968 = vunpack.c.l.b16 %v2931
        %v2969 = vunpack.c.l.b16 %v2932
        %v2970 = vunpack.c.l.b16 %v2933
        %v2971 = vpack.c.b16 %v2956, %v2955
        %v2972 = vpack.c.b16 %v2958, %v2957
        %v2973 = vpack.c.b16 %v2960, %v2959
        %v2974 = vpack.c.b16 %v2962, %v2961
        %v2975 = vpack.c.b16 %v2964, %v2963
        %v2976 = vpack.c.b16 %v2966, %v2965
        %v2977 = vpack.c.b16 %v2968, %v2967
        %v2978 = vpack.c.b16 %v2970, %v2969
        %2987 = vmatprep.subr.bf16.mxu0 0
        %2988 = vmatpush1.bf16.msra.mxu0 %v2978
        %2989 = vmatprep.subr.bf16.mxu0 0
        %2990 = vmatpush1.bf16.msra.mxu0 %v2977
        %2991 = vmatprep.subr.bf16.mxu0 0
        %2992 = vmatpush1.bf16.msra.mxu0 %v2976
        %2993 = vmatprep.subr.bf16.mxu0 0
        %2994 = vmatpush1.bf16.msra.mxu0 %v2975
        %2995 = vmatprep.subr.bf16.mxu0 0
        %2996 = vmatpush1.bf16.msra.mxu0 %v2974
        %2997 = vmatprep.subr.bf16.mxu0 0
        %2998 = vmatpush1.bf16.msra.mxu0 %v2973
        %2999 = vmatprep.subr.bf16.mxu0 0
        %3000 = vmatpush1.bf16.msra.mxu0 %v2972
        %3001 = vmatprep.subr.bf16.mxu0 0
        %3002 = vmatpush1.bf16.msra.mxu0 %v2971
        %3003 = vmatprep.subr.bf16.mxu0 0
        %3004 = vmatpush2.bf16.msra.mxu0 0
        %3005 = vmatprep.subr.bf16.mxu0 0
        %3006 = vmatpush2.bf16.msra.mxu0 0
        %3007 = vmatprep.subr.bf16.mxu0 0
        %3008 = vmatpush2.bf16.msra.mxu0 0
        %3009 = vmatprep.subr.bf16.mxu0 0
        %3010 = vmatpush2.bf16.msra.mxu0 0
        %3011 = vmatprep.subr.bf16.mxu0 0
        %3012 = vmatpush2.bf16.msra.mxu0 0
        %3013 = vmatprep.subr.bf16.mxu0 0
        %3014 = vmatpush2.bf16.msra.mxu0 0
        %3015 = vmatprep.subr.bf16.mxu0 0
        %3016 = vmatpush2.bf16.msra.mxu0 0
        %3017 = vmatprep.subr.bf16.mxu0 0
        %3018 = vmatpush2.bf16.msra.mxu0 0
        %3019 = vmatprep.mubr.bf16.mxu0 0
        %3020 = vmatmul.mubr.bf16.gmra.mxu0 %v2677
        %v3021 = vpop.f32.mrf.mxu0
        %v3022 = vadd.f32 %v2938, %v3021
        %v3023 = vpop.f32.mrf.mxu0
        %v3024 = vpop.f32.mrf.mxu0
        %v3025 = vadd.f32 %v2938, %v3024
        %v3026 = vpop.f32.mrf.mxu0
        %3027 = vmatprep.mubr.bf16.mxu0 0
        %3028 = vmatmul.mubr.bf16.gmra.mxu0 %v2678
        %v3029 = vpop.f32.mrf.mxu0
        %v3030 = vadd.f32 %v2938, %v3029
        %v3031 = vpop.f32.mrf.mxu0
        %v3032 = vpop.f32.mrf.mxu0
        %v3033 = vadd.f32 %v2938, %v3032
        %v3034 = vpop.f32.mrf.mxu0
        %3035 = vdwg.mxu0
        %v3036 = vpack.c.bf16 %v2787, %v2784
        %v3037 = vpack.c.bf16 %v2795, %v2792
        %v3038 = vpack.c.bf16 %v2906, %v2903
        %v3039 = vpack.c.bf16 %v2914, %v2911
        %v3040 = vpack.c.bf16 %v3025, %v3022
        %v3041 = vpack.c.bf16 %v3033, %v3030
        %v3043 = vsel %vm1142, %v3036, 0
        %v3046 = vsel %vm1142, %v3037, 0
        %v3049 = vsel %vm1142, %v3038, 0
        %v3052 = vsel %vm1142, %v3039, 0
        %3054 = vmatprep.subr.bf16.mxu0 0
        %3055 = vmatpush1.bf16.xpose.msra.mxu0 0
        %3056 = vmatprep.subr.bf16.mxu0 0
        %3057 = vmatpush1.bf16.xpose.msra.mxu0 0
        %3058 = vmatprep.subr.bf16.mxu0 0
        %3059 = vmatpush1.bf16.xpose.msra.mxu0 0
        %3060 = vmatprep.subr.bf16.mxu0 0
        %3061 = vmatpush1.bf16.xpose.msra.mxu0 0
        %3062 = vmatprep.subr.bf16.mxu0 0
        %3063 = vmatpush1.bf16.xpose.msra.mxu0 0
        %3064 = vmatprep.subr.bf16.mxu0 0
        %3065 = vmatpush1.bf16.xpose.msra.mxu0 0
        %3066 = vmatprep.subr.bf16.mxu0 0
        %3067 = vmatpush1.bf16.xpose.msra.mxu0 %v3052
        %3068 = vmatprep.subr.bf16.mxu0 0
        %3069 = vmatpush1.bf16.xpose.msra.mxu0 %v3049
        %3070 = vmatprep.subr.bf16.mxu0 0
        %3071 = vmatpush2.bf16.xpose.msra.mxu0 0
        %3072 = vmatprep.subr.bf16.mxu0 0
        %3073 = vmatpush2.bf16.xpose.msra.mxu0 0
        %3074 = vmatprep.subr.bf16.mxu0 0
        %3075 = vmatpush2.bf16.xpose.msra.mxu0 0
        %3076 = vmatprep.subr.bf16.mxu0 0
        %3077 = vmatpush2.bf16.xpose.msra.mxu0 0
        %3078 = vmatprep.subr.bf16.mxu0 0
        %3079 = vmatpush2.bf16.xpose.msra.mxu0 0
        %3080 = vmatprep.subr.bf16.mxu0 0
        %3081 = vmatpush2.bf16.xpose.msra.mxu0 0
        %3082 = vmatprep.subr.bf16.mxu0 0
        %3083 = vmatpush2.bf16.xpose.msra.mxu0 0
        %3084 = vmatprep.subr.bf16.mxu0 0
        %3085 = vmatpush2.bf16.xpose.msra.mxu0 0
        %3086 = vmatprep.mubr.bf16.mxu0 0
        %3087 = vmatmul.mubr.bf16.gmra.mxu0 %v3043
        %v3088 = vpop.f32.mrf.mxu0
        %v3089 = vadd.f32 0.0, %v3088
        %v3090 = vpop.f32.mrf.mxu0
        %v3091 = vpop.f32.mrf.mxu0
        %v3092 = vadd.f32 0.0, %v3091
        %v3093 = vpop.f32.mrf.mxu0
        %3094 = vmatprep.mubr.bf16.mxu0 0
        %3095 = vmatmul.mubr.bf16.gmra.mxu0 %v3046
        %v3096 = vpop.f32.mrf.mxu0
        %v3097 = vadd.f32 0.0, %v3096
        %v3098 = vpop.f32.mrf.mxu0
        %v3099 = vpop.f32.mrf.mxu0
        %v3100 = vadd.f32 0.0, %v3099
        %v3101 = vpop.f32.mrf.mxu0
        %3102 = vdwg.mxu0
        %v3103 = vmul.f32 %v3089, 0.17677669
        %v3104 = vmul.f32 %v3092, 0.17677669
        %v3105 = vmul.f32 %v3097, 0.17677669
        %v3106 = vmul.f32 %v3100, 0.17677669
        %v3107 = vadd.f32 %v3103, %v2611
        %v3108 = vadd.f32 %v3104, %v2612
        %v3109 = vadd.f32 %v3105, %v2613
        %v3110 = vadd.f32 %v3106, %v2614
        %v3111 = vsel %vm1142, %v3107, -inf
        %3112 = vmax.xlane.f32.xlu0 %v3111
        %v3113 = vpop.xlane.xlu0 %3112
        %v3114 = vsel %vm1142, %v3108, -inf
        %3115 = vmax.xlane.f32.xlu0 %v3114
        %v3116 = vpop.xlane.xlu0 %3115
        %v3117 = vsel %vm1142, %v3109, -inf
        %3118 = vmax.xlane.f32.xlu0 %v3117
        %v3119 = vpop.xlane.xlu0 %3118
        %v3120 = vsel %vm1142, %v3110, -inf
        %3121 = vmax.xlane.f32.xlu0 %v3120
        %v3122 = vpop.xlane.xlu0 %3121
        %v3123 = vsub.f32 %v3107, %v3113
        %v3124 = vsub.f32 %v3108, %v3116
        %v3125 = vsub.f32 %v3109, %v3119
        %v3126 = vsub.f32 %v3110, %v3122
        %v3127 = vmul.f32 %v3123, 1.442695
        %v3128 = vpow.pop %v3127
        %v3129 = vmul.f32 %v3124, 1.442695
        %v3130 = vpow.pop %v3129
        %v3131 = vmul.f32 %v3125, 1.442695
        %v3132 = vpow.pop %v3131
        %v3133 = vmul.f32 %v3126, 1.442695
        %v3134 = vpow.pop %v3133
        %v3135 = vsel %vm1142, %v3128, 0.0
        %3136 = vadd.xlane.f32.xlu0 %v3135
        %v3137 = vpop.xlane.xlu0 %3136
        %v3138 = vsel %vm1142, %v3130, 0.0
        %3139 = vadd.xlane.f32.xlu0 %v3138
        %v3140 = vpop.xlane.xlu0 %3139
        %v3141 = vsel %vm1142, %v3132, 0.0
        %3142 = vadd.xlane.f32.xlu0 %v3141
        %v3143 = vpop.xlane.xlu0 %3142
        %v3144 = vsel %vm1142, %v3134, 0.0
        %3145 = vadd.xlane.f32.xlu0 %v3144
        %v3146 = vpop.xlane.xlu0 %3145
        %v3147 = vrcp.pop %v3137
        %v3148 = vrcp.pop %v3140
        %v3149 = vrcp.pop %v3143
        %v3150 = vrcp.pop %v3146
        %v3151 = vmul.f32 %v3128, %v3147
        %v3152 = vmul.f32 %v3130, %v3148
        %v3153 = vmul.f32 %v3132, %v3149
        %v3154 = vmul.f32 %v3134, %v3150
        %v3155 = vpack.c.bf16 %v3152, %v3151
        %v3156 = vpack.c.bf16 %v3154, %v3153
        %v3158 = vsel %vm1142, %v3155, 0
        %v3161 = vsel %vm1142, %v3156, 0
        %3163 = vmatprep.subr.bf16.mxu0 0
        %3164 = vmatpush1.bf16.msra.mxu0 0
        %3165 = vmatprep.subr.bf16.mxu0 0
        %3166 = vmatpush1.bf16.msra.mxu0 0
        %3167 = vmatprep.subr.bf16.mxu0 0
        %3168 = vmatpush1.bf16.msra.mxu0 0
        %3169 = vmatprep.subr.bf16.mxu0 0
        %3170 = vmatpush1.bf16.msra.mxu0 0
        %3171 = vmatprep.subr.bf16.mxu0 0
        %3172 = vmatpush1.bf16.msra.mxu0 0
        %3173 = vmatprep.subr.bf16.mxu0 0
        %3174 = vmatpush1.bf16.msra.mxu0 0
        %3175 = vmatprep.subr.bf16.mxu0 0
        %3176 = vmatpush1.bf16.msra.mxu0 %v3041
        %3177 = vmatprep.subr.bf16.mxu0 0
        %3178 = vmatpush1.bf16.msra.mxu0 %v3040
        %3179 = vmatprep.subr.bf16.mxu0 0
        %3180 = vmatpush2.bf16.msra.mxu0 0
        %3181 = vmatprep.subr.bf16.mxu0 0
        %3182 = vmatpush2.bf16.msra.mxu0 0
        %3183 = vmatprep.subr.bf16.mxu0 0
        %3184 = vmatpush2.bf16.msra.mxu0 0
        %3185 = vmatprep.subr.bf16.mxu0 0
        %3186 = vmatpush2.bf16.msra.mxu0 0
        %3187 = vmatprep.subr.bf16.mxu0 0
        %3188 = vmatpush2.bf16.msra.mxu0 0
        %3189 = vmatprep.subr.bf16.mxu0 0
        %3190 = vmatpush2.bf16.msra.mxu0 0
        %3191 = vmatprep.subr.bf16.mxu0 0
        %3192 = vmatpush2.bf16.msra.mxu0 0
        %3193 = vmatprep.subr.bf16.mxu0 0
        %3194 = vmatpush2.bf16.msra.mxu0 0
        %3195 = vmatprep.mubr.bf16.mxu0 0
        %3196 = vmatmul.mubr.bf16.gmra.mxu0 %v3158
        %v3197 = vpop.f32.mrf.mxu0
        %v3198 = vadd.f32 0.0, %v3197
        %v3199 = vpop.f32.mrf.mxu0
        %v3200 = vpop.f32.mrf.mxu0
        %v3201 = vadd.f32 0.0, %v3200
        %v3202 = vpop.f32.mrf.mxu0
        %3203 = vmatprep.mubr.bf16.mxu0 0
        %3204 = vmatmul.mubr.bf16.gmra.mxu0 %v3161
        %v3205 = vpop.f32.mrf.mxu0
        %v3206 = vadd.f32 0.0, %v3205
        %v3207 = vpop.f32.mrf.mxu0
        %v3208 = vpop.f32.mrf.mxu0
        %v3209 = vadd.f32 0.0, %v3208
        %v3210 = vpop.f32.mrf.mxu0
        %3211 = vdwg.mxu0
        %v3212 = vpack.c.bf16 %v3201, %v3198
        %v3213 = vpack.c.bf16 %v3209, %v3206
        %s3214 = scalar_lea.vmem [#allocation13], 64
        %v3215 = vld [vmem:[%s3214] sm:$0xf]
        %v3216 = vld [vmem:[%s3214 + $0x4] sm:$0xf]
        %v3217 = vld [vmem:[%s3214 + $0x8] sm:$0xf]
        %v3218 = vld [vmem:[%s3214 + $0xc] sm:$0xf]
        %3221 = vrot.lane.b32.xlu0 %v3036, 96
        %v3222 = vpop.permute.xlu0 %3221
        %3223 = vrot.lane.b32.xlu0 %v3037, 96
        %v3224 = vpop.permute.xlu0 %3223
        %3227 = vrot.lane.b32.xlu0 %v3038, 96
        %v3228 = vpop.permute.xlu0 %3227
        %3229 = vrot.lane.b32.xlu0 %v3039, 96
        %v3230 = vpop.permute.xlu0 %3229
        %v3232 = vsel %vm1142, %v3222, 0
        %v3235 = vsel %vm1142, %v3224, 0
        %v3238 = vsel %vm1142, %v3228, 0
        %v3241 = vsel %vm1142, %v3230, 0
        %3243 = vmatprep.subr.bf16.mxu0 0
        %3244 = vmatpush1.bf16.xpose.msra.mxu0 0
        %3245 = vmatprep.subr.bf16.mxu0 0
        %3246 = vmatpush1.bf16.xpose.msra.mxu0 0
        %3247 = vmatprep.subr.bf16.mxu0 0
        %3248 = vmatpush1.bf16.xpose.msra.mxu0 0
        %3249 = vmatprep.subr.bf16.mxu0 0
        %3250 = vmatpush1.bf16.xpose.msra.mxu0 0
        %3251 = vmatprep.subr.bf16.mxu0 0
        %3252 = vmatpush1.bf16.xpose.msra.mxu0 0
        %3253 = vmatprep.subr.bf16.mxu0 0
        %3254 = vmatpush1.bf16.xpose.msra.mxu0 0
        %3255 = vmatprep.subr.bf16.mxu0 0
        %3256 = vmatpush1.bf16.xpose.msra.mxu0 %v3241
        %3257 = vmatprep.subr.bf16.mxu0 0
        %3258 = vmatpush1.bf16.xpose.msra.mxu0 %v3238
        %3259 = vmatprep.subr.bf16.mxu0 0
        %3260 = vmatpush2.bf16.xpose.msra.mxu0 0
        %3261 = vmatprep.subr.bf16.mxu0 0
        %3262 = vmatpush2.bf16.xpose.msra.mxu0 0
        %3263 = vmatprep.subr.bf16.mxu0 0
        %3264 = vmatpush2.bf16.xpose.msra.mxu0 0
        %3265 = vmatprep.subr.bf16.mxu0 0
        %3266 = vmatpush2.bf16.xpose.msra.mxu0 0
        %3267 = vmatprep.subr.bf16.mxu0 0
        %3268 = vmatpush2.bf16.xpose.msra.mxu0 0
        %3269 = vmatprep.subr.bf16.mxu0 0
        %3270 = vmatpush2.bf16.xpose.msra.mxu0 0
        %3271 = vmatprep.subr.bf16.mxu0 0
        %3272 = vmatpush2.bf16.xpose.msra.mxu0 0
        %3273 = vmatprep.subr.bf16.mxu0 0
        %3274 = vmatpush2.bf16.xpose.msra.mxu0 0
        %3275 = vmatprep.mubr.bf16.mxu0 0
        %3276 = vmatmul.mubr.bf16.gmra.mxu0 %v3232
        %v3277 = vpop.f32.mrf.mxu0
        %v3278 = vadd.f32 0.0, %v3277
        %v3279 = vpop.f32.mrf.mxu0
        %v3280 = vpop.f32.mrf.mxu0
        %v3281 = vadd.f32 0.0, %v3280
        %v3282 = vpop.f32.mrf.mxu0
        %3283 = vmatprep.mubr.bf16.mxu0 0
        %3284 = vmatmul.mubr.bf16.gmra.mxu0 %v3235
        %v3285 = vpop.f32.mrf.mxu0
        %v3286 = vadd.f32 0.0, %v3285
        %v3287 = vpop.f32.mrf.mxu0
        %v3288 = vpop.f32.mrf.mxu0
        %v3289 = vadd.f32 0.0, %v3288
        %v3290 = vpop.f32.mrf.mxu0
        %3291 = vdwg.mxu0
        %v3292 = vmul.f32 %v3278, 0.17677669
        %v3293 = vmul.f32 %v3281, 0.17677669
        %v3294 = vmul.f32 %v3286, 0.17677669
        %v3295 = vmul.f32 %v3289, 0.17677669
        %v3296 = vadd.f32 %v3292, %v2611
        %v3297 = vadd.f32 %v3293, %v2612
        %v3298 = vadd.f32 %v3294, %v2613
        %v3299 = vadd.f32 %v3295, %v2614
        %v3300 = vsel %vm1142, %v3296, -inf
        %3301 = vmax.xlane.f32.xlu0 %v3300
        %v3302 = vpop.xlane.xlu0 %3301
        %v3303 = vsel %vm1142, %v3297, -inf
        %3304 = vmax.xlane.f32.xlu0 %v3303
        %v3305 = vpop.xlane.xlu0 %3304
        %v3306 = vsel %vm1142, %v3298, -inf
        %3307 = vmax.xlane.f32.xlu0 %v3306
        %v3308 = vpop.xlane.xlu0 %3307
        %v3309 = vsel %vm1142, %v3299, -inf
        %3310 = vmax.xlane.f32.xlu0 %v3309
        %v3311 = vpop.xlane.xlu0 %3310
        %v3312 = vsub.f32 %v3296, %v3302
        %v3313 = vsub.f32 %v3297, %v3305
        %v3314 = vsub.f32 %v3298, %v3308
        %v3315 = vsub.f32 %v3299, %v3311
        %v3316 = vmul.f32 %v3312, 1.442695
        %v3317 = vpow.pop %v3316
        %v3318 = vmul.f32 %v3313, 1.442695
        %v3319 = vpow.pop %v3318
        %v3320 = vmul.f32 %v3314, 1.442695
        %v3321 = vpow.pop %v3320
        %v3322 = vmul.f32 %v3315, 1.442695
        %v3323 = vpow.pop %v3322
        %v3324 = vsel %vm1142, %v3317, 0.0
        %3325 = vadd.xlane.f32.xlu0 %v3324
        %v3326 = vpop.xlane.xlu0 %3325
        %v3327 = vsel %vm1142, %v3319, 0.0
        %3328 = vadd.xlane.f32.xlu0 %v3327
        %v3329 = vpop.xlane.xlu0 %3328
        %v3330 = vsel %vm1142, %v3321, 0.0
        %3331 = vadd.xlane.f32.xlu0 %v3330
        %v3332 = vpop.xlane.xlu0 %3331
        %v3333 = vsel %vm1142, %v3323, 0.0
        %3334 = vadd.xlane.f32.xlu0 %v3333
        %v3335 = vpop.xlane.xlu0 %3334
        %v3336 = vrcp.pop %v3326
        %v3337 = vrcp.pop %v3329
        %v3338 = vrcp.pop %v3332
        %v3339 = vrcp.pop %v3335
        %v3340 = vmul.f32 %v3317, %v3336
        %v3341 = vmul.f32 %v3319, %v3337
        %v3342 = vmul.f32 %v3321, %v3338
        %v3343 = vmul.f32 %v3323, %v3339
        %v3344 = vpack.c.bf16 %v3341, %v3340
        %v3345 = vpack.c.bf16 %v3343, %v3342
        %3348 = vrot.lane.b32.xlu0 %v3040, 96
        %v3349 = vpop.permute.xlu0 %3348
        %3350 = vrot.lane.b32.xlu0 %v3041, 96
        %v3351 = vpop.permute.xlu0 %3350
        %v3355 = vsel %vm1142, %v3344, 0
        %v3358 = vsel %vm1142, %v3345, 0
        %3360 = vmatprep.subr.bf16.mxu0 0
        %3361 = vmatpush1.bf16.msra.mxu0 0
        %3362 = vmatprep.subr.bf16.mxu0 0
        %3363 = vmatpush1.bf16.msra.mxu0 0
        %3364 = vmatprep.subr.bf16.mxu0 0
        %3365 = vmatpush1.bf16.msra.mxu0 0
        %3366 = vmatprep.subr.bf16.mxu0 0
        %3367 = vmatpush1.bf16.msra.mxu0 0
        %3368 = vmatprep.subr.bf16.mxu0 0
        %3369 = vmatpush1.bf16.msra.mxu0 0
        %3370 = vmatprep.subr.bf16.mxu0 0
        %3371 = vmatpush1.bf16.msra.mxu0 0
        %3372 = vmatprep.subr.bf16.mxu0 0
        %3373 = vmatpush1.bf16.msra.mxu0 %v3351
        %3374 = vmatprep.subr.bf16.mxu0 0
        %3375 = vmatpush1.bf16.msra.mxu0 %v3349
        %3376 = vmatprep.subr.bf16.mxu0 0
        %3377 = vmatpush2.bf16.msra.mxu0 0
        %3378 = vmatprep.subr.bf16.mxu0 0
        %3379 = vmatpush2.bf16.msra.mxu0 0
        %3380 = vmatprep.subr.bf16.mxu0 0
        %3381 = vmatpush2.bf16.msra.mxu0 0
        %3382 = vmatprep.subr.bf16.mxu0 0
        %3383 = vmatpush2.bf16.msra.mxu0 0
        %3384 = vmatprep.subr.bf16.mxu0 0
        %3385 = vmatpush2.bf16.msra.mxu0 0
        %3386 = vmatprep.subr.bf16.mxu0 0
        %3387 = vmatpush2.bf16.msra.mxu0 0
        %3388 = vmatprep.subr.bf16.mxu0 0
        %3389 = vmatpush2.bf16.msra.mxu0 0
        %3390 = vmatprep.subr.bf16.mxu0 0
        %3391 = vmatpush2.bf16.msra.mxu0 0
        %3392 = vmatprep.mubr.bf16.mxu0 0
        %3393 = vmatmul.mubr.bf16.gmra.mxu0 %v3355
        %v3394 = vpop.f32.mrf.mxu0
        %v3395 = vadd.f32 0.0, %v3394
        %v3396 = vpop.f32.mrf.mxu0
        %v3397 = vpop.f32.mrf.mxu0
        %v3398 = vadd.f32 0.0, %v3397
        %v3399 = vpop.f32.mrf.mxu0
        %3400 = vmatprep.mubr.bf16.mxu0 0
        %3401 = vmatmul.mubr.bf16.gmra.mxu0 %v3358
        %v3402 = vpop.f32.mrf.mxu0
        %v3403 = vadd.f32 0.0, %v3402
        %v3404 = vpop.f32.mrf.mxu0
        %v3405 = vpop.f32.mrf.mxu0
        %v3406 = vadd.f32 0.0, %v3405
        %v3407 = vpop.f32.mrf.mxu0
        %3408 = vdwg.mxu0
        %v3409 = vpack.c.bf16 %v3398, %v3395
        %v3410 = vpack.c.bf16 %v3406, %v3403
        %s3411 = scalar_lea.vmem [#allocation13], 80
        %v3412 = vld [vmem:[%s3411] sm:$0xf]
        %v3413 = vld [vmem:[%s3411 + $0x4] sm:$0xf]
        %v3414 = vld [vmem:[%s3411 + $0x8] sm:$0xf]
        %v3415 = vld [vmem:[%s3411 + $0xc] sm:$0xf]
        %v3420 = vunpack.c.l.b16 %v3412
        %v3421 = vunpack.c.l.b16 %v3413
        %v3422 = vunpack.c.l.b16 %v3414
        %v3423 = vunpack.c.l.b16 %v3415
        %v3424 = vpack.c.b16 %v3421, %v3420
        %v3425 = vpack.c.b16 %v3423, %v3422
        %v3429 = vsel %vm1142, %v3409, 0
        %v3432 = vsel %vm1142, %v3410, 0
        %3434 = vmatprep.subr.bf16.mxu0 0
        %3435 = vmatpush1.bf16.msra.mxu0 0
        %3436 = vmatprep.subr.bf16.mxu0 0
        %3437 = vmatpush1.bf16.msra.mxu0 0
        %3438 = vmatprep.subr.bf16.mxu0 0
        %3439 = vmatpush1.bf16.msra.mxu0 0
        %3440 = vmatprep.subr.bf16.mxu0 0
        %3441 = vmatpush1.bf16.msra.mxu0 0
        %3442 = vmatprep.subr.bf16.mxu0 0
        %3443 = vmatpush1.bf16.msra.mxu0 0
        %3444 = vmatprep.subr.bf16.mxu0 0
        %3445 = vmatpush1.bf16.msra.mxu0 0
        %3446 = vmatprep.subr.bf16.mxu0 0
        %3447 = vmatpush1.bf16.msra.mxu0 %v3425
        %3448 = vmatprep.subr.bf16.mxu0 0
        %3449 = vmatpush1.bf16.msra.mxu0 %v3424
        %3450 = vmatprep.subr.bf16.mxu0 0
        %3451 = vmatpush2.bf16.msra.mxu0 0
        %3452 = vmatprep.subr.bf16.mxu0 0
        %3453 = vmatpush2.bf16.msra.mxu0 0
        %3454 = vmatprep.subr.bf16.mxu0 0
        %3455 = vmatpush2.bf16.msra.mxu0 0
        %3456 = vmatprep.subr.bf16.mxu0 0
        %3457 = vmatpush2.bf16.msra.mxu0 0
        %3458 = vmatprep.subr.bf16.mxu0 0
        %3459 = vmatpush2.bf16.msra.mxu0 0
        %3460 = vmatprep.subr.bf16.mxu0 0
        %3461 = vmatpush2.bf16.msra.mxu0 0
        %3462 = vmatprep.subr.bf16.mxu0 0
        %3463 = vmatpush2.bf16.msra.mxu0 0
        %3464 = vmatprep.subr.bf16.mxu0 0
        %3465 = vmatpush2.bf16.msra.mxu0 0
        %3466 = vmatprep.mubr.bf16.mxu0 0
        %3467 = vmatmul.mubr.bf16.gmra.mxu0 %v3429
        %v3468 = vpop.f32.mrf.mxu0
        %v3469 = vadd.f32 0.0, %v3468
        %v3470 = vpop.f32.mrf.mxu0
        %v3471 = vpop.f32.mrf.mxu0
        %v3472 = vadd.f32 0.0, %v3471
        %v3473 = vpop.f32.mrf.mxu0
        %3474 = vmatprep.mubr.bf16.mxu0 0
        %3475 = vmatmul.mubr.bf16.gmra.mxu0 %v3432
        %v3476 = vpop.f32.mrf.mxu0
        %v3477 = vadd.f32 0.0, %v3476
        %v3478 = vpop.f32.mrf.mxu0
        %v3479 = vpop.f32.mrf.mxu0
        %v3480 = vadd.f32 0.0, %v3479
        %v3481 = vpop.f32.mrf.mxu0
        %3482 = vdwg.mxu0
        %v3487 = vunpack.c.l.b16 %v3215
        %v3488 = vunpack.c.l.b16 %v3216
        %v3489 = vunpack.c.l.b16 %v3217
        %v3490 = vunpack.c.l.b16 %v3218
        %v3491 = vpack.c.b16 %v3488, %v3487
        %v3492 = vpack.c.b16 %v3490, %v3489
        %v3496 = vsel %vm1142, %v3212, 0
        %v3499 = vsel %vm1142, %v3213, 0
        %3501 = vmatprep.subr.bf16.mxu0 0
        %3502 = vmatpush1.bf16.msra.mxu0 0
        %3503 = vmatprep.subr.bf16.mxu0 0
        %3504 = vmatpush1.bf16.msra.mxu0 0
        %3505 = vmatprep.subr.bf16.mxu0 0
        %3506 = vmatpush1.bf16.msra.mxu0 0
        %3507 = vmatprep.subr.bf16.mxu0 0
        %3508 = vmatpush1.bf16.msra.mxu0 0
        %3509 = vmatprep.subr.bf16.mxu0 0
        %3510 = vmatpush1.bf16.msra.mxu0 0
        %3511 = vmatprep.subr.bf16.mxu0 0
        %3512 = vmatpush1.bf16.msra.mxu0 0
        %3513 = vmatprep.subr.bf16.mxu0 0
        %3514 = vmatpush1.bf16.msra.mxu0 %v3492
        %3515 = vmatprep.subr.bf16.mxu0 0
        %3516 = vmatpush1.bf16.msra.mxu0 %v3491
        %3517 = vmatprep.subr.bf16.mxu0 0
        %3518 = vmatpush2.bf16.msra.mxu0 0
        %3519 = vmatprep.subr.bf16.mxu0 0
        %3520 = vmatpush2.bf16.msra.mxu0 0
        %3521 = vmatprep.subr.bf16.mxu0 0
        %3522 = vmatpush2.bf16.msra.mxu0 0
        %3523 = vmatprep.subr.bf16.mxu0 0
        %3524 = vmatpush2.bf16.msra.mxu0 0
        %3525 = vmatprep.subr.bf16.mxu0 0
        %3526 = vmatpush2.bf16.msra.mxu0 0
        %3527 = vmatprep.subr.bf16.mxu0 0
        %3528 = vmatpush2.bf16.msra.mxu0 0
        %3529 = vmatprep.subr.bf16.mxu0 0
        %3530 = vmatpush2.bf16.msra.mxu0 0
        %3531 = vmatprep.subr.bf16.mxu0 0
        %3532 = vmatpush2.bf16.msra.mxu0 0
        %3533 = vmatprep.mubr.bf16.mxu0 0
        %3534 = vmatmul.mubr.bf16.gmra.mxu0 %v3496
        %v3535 = vpop.f32.mrf.mxu0
        %v3536 = vadd.f32 %v3469, %v3535
        %v3537 = vpop.f32.mrf.mxu0
        %v3538 = vpop.f32.mrf.mxu0
        %v3539 = vadd.f32 %v3472, %v3538
        %v3540 = vpop.f32.mrf.mxu0
        %3541 = vmatprep.mubr.bf16.mxu0 0
        %3542 = vmatmul.mubr.bf16.gmra.mxu0 %v3499
        %v3543 = vpop.f32.mrf.mxu0
        %v3544 = vadd.f32 %v3477, %v3543
        %v3545 = vpop.f32.mrf.mxu0
        %v3546 = vpop.f32.mrf.mxu0
        %v3547 = vadd.f32 %v3480, %v3546
        %v3548 = vpop.f32.mrf.mxu0
        %3549 = vdwg.mxu0
        %3550 = vrot.lane.b32.xlu0 %v3036, 64
        %v3551 = vpop.permute.xlu0 %3550
        %3552 = vrot.lane.b32.xlu0 %v3037, 64
        %v3553 = vpop.permute.xlu0 %3552
        %3554 = vrot.lane.b32.xlu0 %v3038, 64
        %v3555 = vpop.permute.xlu0 %3554
        %3556 = vrot.lane.b32.xlu0 %v3039, 64
        %v3557 = vpop.permute.xlu0 %3556
        %v3559 = vsel %vm1142, %v3551, 0
        %v3562 = vsel %vm1142, %v3553, 0
        %v3565 = vsel %vm1142, %v3555, 0
        %v3568 = vsel %vm1142, %v3557, 0
        %3570 = vmatprep.subr.bf16.mxu0 0
        %3571 = vmatpush1.bf16.xpose.msra.mxu0 0
        %3572 = vmatprep.subr.bf16.mxu0 0
        %3573 = vmatpush1.bf16.xpose.msra.mxu0 0
        %3574 = vmatprep.subr.bf16.mxu0 0
        %3575 = vmatpush1.bf16.xpose.msra.mxu0 0
        %3576 = vmatprep.subr.bf16.mxu0 0
        %3577 = vmatpush1.bf16.xpose.msra.mxu0 0
        %3578 = vmatprep.subr.bf16.mxu0 0
        %3579 = vmatpush1.bf16.xpose.msra.mxu0 0
        %3580 = vmatprep.subr.bf16.mxu0 0
        %3581 = vmatpush1.bf16.xpose.msra.mxu0 0
        %3582 = vmatprep.subr.bf16.mxu0 0
        %3583 = vmatpush1.bf16.xpose.msra.mxu0 %v3568
        %3584 = vmatprep.subr.bf16.mxu0 0
        %3585 = vmatpush1.bf16.xpose.msra.mxu0 %v3565
        %3586 = vmatprep.subr.bf16.mxu0 0
        %3587 = vmatpush2.bf16.xpose.msra.mxu0 0
        %3588 = vmatprep.subr.bf16.mxu0 0
        %3589 = vmatpush2.bf16.xpose.msra.mxu0 0
        %3590 = vmatprep.subr.bf16.mxu0 0
        %3591 = vmatpush2.bf16.xpose.msra.mxu0 0
        %3592 = vmatprep.subr.bf16.mxu0 0
        %3593 = vmatpush2.bf16.xpose.msra.mxu0 0
        %3594 = vmatprep.subr.bf16.mxu0 0
        %3595 = vmatpush2.bf16.xpose.msra.mxu0 0
        %3596 = vmatprep.subr.bf16.mxu0 0
        %3597 = vmatpush2.bf16.xpose.msra.mxu0 0
        %3598 = vmatprep.subr.bf16.mxu0 0
        %3599 = vmatpush2.bf16.xpose.msra.mxu0 0
        %3600 = vmatprep.subr.bf16.mxu0 0
        %3601 = vmatpush2.bf16.xpose.msra.mxu0 0
        %3602 = vmatprep.mubr.bf16.mxu0 0
        %3603 = vmatmul.mubr.bf16.gmra.mxu0 %v3559
        %v3604 = vpop.f32.mrf.mxu0
        %v3605 = vadd.f32 0.0, %v3604
        %v3606 = vpop.f32.mrf.mxu0
        %v3607 = vpop.f32.mrf.mxu0
        %v3608 = vadd.f32 0.0, %v3607
        %v3609 = vpop.f32.mrf.mxu0
        %3610 = vmatprep.mubr.bf16.mxu0 0
        %3611 = vmatmul.mubr.bf16.gmra.mxu0 %v3562
        %v3612 = vpop.f32.mrf.mxu0
        %v3613 = vadd.f32 0.0, %v3612
        %v3614 = vpop.f32.mrf.mxu0
        %v3615 = vpop.f32.mrf.mxu0
        %v3616 = vadd.f32 0.0, %v3615
        %v3617 = vpop.f32.mrf.mxu0
        %3618 = vdwg.mxu0
        %v3619 = vmul.f32 %v3605, 0.17677669
        %v3620 = vmul.f32 %v3608, 0.17677669
        %v3621 = vmul.f32 %v3613, 0.17677669
        %v3622 = vmul.f32 %v3616, 0.17677669
        %v3623 = vadd.f32 %v3619, %v2611
        %v3624 = vadd.f32 %v3620, %v2612
        %v3625 = vadd.f32 %v3621, %v2613
        %v3626 = vadd.f32 %v3622, %v2614
        %v3627 = vsel %vm1142, %v3623, -inf
        %3628 = vmax.xlane.f32.xlu0 %v3627
        %v3629 = vpop.xlane.xlu0 %3628
        %v3630 = vsel %vm1142, %v3624, -inf
        %3631 = vmax.xlane.f32.xlu0 %v3630
        %v3632 = vpop.xlane.xlu0 %3631
        %v3633 = vsel %vm1142, %v3625, -inf
        %3634 = vmax.xlane.f32.xlu0 %v3633
        %v3635 = vpop.xlane.xlu0 %3634
        %v3636 = vsel %vm1142, %v3626, -inf
        %3637 = vmax.xlane.f32.xlu0 %v3636
        %v3638 = vpop.xlane.xlu0 %3637
        %v3639 = vsub.f32 %v3623, %v3629
        %v3640 = vsub.f32 %v3624, %v3632
        %v3641 = vsub.f32 %v3625, %v3635
        %v3642 = vsub.f32 %v3626, %v3638
        %v3643 = vmul.f32 %v3639, 1.442695
        %v3644 = vpow.pop %v3643
        %v3645 = vmul.f32 %v3640, 1.442695
        %v3646 = vpow.pop %v3645
        %v3647 = vmul.f32 %v3641, 1.442695
        %v3648 = vpow.pop %v3647
        %v3649 = vmul.f32 %v3642, 1.442695
        %v3650 = vpow.pop %v3649
        %v3651 = vsel %vm1142, %v3644, 0.0
        %3652 = vadd.xlane.f32.xlu0 %v3651
        %v3653 = vpop.xlane.xlu0 %3652
        %v3654 = vsel %vm1142, %v3646, 0.0
        %3655 = vadd.xlane.f32.xlu0 %v3654
        %v3656 = vpop.xlane.xlu0 %3655
        %v3657 = vsel %vm1142, %v3648, 0.0
        %3658 = vadd.xlane.f32.xlu0 %v3657
        %v3659 = vpop.xlane.xlu0 %3658
        %v3660 = vsel %vm1142, %v3650, 0.0
        %3661 = vadd.xlane.f32.xlu0 %v3660
        %v3662 = vpop.xlane.xlu0 %3661
        %v3663 = vrcp.pop %v3653
        %v3664 = vrcp.pop %v3656
        %v3665 = vrcp.pop %v3659
        %v3666 = vrcp.pop %v3662
        %v3667 = vmul.f32 %v3644, %v3663
        %v3668 = vmul.f32 %v3646, %v3664
        %v3669 = vmul.f32 %v3648, %v3665
        %v3670 = vmul.f32 %v3650, %v3666
        %v3671 = vpack.c.bf16 %v3668, %v3667
        %v3672 = vpack.c.bf16 %v3670, %v3669
        %3673 = vrot.lane.b32.xlu0 %v3040, 64
        %v3674 = vpop.permute.xlu0 %3673
        %3675 = vrot.lane.b32.xlu0 %v3041, 64
        %v3676 = vpop.permute.xlu0 %3675
        %v3680 = vsel %vm1142, %v3671, 0
        %v3683 = vsel %vm1142, %v3672, 0
        %3685 = vmatprep.subr.bf16.mxu0 0
        %3686 = vmatpush1.bf16.msra.mxu0 0
        %3687 = vmatprep.subr.bf16.mxu0 0
        %3688 = vmatpush1.bf16.msra.mxu0 0
        %3689 = vmatprep.subr.bf16.mxu0 0
        %3690 = vmatpush1.bf16.msra.mxu0 0
        %3691 = vmatprep.subr.bf16.mxu0 0
        %3692 = vmatpush1.bf16.msra.mxu0 0
        %3693 = vmatprep.subr.bf16.mxu0 0
        %3694 = vmatpush1.bf16.msra.mxu0 0
        %3695 = vmatprep.subr.bf16.mxu0 0
        %3696 = vmatpush1.bf16.msra.mxu0 0
        %3697 = vmatprep.subr.bf16.mxu0 0
        %3698 = vmatpush1.bf16.msra.mxu0 %v3676
        %3699 = vmatprep.subr.bf16.mxu0 0
        %3700 = vmatpush1.bf16.msra.mxu0 %v3674
        %3701 = vmatprep.subr.bf16.mxu0 0
        %3702 = vmatpush2.bf16.msra.mxu0 0
        %3703 = vmatprep.subr.bf16.mxu0 0
        %3704 = vmatpush2.bf16.msra.mxu0 0
        %3705 = vmatprep.subr.bf16.mxu0 0
        %3706 = vmatpush2.bf16.msra.mxu0 0
        %3707 = vmatprep.subr.bf16.mxu0 0
        %3708 = vmatpush2.bf16.msra.mxu0 0
        %3709 = vmatprep.subr.bf16.mxu0 0
        %3710 = vmatpush2.bf16.msra.mxu0 0
        %3711 = vmatprep.subr.bf16.mxu0 0
        %3712 = vmatpush2.bf16.msra.mxu0 0
        %3713 = vmatprep.subr.bf16.mxu0 0
        %3714 = vmatpush2.bf16.msra.mxu0 0
        %3715 = vmatprep.subr.bf16.mxu0 0
        %3716 = vmatpush2.bf16.msra.mxu0 0
        %3717 = vmatprep.mubr.bf16.mxu0 0
        %3718 = vmatmul.mubr.bf16.gmra.mxu0 %v3680
        %v3719 = vpop.f32.mrf.mxu0
        %v3720 = vadd.f32 0.0, %v3719
        %v3721 = vpop.f32.mrf.mxu0
        %v3722 = vpop.f32.mrf.mxu0
        %v3723 = vadd.f32 0.0, %v3722
        %v3724 = vpop.f32.mrf.mxu0
        %3725 = vmatprep.mubr.bf16.mxu0 0
        %3726 = vmatmul.mubr.bf16.gmra.mxu0 %v3683
        %v3727 = vpop.f32.mrf.mxu0
        %v3728 = vadd.f32 0.0, %v3727
        %v3729 = vpop.f32.mrf.mxu0
        %v3730 = vpop.f32.mrf.mxu0
        %v3731 = vadd.f32 0.0, %v3730
        %v3732 = vpop.f32.mrf.mxu0
        %3733 = vdwg.mxu0
        %v3734 = vpack.c.bf16 %v3723, %v3720
        %v3735 = vpack.c.bf16 %v3731, %v3728
        %s3736 = scalar_lea.vmem [#allocation13], 96
        %v3737 = vld [vmem:[%s3736] sm:$0xf]
        %v3738 = vld [vmem:[%s3736 + $0x4] sm:$0xf]
        %v3739 = vld [vmem:[%s3736 + $0x8] sm:$0xf]
        %v3740 = vld [vmem:[%s3736 + $0xc] sm:$0xf]
        %v3745 = vunpack.c.l.b16 %v3737
        %v3746 = vunpack.c.l.b16 %v3738
        %v3747 = vunpack.c.l.b16 %v3739
        %v3748 = vunpack.c.l.b16 %v3740
        %v3749 = vpack.c.b16 %v3746, %v3745
        %v3750 = vpack.c.b16 %v3748, %v3747
        %v3754 = vsel %vm1142, %v3734, 0
        %v3757 = vsel %vm1142, %v3735, 0
        %3759 = vmatprep.subr.bf16.mxu0 0
        %3760 = vmatpush1.bf16.msra.mxu0 0
        %3761 = vmatprep.subr.bf16.mxu0 0
        %3762 = vmatpush1.bf16.msra.mxu0 0
        %3763 = vmatprep.subr.bf16.mxu0 0
        %3764 = vmatpush1.bf16.msra.mxu0 0
        %3765 = vmatprep.subr.bf16.mxu0 0
        %3766 = vmatpush1.bf16.msra.mxu0 0
        %3767 = vmatprep.subr.bf16.mxu0 0
        %3768 = vmatpush1.bf16.msra.mxu0 0
        %3769 = vmatprep.subr.bf16.mxu0 0
        %3770 = vmatpush1.bf16.msra.mxu0 0
        %3771 = vmatprep.subr.bf16.mxu0 0
        %3772 = vmatpush1.bf16.msra.mxu0 %v3750
        %3773 = vmatprep.subr.bf16.mxu0 0
        %3774 = vmatpush1.bf16.msra.mxu0 %v3749
        %3775 = vmatprep.subr.bf16.mxu0 0
        %3776 = vmatpush2.bf16.msra.mxu0 0
        %3777 = vmatprep.subr.bf16.mxu0 0
        %3778 = vmatpush2.bf16.msra.mxu0 0
        %3779 = vmatprep.subr.bf16.mxu0 0
        %3780 = vmatpush2.bf16.msra.mxu0 0
        %3781 = vmatprep.subr.bf16.mxu0 0
        %3782 = vmatpush2.bf16.msra.mxu0 0
        %3783 = vmatprep.subr.bf16.mxu0 0
        %3784 = vmatpush2.bf16.msra.mxu0 0
        %3785 = vmatprep.subr.bf16.mxu0 0
        %3786 = vmatpush2.bf16.msra.mxu0 0
        %3787 = vmatprep.subr.bf16.mxu0 0
        %3788 = vmatpush2.bf16.msra.mxu0 0
        %3789 = vmatprep.subr.bf16.mxu0 0
        %3790 = vmatpush2.bf16.msra.mxu0 0
        %3791 = vmatprep.mubr.bf16.mxu0 0
        %3792 = vmatmul.mubr.bf16.gmra.mxu0 %v3754
        %v3793 = vpop.f32.mrf.mxu0
        %v3794 = vadd.f32 0.0, %v3793
        %v3795 = vpop.f32.mrf.mxu0
        %v3796 = vpop.f32.mrf.mxu0
        %v3797 = vadd.f32 0.0, %v3796
        %v3798 = vpop.f32.mrf.mxu0
        %3799 = vmatprep.mubr.bf16.mxu0 0
        %3800 = vmatmul.mubr.bf16.gmra.mxu0 %v3757
        %v3801 = vpop.f32.mrf.mxu0
        %v3802 = vadd.f32 0.0, %v3801
        %v3803 = vpop.f32.mrf.mxu0
        %v3804 = vpop.f32.mrf.mxu0
        %v3805 = vadd.f32 0.0, %v3804
        %v3806 = vpop.f32.mrf.mxu0
        %3807 = vdwg.mxu0
        %v3808 = vadd.f32 %v3536, %v3794
        %v3809 = vadd.f32 %v3539, %v3797
        %v3810 = vadd.f32 %v3544, %v3802
        %v3811 = vadd.f32 %v3547, %v3805
        %3812 = vrot.lane.b32.xlu0 %v3036, 32
        %v3813 = vpop.permute.xlu0 %3812
        %3814 = vrot.lane.b32.xlu0 %v3037, 32
        %v3815 = vpop.permute.xlu0 %3814
        %3816 = vrot.lane.b32.xlu0 %v3038, 32
        %v3817 = vpop.permute.xlu0 %3816
        %3818 = vrot.lane.b32.xlu0 %v3039, 32
        %v3819 = vpop.permute.xlu0 %3818
        %v3821 = vsel %vm1142, %v3813, 0
        %v3824 = vsel %vm1142, %v3815, 0
        %v3827 = vsel %vm1142, %v3817, 0
        %v3830 = vsel %vm1142, %v3819, 0
        %3832 = vmatprep.subr.bf16.mxu0 0
        %3833 = vmatpush1.bf16.xpose.msra.mxu0 0
        %3834 = vmatprep.subr.bf16.mxu0 0
        %3835 = vmatpush1.bf16.xpose.msra.mxu0 0
        %3836 = vmatprep.subr.bf16.mxu0 0
        %3837 = vmatpush1.bf16.xpose.msra.mxu0 0
        %3838 = vmatprep.subr.bf16.mxu0 0
        %3839 = vmatpush1.bf16.xpose.msra.mxu0 0
        %3840 = vmatprep.subr.bf16.mxu0 0
        %3841 = vmatpush1.bf16.xpose.msra.mxu0 0
        %3842 = vmatprep.subr.bf16.mxu0 0
        %3843 = vmatpush1.bf16.xpose.msra.mxu0 0
        %3844 = vmatprep.subr.bf16.mxu0 0
        %3845 = vmatpush1.bf16.xpose.msra.mxu0 %v3830
        %3846 = vmatprep.subr.bf16.mxu0 0
        %3847 = vmatpush1.bf16.xpose.msra.mxu0 %v3827
        %3848 = vmatprep.subr.bf16.mxu0 0
        %3849 = vmatpush2.bf16.xpose.msra.mxu0 0
        %3850 = vmatprep.subr.bf16.mxu0 0
        %3851 = vmatpush2.bf16.xpose.msra.mxu0 0
        %3852 = vmatprep.subr.bf16.mxu0 0
        %3853 = vmatpush2.bf16.xpose.msra.mxu0 0
        %3854 = vmatprep.subr.bf16.mxu0 0
        %3855 = vmatpush2.bf16.xpose.msra.mxu0 0
        %3856 = vmatprep.subr.bf16.mxu0 0
        %3857 = vmatpush2.bf16.xpose.msra.mxu0 0
        %3858 = vmatprep.subr.bf16.mxu0 0
        %3859 = vmatpush2.bf16.xpose.msra.mxu0 0
        %3860 = vmatprep.subr.bf16.mxu0 0
        %3861 = vmatpush2.bf16.xpose.msra.mxu0 0
        %3862 = vmatprep.subr.bf16.mxu0 0
        %3863 = vmatpush2.bf16.xpose.msra.mxu0 0
        %3864 = vmatprep.mubr.bf16.mxu0 0
        %3865 = vmatmul.mubr.bf16.gmra.mxu0 %v3821
        %v3866 = vpop.f32.mrf.mxu0
        %v3867 = vadd.f32 0.0, %v3866
        %v3868 = vpop.f32.mrf.mxu0
        %v3869 = vpop.f32.mrf.mxu0
        %v3870 = vadd.f32 0.0, %v3869
        %v3871 = vpop.f32.mrf.mxu0
        %3872 = vmatprep.mubr.bf16.mxu0 0
        %3873 = vmatmul.mubr.bf16.gmra.mxu0 %v3824
        %v3874 = vpop.f32.mrf.mxu0
        %v3875 = vadd.f32 0.0, %v3874
        %v3876 = vpop.f32.mrf.mxu0
        %v3877 = vpop.f32.mrf.mxu0
        %v3878 = vadd.f32 0.0, %v3877
        %v3879 = vpop.f32.mrf.mxu0
        %3880 = vdwg.mxu0
        %v3881 = vmul.f32 %v3867, 0.17677669
        %v3882 = vmul.f32 %v3870, 0.17677669
        %v3883 = vmul.f32 %v3875, 0.17677669
        %v3884 = vmul.f32 %v3878, 0.17677669
        %v3885 = vadd.f32 %v3881, %v2611
        %v3886 = vadd.f32 %v3882, %v2612
        %v3887 = vadd.f32 %v3883, %v2613
        %v3888 = vadd.f32 %v3884, %v2614
        %v3889 = vsel %vm1142, %v3885, -inf
        %3890 = vmax.xlane.f32.xlu0 %v3889
        %v3891 = vpop.xlane.xlu0 %3890
        %v3892 = vsel %vm1142, %v3886, -inf
        %3893 = vmax.xlane.f32.xlu0 %v3892
        %v3894 = vpop.xlane.xlu0 %3893
        %v3895 = vsel %vm1142, %v3887, -inf
        %3896 = vmax.xlane.f32.xlu0 %v3895
        %v3897 = vpop.xlane.xlu0 %3896
        %v3898 = vsel %vm1142, %v3888, -inf
        %3899 = vmax.xlane.f32.xlu0 %v3898
        %v3900 = vpop.xlane.xlu0 %3899
        %v3901 = vsub.f32 %v3885, %v3891
        %v3902 = vsub.f32 %v3886, %v3894
        %v3903 = vsub.f32 %v3887, %v3897
        %v3904 = vsub.f32 %v3888, %v3900
        %v3905 = vmul.f32 %v3901, 1.442695
        %v3906 = vpow.pop %v3905
        %v3907 = vmul.f32 %v3902, 1.442695
        %v3908 = vpow.pop %v3907
        %v3909 = vmul.f32 %v3903, 1.442695
        %v3910 = vpow.pop %v3909
        %v3911 = vmul.f32 %v3904, 1.442695
        %v3912 = vpow.pop %v3911
        %v3913 = vsel %vm1142, %v3906, 0.0
        %3914 = vadd.xlane.f32.xlu0 %v3913
        %v3915 = vpop.xlane.xlu0 %3914
        %v3916 = vsel %vm1142, %v3908, 0.0
        %3917 = vadd.xlane.f32.xlu0 %v3916
        %v3918 = vpop.xlane.xlu0 %3917
        %v3919 = vsel %vm1142, %v3910, 0.0
        %3920 = vadd.xlane.f32.xlu0 %v3919
        %v3921 = vpop.xlane.xlu0 %3920
        %v3922 = vsel %vm1142, %v3912, 0.0
        %3923 = vadd.xlane.f32.xlu0 %v3922
        %v3924 = vpop.xlane.xlu0 %3923
        %v3925 = vrcp.pop %v3915
        %v3926 = vrcp.pop %v3918
        %v3927 = vrcp.pop %v3921
        %v3928 = vrcp.pop %v3924
        %v3929 = vmul.f32 %v3906, %v3925
        %v3930 = vmul.f32 %v3908, %v3926
        %v3931 = vmul.f32 %v3910, %v3927
        %v3932 = vmul.f32 %v3912, %v3928
        %v3933 = vpack.c.bf16 %v3930, %v3929
        %v3934 = vpack.c.bf16 %v3932, %v3931
        %3935 = vrot.lane.b32.xlu0 %v3040, 32
        %v3936 = vpop.permute.xlu0 %3935
        %3937 = vrot.lane.b32.xlu0 %v3041, 32
        %v3938 = vpop.permute.xlu0 %3937
        %v3942 = vsel %vm1142, %v3933, 0
        %v3945 = vsel %vm1142, %v3934, 0
        %3947 = vmatprep.subr.bf16.mxu0 0
        %3948 = vmatpush1.bf16.msra.mxu0 0
        %3949 = vmatprep.subr.bf16.mxu0 0
        %3950 = vmatpush1.bf16.msra.mxu0 0
        %3951 = vmatprep.subr.bf16.mxu0 0
        %3952 = vmatpush1.bf16.msra.mxu0 0
        %3953 = vmatprep.subr.bf16.mxu0 0
        %3954 = vmatpush1.bf16.msra.mxu0 0
        %3955 = vmatprep.subr.bf16.mxu0 0
        %3956 = vmatpush1.bf16.msra.mxu0 0
        %3957 = vmatprep.subr.bf16.mxu0 0
        %3958 = vmatpush1.bf16.msra.mxu0 0
        %3959 = vmatprep.subr.bf16.mxu0 0
        %3960 = vmatpush1.bf16.msra.mxu0 %v3938
        %3961 = vmatprep.subr.bf16.mxu0 0
        %3962 = vmatpush1.bf16.msra.mxu0 %v3936
        %3963 = vmatprep.subr.bf16.mxu0 0
        %3964 = vmatpush2.bf16.msra.mxu0 0
        %3965 = vmatprep.subr.bf16.mxu0 0
        %3966 = vmatpush2.bf16.msra.mxu0 0
        %3967 = vmatprep.subr.bf16.mxu0 0
        %3968 = vmatpush2.bf16.msra.mxu0 0
        %3969 = vmatprep.subr.bf16.mxu0 0
        %3970 = vmatpush2.bf16.msra.mxu0 0
        %3971 = vmatprep.subr.bf16.mxu0 0
        %3972 = vmatpush2.bf16.msra.mxu0 0
        %3973 = vmatprep.subr.bf16.mxu0 0
        %3974 = vmatpush2.bf16.msra.mxu0 0
        %3975 = vmatprep.subr.bf16.mxu0 0
        %3976 = vmatpush2.bf16.msra.mxu0 0
        %3977 = vmatprep.subr.bf16.mxu0 0
        %3978 = vmatpush2.bf16.msra.mxu0 0
        %3979 = vmatprep.mubr.bf16.mxu0 0
        %3980 = vmatmul.mubr.bf16.gmra.mxu0 %v3942
        %v3981 = vpop.f32.mrf.mxu0
        %v3982 = vadd.f32 0.0, %v3981
        %v3983 = vpop.f32.mrf.mxu0
        %v3984 = vpop.f32.mrf.mxu0
        %v3985 = vadd.f32 0.0, %v3984
        %v3986 = vpop.f32.mrf.mxu0
        %3987 = vmatprep.mubr.bf16.mxu0 0
        %3988 = vmatmul.mubr.bf16.gmra.mxu0 %v3945
        %v3989 = vpop.f32.mrf.mxu0
        %v3990 = vadd.f32 0.0, %v3989
        %v3991 = vpop.f32.mrf.mxu0
        %v3992 = vpop.f32.mrf.mxu0
        %v3993 = vadd.f32 0.0, %v3992
        %v3994 = vpop.f32.mrf.mxu0
        %3995 = vdwg.mxu0
        %v3996 = vpack.c.bf16 %v3985, %v3982
        %v3997 = vpack.c.bf16 %v3993, %v3990
        %s3998 = scalar_lea.vmem [#allocation13], 112
        %v3999 = vld [vmem:[%s3998] sm:$0xf]
        %v4000 = vld [vmem:[%s3998 + $0x4] sm:$0xf]
        %v4001 = vld [vmem:[%s3998 + $0x8] sm:$0xf]
        %v4002 = vld [vmem:[%s3998 + $0xc] sm:$0xf]
        %v4007 = vunpack.c.l.b16 %v3999
        %v4008 = vunpack.c.l.b16 %v4000
        %v4009 = vunpack.c.l.b16 %v4001
        %v4010 = vunpack.c.l.b16 %v4002
        %v4011 = vpack.c.b16 %v4008, %v4007
        %v4012 = vpack.c.b16 %v4010, %v4009
        %v4016 = vsel %vm1142, %v3996, 0
        %v4019 = vsel %vm1142, %v3997, 0
        %4021 = vmatprep.subr.bf16.mxu0 0
        %4022 = vmatpush1.bf16.msra.mxu0 0
        %4023 = vmatprep.subr.bf16.mxu0 0
        %4024 = vmatpush1.bf16.msra.mxu0 0
        %4025 = vmatprep.subr.bf16.mxu0 0
        %4026 = vmatpush1.bf16.msra.mxu0 0
        %4027 = vmatprep.subr.bf16.mxu0 0
        %4028 = vmatpush1.bf16.msra.mxu0 0
        %4029 = vmatprep.subr.bf16.mxu0 0
        %4030 = vmatpush1.bf16.msra.mxu0 0
        %4031 = vmatprep.subr.bf16.mxu0 0
        %4032 = vmatpush1.bf16.msra.mxu0 0
        %4033 = vmatprep.subr.bf16.mxu0 0
        %4034 = vmatpush1.bf16.msra.mxu0 %v4012
        %4035 = vmatprep.subr.bf16.mxu0 0
        %4036 = vmatpush1.bf16.msra.mxu0 %v4011
        %4037 = vmatprep.subr.bf16.mxu0 0
        %4038 = vmatpush2.bf16.msra.mxu0 0
        %4039 = vmatprep.subr.bf16.mxu0 0
        %4040 = vmatpush2.bf16.msra.mxu0 0
        %4041 = vmatprep.subr.bf16.mxu0 0
        %4042 = vmatpush2.bf16.msra.mxu0 0
        %4043 = vmatprep.subr.bf16.mxu0 0
        %4044 = vmatpush2.bf16.msra.mxu0 0
        %4045 = vmatprep.subr.bf16.mxu0 0
        %4046 = vmatpush2.bf16.msra.mxu0 0
        %4047 = vmatprep.subr.bf16.mxu0 0
        %4048 = vmatpush2.bf16.msra.mxu0 0
        %4049 = vmatprep.subr.bf16.mxu0 0
        %4050 = vmatpush2.bf16.msra.mxu0 0
        %4051 = vmatprep.subr.bf16.mxu0 0
        %4052 = vmatpush2.bf16.msra.mxu0 0
        %4053 = vmatprep.mubr.bf16.mxu0 0
        %4054 = vmatmul.mubr.bf16.gmra.mxu0 %v4016
        %v4055 = vpop.f32.mrf.mxu0
        %v4056 = vadd.f32 0.0, %v4055
        %v4057 = vpop.f32.mrf.mxu0
        %v4058 = vpop.f32.mrf.mxu0
        %v4059 = vadd.f32 0.0, %v4058
        %v4060 = vpop.f32.mrf.mxu0
        %4061 = vmatprep.mubr.bf16.mxu0 0
        %4062 = vmatmul.mubr.bf16.gmra.mxu0 %v4019
        %v4063 = vpop.f32.mrf.mxu0
        %v4064 = vadd.f32 0.0, %v4063
        %v4065 = vpop.f32.mrf.mxu0
        %v4066 = vpop.f32.mrf.mxu0
        %v4067 = vadd.f32 0.0, %v4066
        %v4068 = vpop.f32.mrf.mxu0
        %4069 = vdwg.mxu0
        %v4070 = vadd.f32 %v3808, %v4056
        %v4071 = vadd.f32 %v3809, %v4059
        %v4072 = vadd.f32 %v3810, %v4064
        %v4073 = vadd.f32 %v3811, %v4067
        %v4074 = vadd.f32 %v2606, %v4070
        %v4075 = vadd.f32 %v2607, %v4071
        %v4076 = vadd.f32 %v2608, %v4072
        %v4077 = vadd.f32 %v2609, %v4073
        %v4078 = vld [vmem:[%s11 + $0x1] sm:$0x1]
        %v4079 = vlaneseq
        %v4080 = vshrl.u32 %v4079, 7
        %v4081 = vsub.s32 0, %v4080
        %v4082 = vrot.slane %v4078, %v4081
        %v4083 = vadd.f32 %v4074, %v4082
        %v4084 = vadd.f32 %v4075, %v4082
        %v4085 = vadd.f32 %v4076, %v4082
        %v4086 = vadd.f32 %v4077, %v4082
        %v4087 = vld [vmem:[%s12 + $0x1] sm:$0x1]
        %v4088 = vld [vmem:[%s13 + $0x1] sm:$0x1]
        %4089 = vadd.xlane.f32.xlu0 %v4083
        %v4090 = vpop.xlane.xlu0 %4089
        %4091 = vadd.xlane.f32.xlu0 %v4084
        %v4092 = vpop.xlane.xlu0 %4091
        %4093 = vadd.xlane.f32.xlu0 %v4085
        %v4094 = vpop.xlane.xlu0 %4093
        %4095 = vadd.xlane.f32.xlu0 %v4086
        %v4096 = vpop.xlane.xlu0 %4095
        %v4097 = vmul.f32 %v4090, %v727
        %v4098 = vmul.f32 %v4092, %v727
        %v4099 = vmul.f32 %v4094, %v727
        %v4100 = vmul.f32 %v4096, %v727
        %v4101 = vsub.f32 %v4083, %v4097
        %v4102 = vsub.f32 %v4084, %v4098
        %v4103 = vsub.f32 %v4085, %v4099
        %v4104 = vsub.f32 %v4086, %v4100
        %v4105 = vmul.f32 %v4101, %v4101
        %v4106 = vmul.f32 %v4102, %v4102
        %v4107 = vmul.f32 %v4103, %v4103
        %v4108 = vmul.f32 %v4104, %v4104
        %4109 = vadd.xlane.f32.xlu0 %v4105
        %v4110 = vpop.xlane.xlu0 %4109
        %4111 = vadd.xlane.f32.xlu0 %v4106
        %v4112 = vpop.xlane.xlu0 %4111
        %4113 = vadd.xlane.f32.xlu0 %v4107
        %v4114 = vpop.xlane.xlu0 %4113
        %4115 = vadd.xlane.f32.xlu0 %v4108
        %v4116 = vpop.xlane.xlu0 %4115
        %v4117 = vmul.f32 %v4110, %v727
        %v4118 = vmul.f32 %v4112, %v727
        %v4119 = vmul.f32 %v4114, %v727
        %v4120 = vmul.f32 %v4116, %v727
        %v4121 = vadd.f32 %v4117, 1e-05
        %v4122 = vadd.f32 %v4118, 1e-05
        %v4123 = vadd.f32 %v4119, 1e-05
        %v4124 = vadd.f32 %v4120, 1e-05
        %v4125 = vrsqrt.pop %v4121
        %v4126 = vrsqrt.pop %v4122
        %v4127 = vrsqrt.pop %v4123
        %v4128 = vrsqrt.pop %v4124
        %v4129 = vmul.f32 %v4101, %v4125
        %v4130 = vmul.f32 %v4102, %v4126
        %v4131 = vmul.f32 %v4103, %v4127
        %v4132 = vmul.f32 %v4104, %v4128
        %v4133 = vlaneseq
        %v4134 = vshrl.u32 %v4133, 7
        %v4135 = vsub.s32 0, %v4134
        %v4136 = vrot.slane %v4087, %v4135
        %v4137 = vmul.f32 %v4129, %v4136
        %v4138 = vmul.f32 %v4130, %v4136
        %v4139 = vmul.f32 %v4131, %v4136
        %v4140 = vmul.f32 %v4132, %v4136
        %v4141 = vlaneseq
        %v4142 = vshrl.u32 %v4141, 7
        %v4143 = vsub.s32 0, %v4142
        %v4144 = vrot.slane %v4088, %v4143
        %v4145 = vadd.f32 %v4137, %v4144
        %v4146 = vadd.f32 %v4138, %v4144
        %v4147 = vadd.f32 %v4139, %v4144
        %v4148 = vadd.f32 %v4140, %v4144
        %v4149 = vpack.c.bf16 %v4146, %v4145
        %v4150 = vpack.c.bf16 %v4148, %v4147
        %s4151 = scalar_lea.vmem [#allocation14], 128
        %v4152 = vld [vmem:[%s4151] sm:$0xff]
        %v4153 = vld [vmem:[%s4151 + $0x8] sm:$0xff]
        %v4154 = vld [vmem:[%s4151 + $0x10] sm:$0xff]
        %v4155 = vld [vmem:[%s4151 + $0x18] sm:$0xff]
        %v4156 = vld [vmem:[%s4151 + $0x20] sm:$0xff]
        %v4157 = vld [vmem:[%s4151 + $0x28] sm:$0xff]
        %v4158 = vld [vmem:[%s4151 + $0x30] sm:$0xff]
        %v4159 = vld [vmem:[%s4151 + $0x38] sm:$0xff]
        %v4160 = vld [vmem:[%s4151 + $0x40] sm:$0xff]
        %v4161 = vld [vmem:[%s4151 + $0x48] sm:$0xff]
        %v4162 = vld [vmem:[%s4151 + $0x50] sm:$0xff]
        %v4163 = vld [vmem:[%s4151 + $0x58] sm:$0xff]
        %v4164 = vld [vmem:[%s4151 + $0x60] sm:$0xff]
        %v4165 = vld [vmem:[%s4151 + $0x68] sm:$0xff]
        %v4166 = vld [vmem:[%s4151 + $0x70] sm:$0xff]
        %v4167 = vld [vmem:[%s4151 + $0x78] sm:$0xff]
        %s4168 = scalar_lea.vmem %s15, 1
        %v4169 = vld [vmem:[%s4168] ss:$2 sm:$0x3]
        %v4171 = vlaneseq
        %v4172 = vshrl.u32 %v4171, 7
        %v4173 = vsub.s32 0, %v4172
        %v4174 = vrot.slane %v4169, %v4173
        %v4175 = vlaneseq
        %v4176 = vshrl.u32 %v4175, 7
        %v4177 = vsub.s32 1, %v4176
        %v4178 = vrot.slane %v4169, %v4177
        %v4197 = vunpack.c.l.b16 %v4152
        %v4198 = vunpack.c.h.b16 %v4152
        %v4199 = vunpack.c.l.b16 %v4153
        %v4200 = vunpack.c.h.b16 %v4153
        %v4201 = vunpack.c.l.b16 %v4154
        %v4202 = vunpack.c.h.b16 %v4154
        %v4203 = vunpack.c.l.b16 %v4155
        %v4204 = vunpack.c.h.b16 %v4155
        %v4205 = vunpack.c.l.b16 %v4156
        %v4206 = vunpack.c.h.b16 %v4156
        %v4207 = vunpack.c.l.b16 %v4157
        %v4208 = vunpack.c.h.b16 %v4157
        %v4209 = vunpack.c.l.b16 %v4158
        %v4210 = vunpack.c.h.b16 %v4158
        %v4211 = vunpack.c.l.b16 %v4159
        %v4212 = vunpack.c.h.b16 %v4159
        %v4213 = vunpack.c.l.b16 %v4160
        %v4214 = vunpack.c.h.b16 %v4160
        %v4215 = vunpack.c.l.b16 %v4161
        %v4216 = vunpack.c.h.b16 %v4161
        %v4217 = vunpack.c.l.b16 %v4162
        %v4218 = vunpack.c.h.b16 %v4162
        %v4219 = vunpack.c.l.b16 %v4163
        %v4220 = vunpack.c.h.b16 %v4163
        %v4221 = vunpack.c.l.b16 %v4164
        %v4222 = vunpack.c.h.b16 %v4164
        %v4223 = vunpack.c.l.b16 %v4165
        %v4224 = vunpack.c.h.b16 %v4165
        %v4225 = vunpack.c.l.b16 %v4166
        %v4226 = vunpack.c.h.b16 %v4166
        %v4227 = vunpack.c.l.b16 %v4167
        %v4228 = vunpack.c.h.b16 %v4167
        %v4229 = vpack.c.b16 %v4199, %v4197
        %v4230 = vpack.c.b16 %v4200, %v4198
        %v4231 = vpack.c.b16 %v4203, %v4201
        %v4232 = vpack.c.b16 %v4204, %v4202
        %v4233 = vpack.c.b16 %v4207, %v4205
        %v4234 = vpack.c.b16 %v4208, %v4206
        %v4235 = vpack.c.b16 %v4211, %v4209
        %v4236 = vpack.c.b16 %v4212, %v4210
        %v4237 = vpack.c.b16 %v4215, %v4213
        %v4238 = vpack.c.b16 %v4216, %v4214
        %v4239 = vpack.c.b16 %v4219, %v4217
        %v4240 = vpack.c.b16 %v4220, %v4218
        %v4241 = vpack.c.b16 %v4223, %v4221
        %v4242 = vpack.c.b16 %v4224, %v4222
        %v4243 = vpack.c.b16 %v4227, %v4225
        %v4244 = vpack.c.b16 %v4228, %v4226
        %4261 = vmatprep.subr.bf16.mxu0 %v4244
        %4262 = vmatpush1.bf16.msra.mxu0 %v4243
        %4263 = vmatprep.subr.bf16.mxu0 %v4242
        %4264 = vmatpush1.bf16.msra.mxu0 %v4241
        %4265 = vmatprep.subr.bf16.mxu0 %v4240
        %4266 = vmatpush1.bf16.msra.mxu0 %v4239
        %4267 = vmatprep.subr.bf16.mxu0 %v4238
        %4268 = vmatpush1.bf16.msra.mxu0 %v4237
        %4269 = vmatprep.subr.bf16.mxu0 %v4236
        %4270 = vmatpush1.bf16.msra.mxu0 %v4235
        %4271 = vmatprep.subr.bf16.mxu0 %v4234
        %4272 = vmatpush1.bf16.msra.mxu0 %v4233
        %4273 = vmatprep.subr.bf16.mxu0 %v4232
        %4274 = vmatpush1.bf16.msra.mxu0 %v4231
        %4275 = vmatprep.subr.bf16.mxu0 %v4230
        %4276 = vmatpush1.bf16.msra.mxu0 %v4229
        %4277 = vmatprep.subr.bf16.mxu0 0
        %4278 = vmatpush2.bf16.msra.mxu0 0
        %4279 = vmatprep.subr.bf16.mxu0 0
        %4280 = vmatpush2.bf16.msra.mxu0 0
        %4281 = vmatprep.subr.bf16.mxu0 0
        %4282 = vmatpush2.bf16.msra.mxu0 0
        %4283 = vmatprep.subr.bf16.mxu0 0
        %4284 = vmatpush2.bf16.msra.mxu0 0
        %4285 = vmatprep.subr.bf16.mxu0 0
        %4286 = vmatpush2.bf16.msra.mxu0 0
        %4287 = vmatprep.subr.bf16.mxu0 0
        %4288 = vmatpush2.bf16.msra.mxu0 0
        %4289 = vmatprep.subr.bf16.mxu0 0
        %4290 = vmatpush2.bf16.msra.mxu0 0
        %4291 = vmatprep.subr.bf16.mxu0 0
        %4292 = vmatpush2.bf16.msra.mxu0 0
        %4293 = vmatprep.mubr.bf16.mxu0 0
        %4294 = vmatmul.mubr.bf16.gmra.mxu0 %v4149
        %v4295 = vpop.f32.mrf.mxu0
        %v4296 = vadd.f32 %v4174, %v4295
        %v4297 = vpop.f32.mrf.mxu0
        %v4298 = vadd.f32 %v4178, %v4297
        %v4299 = vpop.f32.mrf.mxu0
        %v4300 = vadd.f32 %v4174, %v4299
        %v4301 = vpop.f32.mrf.mxu0
        %v4302 = vadd.f32 %v4178, %v4301
        %4303 = vmatprep.mubr.bf16.mxu0 0
        %4304 = vmatmul.mubr.bf16.gmra.mxu0 %v4150
        %v4305 = vpop.f32.mrf.mxu0
        %v4306 = vadd.f32 %v4174, %v4305
        %v4307 = vpop.f32.mrf.mxu0
        %v4308 = vadd.f32 %v4178, %v4307
        %v4309 = vpop.f32.mrf.mxu0
        %v4310 = vadd.f32 %v4174, %v4309
        %v4311 = vpop.f32.mrf.mxu0
        %v4312 = vadd.f32 %v4178, %v4311
        %4313 = vdwg.mxu0
        %v4314 = vmax.f32 %v4296, 0.0
        %v4315 = vmax.f32 %v4298, 0.0
        %v4316 = vmax.f32 %v4300, 0.0
        %v4317 = vmax.f32 %v4302, 0.0
        %v4318 = vmax.f32 %v4306, 0.0
        %v4319 = vmax.f32 %v4308, 0.0
        %v4320 = vmax.f32 %v4310, 0.0
        %v4321 = vmax.f32 %v4312, 0.0
        %v4322 = vpack.c.bf16 %v4316, %v4314
        %v4323 = vpack.c.bf16 %v4317, %v4315
        %v4324 = vpack.c.bf16 %v4320, %v4318
        %v4325 = vpack.c.bf16 %v4321, %v4319
        %s4326 = scalar_lea.vmem [#allocation16], 128
        %v4327 = vld [vmem:[%s4326] sm:$0xf]
        %v4328 = vld [vmem:[%s4326 + $0x4] sm:$0xf]
        %v4329 = vld [vmem:[%s4326 + $0x8] sm:$0xf]
        %v4330 = vld [vmem:[%s4326 + $0xc] sm:$0xf]
        %v4331 = vld [vmem:[%s4326 + $0x10] sm:$0xf]
        %v4332 = vld [vmem:[%s4326 + $0x14] sm:$0xf]
        %v4333 = vld [vmem:[%s4326 + $0x18] sm:$0xf]
        %v4334 = vld [vmem:[%s4326 + $0x1c] sm:$0xf]
        %v4335 = vld [vmem:[%s4326 + $0x20] sm:$0xf]
        %v4336 = vld [vmem:[%s4326 + $0x24] sm:$0xf]
        %v4337 = vld [vmem:[%s4326 + $0x28] sm:$0xf]
        %v4338 = vld [vmem:[%s4326 + $0x2c] sm:$0xf]
        %v4339 = vld [vmem:[%s4326 + $0x30] sm:$0xf]
        %v4340 = vld [vmem:[%s4326 + $0x34] sm:$0xf]
        %v4341 = vld [vmem:[%s4326 + $0x38] sm:$0xf]
        %v4342 = vld [vmem:[%s4326 + $0x3c] sm:$0xf]
        %v4343 = vld [vmem:[%s4326 + $0x40] sm:$0xf]
        %v4344 = vld [vmem:[%s4326 + $0x44] sm:$0xf]
        %v4345 = vld [vmem:[%s4326 + $0x48] sm:$0xf]
        %v4346 = vld [vmem:[%s4326 + $0x4c] sm:$0xf]
        %v4347 = vld [vmem:[%s4326 + $0x50] sm:$0xf]
        %v4348 = vld [vmem:[%s4326 + $0x54] sm:$0xf]
        %v4349 = vld [vmem:[%s4326 + $0x58] sm:$0xf]
        %v4350 = vld [vmem:[%s4326 + $0x5c] sm:$0xf]
        %v4351 = vld [vmem:[%s4326 + $0x60] sm:$0xf]
        %v4352 = vld [vmem:[%s4326 + $0x64] sm:$0xf]
        %v4353 = vld [vmem:[%s4326 + $0x68] sm:$0xf]
        %v4354 = vld [vmem:[%s4326 + $0x6c] sm:$0xf]
        %v4355 = vld [vmem:[%s4326 + $0x70] sm:$0xf]
        %v4356 = vld [vmem:[%s4326 + $0x74] sm:$0xf]
        %v4357 = vld [vmem:[%s4326 + $0x78] sm:$0xf]
        %v4358 = vld [vmem:[%s4326 + $0x7c] sm:$0xf]
        %v4359 = vld [vmem:[%s17 + $0x1] sm:$0x1]
        %v4360 = vlaneseq
        %v4361 = vshrl.u32 %v4360, 7
        %v4362 = vsub.s32 0, %v4361
        %v4363 = vrot.slane %v4359, %v4362
        %v4396 = vunpack.c.l.b16 %v4327
        %v4397 = vunpack.c.l.b16 %v4328
        %v4398 = vunpack.c.l.b16 %v4329
        %v4399 = vunpack.c.l.b16 %v4330
        %v4400 = vunpack.c.l.b16 %v4331
        %v4401 = vunpack.c.l.b16 %v4332
        %v4402 = vunpack.c.l.b16 %v4333
        %v4403 = vunpack.c.l.b16 %v4334
        %v4404 = vunpack.c.l.b16 %v4335
        %v4405 = vunpack.c.l.b16 %v4336
        %v4406 = vunpack.c.l.b16 %v4337
        %v4407 = vunpack.c.l.b16 %v4338
        %v4408 = vunpack.c.l.b16 %v4339
        %v4409 = vunpack.c.l.b16 %v4340
        %v4410 = vunpack.c.l.b16 %v4341
        %v4411 = vunpack.c.l.b16 %v4342
        %v4412 = vunpack.c.l.b16 %v4343
        %v4413 = vunpack.c.l.b16 %v4344
        %v4414 = vunpack.c.l.b16 %v4345
        %v4415 = vunpack.c.l.b16 %v4346
        %v4416 = vunpack.c.l.b16 %v4347
        %v4417 = vunpack.c.l.b16 %v4348
        %v4418 = vunpack.c.l.b16 %v4349
        %v4419 = vunpack.c.l.b16 %v4350
        %v4420 = vunpack.c.l.b16 %v4351
        %v4421 = vunpack.c.l.b16 %v4352
        %v4422 = vunpack.c.l.b16 %v4353
        %v4423 = vunpack.c.l.b16 %v4354
        %v4424 = vunpack.c.l.b16 %v4355
        %v4425 = vunpack.c.l.b16 %v4356
        %v4426 = vunpack.c.l.b16 %v4357
        %v4427 = vunpack.c.l.b16 %v4358
        %v4428 = vpack.c.b16 %v4397, %v4396
        %v4429 = vpack.c.b16 %v4399, %v4398
        %v4430 = vpack.c.b16 %v4401, %v4400
        %v4431 = vpack.c.b16 %v4403, %v4402
        %v4432 = vpack.c.b16 %v4405, %v4404
        %v4433 = vpack.c.b16 %v4407, %v4406
        %v4434 = vpack.c.b16 %v4409, %v4408
        %v4435 = vpack.c.b16 %v4411, %v4410
        %v4436 = vpack.c.b16 %v4413, %v4412
        %v4437 = vpack.c.b16 %v4415, %v4414
        %v4438 = vpack.c.b16 %v4417, %v4416
        %v4439 = vpack.c.b16 %v4419, %v4418
        %v4440 = vpack.c.b16 %v4421, %v4420
        %v4441 = vpack.c.b16 %v4423, %v4422
        %v4442 = vpack.c.b16 %v4425, %v4424
        %v4443 = vpack.c.b16 %v4427, %v4426
        %4460 = vmatprep.subr.bf16.mxu0 0
        %4461 = vmatpush1.bf16.msra.mxu0 %v4435
        %4462 = vmatprep.subr.bf16.mxu0 0
        %4463 = vmatpush1.bf16.msra.mxu0 %v4434
        %4464 = vmatprep.subr.bf16.mxu0 0
        %4465 = vmatpush1.bf16.msra.mxu0 %v4433
        %4466 = vmatprep.subr.bf16.mxu0 0
        %4467 = vmatpush1.bf16.msra.mxu0 %v4432
        %4468 = vmatprep.subr.bf16.mxu0 0
        %4469 = vmatpush1.bf16.msra.mxu0 %v4431
        %4470 = vmatprep.subr.bf16.mxu0 0
        %4471 = vmatpush1.bf16.msra.mxu0 %v4430
        %4472 = vmatprep.subr.bf16.mxu0 0
        %4473 = vmatpush1.bf16.msra.mxu0 %v4429
        %4474 = vmatprep.subr.bf16.mxu0 0
        %4475 = vmatpush1.bf16.msra.mxu0 %v4428
        %4476 = vmatprep.subr.bf16.mxu0 0
        %4477 = vmatpush2.bf16.msra.mxu0 %v4443
        %4478 = vmatprep.subr.bf16.mxu0 0
        %4479 = vmatpush2.bf16.msra.mxu0 %v4442
        %4480 = vmatprep.subr.bf16.mxu0 0
        %4481 = vmatpush2.bf16.msra.mxu0 %v4441
        %4482 = vmatprep.subr.bf16.mxu0 0
        %4483 = vmatpush2.bf16.msra.mxu0 %v4440
        %4484 = vmatprep.subr.bf16.mxu0 0
        %4485 = vmatpush2.bf16.msra.mxu0 %v4439
        %4486 = vmatprep.subr.bf16.mxu0 0
        %4487 = vmatpush2.bf16.msra.mxu0 %v4438
        %4488 = vmatprep.subr.bf16.mxu0 0
        %4489 = vmatpush2.bf16.msra.mxu0 %v4437
        %4490 = vmatprep.subr.bf16.mxu0 0
        %4491 = vmatpush2.bf16.msra.mxu0 %v4436
        %4492 = vmatprep.mubr.bf16.mxu0 %v4323
        %4493 = vmatmul.mubr.bf16.gmra.mxu0 %v4322
        %v4494 = vpop.f32.mrf.mxu0
        %v4495 = vadd.f32 %v4363, %v4494
        %v4496 = vpop.f32.mrf.mxu0
        %v4497 = vpop.f32.mrf.mxu0
        %v4498 = vadd.f32 %v4363, %v4497
        %v4499 = vpop.f32.mrf.mxu0
        %4500 = vmatprep.mubr.bf16.mxu0 %v4325
        %4501 = vmatmul.mubr.bf16.gmra.mxu0 %v4324
        %v4502 = vpop.f32.mrf.mxu0
        %v4503 = vadd.f32 %v4363, %v4502
        %v4504 = vpop.f32.mrf.mxu0
        %v4505 = vpop.f32.mrf.mxu0
        %v4506 = vadd.f32 %v4363, %v4505
        %v4507 = vpop.f32.mrf.mxu0
        %4508 = vdwg.mxu0
        %v4509 = vadd.f32 %v4083, %v4495
        %v4510 = vadd.f32 %v4084, %v4498
        %v4511 = vadd.f32 %v4085, %v4503
        %v4512 = vadd.f32 %v4086, %v4506
        %4513 = vst [vmem:[%s707] sm:$0xff] %v4509
        %4514 = vst [vmem:[%s707 + $0x8] sm:$0xff] %v4510
        %4515 = vst [vmem:[%s707 + $0x10] sm:$0xff] %v4511
        %4516 = vst [vmem:[%s707 + $0x18] sm:$0xff] %v4512
        %s4517 = sand.u32 %s430, 1
        %s4518 = scalar_lea.sflag [#allocation4], %s4517
        %s4519 = sand.u32 %s430, 1
        %s4520 = smul.addr %s4519, 32
        %s4521 = scalar_lea.vmem [#allocation17], %s4520
        // Predicated region
        $region129: #{tpu_custom_call.1} parent=91 // pred_check
          %p4522 = pneg %p440
        $region130: #{tpu_custom_call.1} parent=91 // pred_check_branch
          %4524 = sbr.rel (%p4522) target = $region132
        $region131: #{tpu_custom_call.1} parent=91 // pred_region
          %s4526 = ssub.s32 512, 512
          %4527 = vsyncadd %s4518, %s4526
          %s4528 = smul.addr %s39, 4
          %s4529 = smul.addr %s4528, 128
          %s4530 = scalar_lea.hbm %s18, %s4529
          %s4531 = sshll.u32 %s4521, 4
          %s4532 = int_to_ptr.vmem [resolvable:$true] %s4531
          %4537 = dma.vmem_to_hbm [thread:$0]  %s4532, 512, %s4530, %s4518, 128, 128, 8
        $region132: #{tpu_custom_call.1} parent=91 // pred_fallthru
          _
      $region92: #{tpu_custom_call.1} parent=5 // pred_fallthru
        _
      %p4538 = scmp.le.s32.totalorder 2, %s34
      // Predicated region
      $region133: #{tpu_custom_call.1} parent=5 // pred_check
        %p4539 = pneg %p4538
      $region134: #{tpu_custom_call.1} parent=5 // pred_check_branch
        %4541 = sbr.rel (%p4539) target = $region136
      $region135: #{tpu_custom_call.1} parent=5 // pred_region
        %s4542 = ssub.s32 %s34, 2
        // Predicated region
        $region137: #{tpu_custom_call.1} parent=135 // pred_check
          %p4543 = pneg %p446
        $region138: #{tpu_custom_call.1} parent=135 // pred_check_branch
          %4545 = sbr.rel (%p4543) target = $region140
        $region139: #{tpu_custom_call.1} parent=135 // pred_region
          %s4546 = sand.u32 %s431, 1
          %s4547 = scalar_lea.sflag [#allocation4], %s4546
          %s4548 = sand.u32 %s431, 1
          %s4549 = smul.addr %s4548, 32
          %s4550 = scalar_lea.vmem [#allocation17], %s4549
          %4551 = dma.done %s4547, 512
        $region140: #{tpu_custom_call.1} parent=135 // pred_fallthru
          _
      $region136: #{tpu_custom_call.1} parent=5 // pred_fallthru
        _
    $region6: #{tpu_custom_call.1} parent=1 // loop_footer
      %s38 = sadd.s32 1, %s34
    $region7: #{tpu_custom_call.1} parent=1 // loop_footer_branch
      %33 = sbr.rel target = $region3
    $region8: #{tpu_custom_call.1} parent=1 // loop_exit
      _
    %4552 = vsyncpa [#allocation3], 1
    %s4553 = scalar_lea.sflag [#allocation3], 1
    %4554 = vsyncpa %s4553, 1
    %4555 = vsyncpa [#allocation6], 1
    %4556 = vsyncpa [#allocation9], 1
    %4557 = vsyncpa [#allocation12], 1
    %4558 = vsyncpa [#allocation15], 1
    %4559 = vsyncpa [#allocation4], 1
    %s4560 = scalar_lea.sflag [#allocation4], 1
    %4561 = vsyncpa %s4560, 1

</llo_original>
